<compile_context>
chip_gen: v6e
topology: v6e:2x2x1
jax: 0.10.0
libtpu: 0.0.40
codegen_flags: <defaults>
</compile_context>

<pallas_src>
import jax
import jax.numpy as jnp
from jax.experimental import pallas as pl
from jax.experimental.pallas import tpu as pltpu


LAYER_SIZES = [1, 30, 300, 3000, 1]


def _round_up(n, m):
    return ((n + m - 1) // m) * m


def _cdiv(a, b):
    return (a + b - 1) // b


# Padded hidden sizes (lane-aligned to 128): 30->128, 300->384, 3000->3072.
H1, H2, H3 = LAYER_SIZES[1], LAYER_SIZES[2], LAYER_SIZES[3]
H1P, H2P, H3P = (_round_up(H1, 128), _round_up(H2, 128), _round_up(H3, 128))

# Column-chunk width for the fused layer-3/4 epilogue (multiple of 128).
NC = 512
assert H3P % NC == 0


def mlp_kernel(x_ref, w1_ref, b1_ref, w2_ref, b2_ref,
               w3_ref, b3_ref, w4_ref, b4_ref, o_ref):
    tm = x_ref.shape[0]

    # Layer 1: Linear(1 -> 30) + ReLU as a VPU broadcast multiply
    #   x: (tm, 1) f32, w1: (1, H1P) f32  ->  (tm, H1P)
    h1 = jnp.maximum(x_ref[...] * w1_ref[...] + b1_ref[...], 0.0)

    # Layer 2: Linear(30 -> 300) + ReLU  (bf16 weights, f32 MXU accumulation)
    h2 = jnp.dot(h1.astype(jnp.bfloat16), w2_ref[...],
                 preferred_element_type=jnp.float32)
    h2 = jnp.maximum(h2 + b2_ref[...], 0.0).astype(jnp.bfloat16)

    # Layers 3 + 4 fused & column-chunked:
    #   for each NC-wide slice of W3: matmul -> +b3 -> ReLU -> *w4 -> lane
    #   reduce into a (tm, 1) f32 accumulator.  The full (tm, 3072) f32
    #   intermediate is never materialized.
    acc = jnp.zeros((tm, 1), jnp.float32)
    for c in range(H3P // NC):
        lo = c * NC
        h3c = jnp.dot(h2, w3_ref[:, lo:lo + NC],
                      preferred_element_type=jnp.float32)
        h3c = jnp.maximum(h3c + b3_ref[:, lo:lo + NC], 0.0)
        acc = acc + jnp.sum(h3c * w4_ref[:, lo:lo + NC],
                            axis=-1, keepdims=True)

    # Layer 4 bias (no activation on the last layer).
    o_ref[...] = acc + b4_ref[...]


def prepare_padded_params(params):
    """One-time padding / dtype conversion of raw params.

    params: list of (W_t, b) with W_t shaped (in, out) f32, b shaped (out,) f32.
    Returns the padded pytree consumed by custom_mlp_forward.
    """
    (w1, b1), (w2, b2), (w3, b3), (w4, b4) = params

    w1_p = jnp.zeros((1, H1P), jnp.float32).at[:, :H1].set(w1)            # (1, 128)
    b1_p = jnp.zeros((1, H1P), jnp.float32).at[:, :H1].set(b1[None, :])

    w2_p = jnp.zeros((H1P, H2P), jnp.bfloat16).at[:H1, :H2].set(
        w2.astype(jnp.bfloat16))                                          # (128, 384) bf16
    b2_p = jnp.zeros((1, H2P), jnp.float32).at[:, :H2].set(b2[None, :])

    w3_p = jnp.zeros((H2P, H3P), jnp.bfloat16).at[:H2, :H3].set(
        w3.astype(jnp.bfloat16))                                          # (384, 3072) bf16
    b3_p = jnp.zeros((1, H3P), jnp.float32).at[:, :H3].set(b3[None, :])

    w4_p = jnp.zeros((1, H3P), jnp.float32).at[:, :H3].set(w4[:, 0][None, :])  # (1, 3072)
    b4_p = jnp.reshape(b4, (1, 1)).astype(jnp.float32)                    # (1, 1)

    return (w1_p, b1_p, w2_p, b2_p, w3_p, b3_p, w4_p, b4_p)


def custom_mlp_forward(x, padded_params, *, tm_max=512):
    """x: (batch, 1) float32. padded_params: output of prepare_padded_params."""
    batch, in_feat = x.shape
    assert in_feat == LAYER_SIZES[0]

    # Adaptive batch tile: minimize padded-batch waste (pbatch - batch < 8*n_tiles)
    # and, for batch >= 256, use at least two tiles so the "parallel" batch axis
    # can shard across both v7x TensorCores (harmless on v5e/v6e).
    n_tiles = _cdiv(batch, tm_max)
    if batch >= 256:
        n_tiles = max(n_tiles, 2)
    tm = max(8, _round_up(_cdiv(batch, n_tiles), 8))
    pbatch = _round_up(batch, tm)
    grid_m = pbatch // tm

    x_p = x.astype(jnp.float32)
    if pbatch != batch:
        x_p = jnp.zeros((pbatch, 1), jnp.float32).at[:batch, :].set(x_p)

    def const_spec(arr):
        # Weights/biases: same block every grid step -> stay VMEM-resident.
        return pl.BlockSpec(arr.shape, lambda i: (0, 0))

    out = pl.pallas_call(
        mlp_kernel,
        out_shape=jax.ShapeDtypeStruct((pbatch, 1), jnp.float32),
        grid=(grid_m,),
        in_specs=[pl.BlockSpec((tm, 1), lambda i: (i, 0))]
                 + [const_spec(a) for a in padded_params],
        out_specs=pl.BlockSpec((tm, 1), lambda i: (i, 0)),
        compiler_params=pltpu.CompilerParams(
            dimension_semantics=("parallel",),
            vmem_limit_bytes=32 * 1024 * 1024),
    )(x_p, *padded_params)

    # Un-pad: real output is (batch, 1).
    return out[:batch, :]


def init_params(key):
    """Xavier-normal weights, zero biases (matches nn.init.xavier_normal_ / zeros_)."""
    params = []
    for i in range(len(LAYER_SIZES) - 1):
        fan_in, fan_out = LAYER_SIZES[i], LAYER_SIZES[i + 1]
        key, sub = jax.random.split(key)
        std = (2.0 / (fan_in + fan_out)) ** 0.5
        # Stored transposed (in, out) so the kernel computes x @ W + b.
        w_t = std * jax.random.normal(sub, (fan_in, fan_out), jnp.float32)
        b = jnp.zeros((fan_out,), jnp.float32)
        params.append((w_t, b))
    return params


def reference_forward_bf16(x, params):
    """Reference that mirrors the kernel math (bf16 W2/W3, f32 accumulation)."""
    (w1, b1), (w2, b2), (w3, b3), (w4, b4) = params
    h = jnp.maximum(x * w1 + b1[None, :], 0.0)                     # (B,1)*(1,30)
    h = jnp.dot(h.astype(jnp.bfloat16), w2.astype(jnp.bfloat16),
                preferred_element_type=jnp.float32) + b2[None, :]
    h = jnp.maximum(h, 0.0)
    h = jnp.dot(h.astype(jnp.bfloat16), w3.astype(jnp.bfloat16),
                preferred_element_type=jnp.float32) + b3[None, :]
    h = jnp.maximum(h, 0.0)
    return jnp.sum(h * w4[:, 0][None, :], axis=-1, keepdims=True) + b4[None, :]


def reference_forward_f32(x, params):
    """Pure f32 reference matching the original PyTorch module semantics."""
    h = x
    for i, (w_t, b) in enumerate(params):
        h = h @ w_t + b
        if i < len(params) - 1:
            h = jnp.maximum(h, 0.0)
    return h


if __name__ == "__main__":
    key = jax.random.PRNGKey(0)
    pkey, xkey, xkey2 = jax.random.split(key, 3)
    params = init_params(pkey)
    padded_params = prepare_padded_params(params)   # pad + bf16-convert ONCE

    # --- Small batch (single tile) ---
    batch = 8
    x = jax.random.normal(xkey, (batch, 1), jnp.float32)
    y = jax.block_until_ready(custom_mlp_forward(x, padded_params))
    assert y.shape == (batch, 1), y.shape

    y_ref_bf16 = reference_forward_bf16(x, params)
    assert jnp.allclose(y, y_ref_bf16, atol=1e-3, rtol=1e-3), (y, y_ref_bf16)
    y_ref_f32 = reference_forward_f32(x, params)
    assert jnp.allclose(y, y_ref_f32, atol=1e-2, rtol=1e-1), (y, y_ref_f32)

    # --- Larger batch: exercises adaptive tiling, batch padding, grid_m >= 2 ---
    batch2 = 600
    x2 = jax.random.normal(xkey2, (batch2, 1), jnp.float32)
    y2 = jax.block_until_ready(custom_mlp_forward(x2, padded_params))
    assert y2.shape == (batch2, 1), y2.shape
    y2_ref = reference_forward_bf16(x2, params)
    assert jnp.allclose(y2, y2_ref, atol=1e-3, rtol=1e-3), (y2, y2_ref)

    print("KERNEL_OK")
</pallas_src>

<mosaic_0001>
module attributes {stable_mosaic.version = 11 : i64} {
  func.func @mlp_kernel(%arg0: i32, %arg1: memref<8x1xf32, #tpu.memory_space<vmem>>, %arg2: memref<1x128xf32, #tpu.memory_space<vmem>>, %arg3: memref<1x128xf32, #tpu.memory_space<vmem>>, %arg4: memref<128x384xbf16, #tpu.memory_space<vmem>>, %arg5: memref<1x384xf32, #tpu.memory_space<vmem>>, %arg6: memref<384x3072xbf16, #tpu.memory_space<vmem>>, %arg7: memref<1x3072xf32, #tpu.memory_space<vmem>>, %arg8: memref<1x3072xf32, #tpu.memory_space<vmem>>, %arg9: memref<1x1xf32, #tpu.memory_space<vmem>>, %arg10: memref<8x1xf32, #tpu.memory_space<vmem>>) attributes {dimension_semantics = [#tpu.dimension_semantics<parallel>], iteration_bounds = array<i64: 1>, scalar_prefetch = 0 : i64, scratch_operands = 0 : i64, tpu.core_type = #tpu.core_type<tc>, window_params = [{transform_indices = @transform_0, window_bounds = array<i64: 8, 1>}, {pipeline_mode = #tpu.pipeline_mode<synchronous>, transform_indices = @transform_1, window_bounds = array<i64: 1, 128>}, {pipeline_mode = #tpu.pipeline_mode<synchronous>, transform_indices = @transform_2, window_bounds = array<i64: 1, 128>}, {pipeline_mode = #tpu.pipeline_mode<synchronous>, transform_indices = @transform_3, window_bounds = array<i64: 128, 384>}, {pipeline_mode = #tpu.pipeline_mode<synchronous>, transform_indices = @transform_4, window_bounds = array<i64: 1, 384>}, {pipeline_mode = #tpu.pipeline_mode<synchronous>, transform_indices = @transform_5, window_bounds = array<i64: 384, 3072>}, {pipeline_mode = #tpu.pipeline_mode<synchronous>, transform_indices = @transform_6, window_bounds = array<i64: 1, 3072>}, {pipeline_mode = #tpu.pipeline_mode<synchronous>, transform_indices = @transform_7, window_bounds = array<i64: 1, 3072>}, {pipeline_mode = #tpu.pipeline_mode<synchronous>, transform_indices = @transform_8, window_bounds = array<i64: 1, 1>}, {transform_indices = @transform_9, window_bounds = array<i64: 8, 1>}]} {
    %c0 = arith.constant 0 : index
    %c0_0 = arith.constant 0 : index
    %0 = vector.load %arg1[%c0, %c0_0] : memref<8x1xf32, #tpu.memory_space<vmem>>, vector<8x1xf32>
    %c0_1 = arith.constant 0 : index
    %c0_2 = arith.constant 0 : index
    %1 = vector.load %arg2[%c0_1, %c0_2] : memref<1x128xf32, #tpu.memory_space<vmem>>, vector<1x128xf32>
    %2 = vector.broadcast %0 : vector<8x1xf32> to vector<8x128xf32>
    %3 = vector.broadcast %1 : vector<1x128xf32> to vector<8x128xf32>
    %4 = arith.mulf %2, %3 : vector<8x128xf32>
    %c0_3 = arith.constant 0 : index
    %c0_4 = arith.constant 0 : index
    %5 = vector.load %arg3[%c0_3, %c0_4] : memref<1x128xf32, #tpu.memory_space<vmem>>, vector<1x128xf32>
    %6 = vector.broadcast %5 : vector<1x128xf32> to vector<8x128xf32>
    %7 = arith.addf %4, %6 : vector<8x128xf32>
    %cst = arith.constant 0.000000e+00 : f32
    %8 = vector.broadcast %cst : f32 to vector<8x128xf32>
    %9 = arith.maximumf %7, %8 : vector<8x128xf32>
    %10 = arith.truncf %9 : vector<8x128xf32> to vector<8x128xbf16>
    %c0_5 = arith.constant 0 : index
    %c0_6 = arith.constant 0 : index
    %11 = vector.load %arg4[%c0_5, %c0_6] : memref<128x384xbf16, #tpu.memory_space<vmem>>, vector<128x384xbf16>
    %cst_7 = arith.constant dense<0.000000e+00> : vector<8x384xf32>
    %12 = tpu.matmul %10, %11, %cst_7 {dimension_numbers = #tpu.dot_dimension_numbers<[1], [0], [0], [1], [0, 0, 1, 1], [], []>} : vector<8x128xbf16>, vector<128x384xbf16>, vector<8x384xf32> -> vector<8x384xf32>
    %c0_8 = arith.constant 0 : index
    %c0_9 = arith.constant 0 : index
    %13 = vector.load %arg5[%c0_8, %c0_9] : memref<1x384xf32, #tpu.memory_space<vmem>>, vector<1x384xf32>
    %14 = vector.broadcast %13 : vector<1x384xf32> to vector<8x384xf32>
    %15 = arith.addf %12, %14 : vector<8x384xf32>
    %cst_10 = arith.constant 0.000000e+00 : f32
    %16 = vector.broadcast %cst_10 : f32 to vector<8x384xf32>
    %17 = arith.maximumf %15, %16 : vector<8x384xf32>
    %18 = arith.truncf %17 : vector<8x384xf32> to vector<8x384xbf16>
    %cst_11 = arith.constant 0.000000e+00 : f32
    %19 = vector.broadcast %cst_11 : f32 to vector<8x1xf32>
    %c0_12 = arith.constant 0 : index
    %c0_13 = arith.constant 0 : index
    %20 = vector.load %arg6[%c0_12, %c0_13] : memref<384x3072xbf16, #tpu.memory_space<vmem>>, vector<384x512xbf16>
    %cst_14 = arith.constant dense<0.000000e+00> : vector<8x512xf32>
    %21 = tpu.matmul %18, %20, %cst_14 {dimension_numbers = #tpu.dot_dimension_numbers<[1], [0], [0], [1], [0, 0, 1, 1], [], []>} : vector<8x384xbf16>, vector<384x512xbf16>, vector<8x512xf32> -> vector<8x512xf32>
    %c0_15 = arith.constant 0 : index
    %c0_16 = arith.constant 0 : index
    %22 = vector.load %arg7[%c0_15, %c0_16] : memref<1x3072xf32, #tpu.memory_space<vmem>>, vector<1x512xf32>
    %23 = vector.broadcast %22 : vector<1x512xf32> to vector<8x512xf32>
    %24 = arith.addf %21, %23 : vector<8x512xf32>
    %cst_17 = arith.constant 0.000000e+00 : f32
    %25 = vector.broadcast %cst_17 : f32 to vector<8x512xf32>
    %26 = arith.maximumf %24, %25 : vector<8x512xf32>
    %c0_18 = arith.constant 0 : index
    %c0_19 = arith.constant 0 : index
    %27 = vector.load %arg8[%c0_18, %c0_19] : memref<1x3072xf32, #tpu.memory_space<vmem>>, vector<1x512xf32>
    %28 = vector.broadcast %27 : vector<1x512xf32> to vector<8x512xf32>
    %29 = arith.mulf %26, %28 : vector<8x512xf32>
    %cst_20 = arith.constant dense<0.000000e+00> : vector<8xf32>
    %30 = vector.multi_reduction <add>, %29, %cst_20 [1] : vector<8x512xf32> to vector<8xf32>
    %31 = vector.shape_cast %30 : vector<8xf32> to vector<8x1xf32>
    %32 = arith.addf %19, %31 : vector<8x1xf32>
    %c0_21 = arith.constant 0 : index
    %c512 = arith.constant 512 : index
    %33 = vector.load %arg6[%c0_21, %c512] : memref<384x3072xbf16, #tpu.memory_space<vmem>>, vector<384x512xbf16>
    %cst_22 = arith.constant dense<0.000000e+00> : vector<8x512xf32>
    %34 = tpu.matmul %18, %33, %cst_22 {dimension_numbers = #tpu.dot_dimension_numbers<[1], [0], [0], [1], [0, 0, 1, 1], [], []>} : vector<8x384xbf16>, vector<384x512xbf16>, vector<8x512xf32> -> vector<8x512xf32>
    %c0_23 = arith.constant 0 : index
    %c512_24 = arith.constant 512 : index
    %35 = vector.load %arg7[%c0_23, %c512_24] : memref<1x3072xf32, #tpu.memory_space<vmem>>, vector<1x512xf32>
    %36 = vector.broadcast %35 : vector<1x512xf32> to vector<8x512xf32>
    %37 = arith.addf %34, %36 : vector<8x512xf32>
    %cst_25 = arith.constant 0.000000e+00 : f32
    %38 = vector.broadcast %cst_25 : f32 to vector<8x512xf32>
    %39 = arith.maximumf %37, %38 : vector<8x512xf32>
    %c0_26 = arith.constant 0 : index
    %c512_27 = arith.constant 512 : index
    %40 = vector.load %arg8[%c0_26, %c512_27] : memref<1x3072xf32, #tpu.memory_space<vmem>>, vector<1x512xf32>
    %41 = vector.broadcast %40 : vector<1x512xf32> to vector<8x512xf32>
    %42 = arith.mulf %39, %41 : vector<8x512xf32>
    %cst_28 = arith.constant dense<0.000000e+00> : vector<8xf32>
    %43 = vector.multi_reduction <add>, %42, %cst_28 [1] : vector<8x512xf32> to vector<8xf32>
    %44 = vector.shape_cast %43 : vector<8xf32> to vector<8x1xf32>
    %45 = arith.addf %32, %44 : vector<8x1xf32>
    %c0_29 = arith.constant 0 : index
    %c1024 = arith.constant 1024 : index
    %46 = vector.load %arg6[%c0_29, %c1024] : memref<384x3072xbf16, #tpu.memory_space<vmem>>, vector<384x512xbf16>
    %cst_30 = arith.constant dense<0.000000e+00> : vector<8x512xf32>
    %47 = tpu.matmul %18, %46, %cst_30 {dimension_numbers = #tpu.dot_dimension_numbers<[1], [0], [0], [1], [0, 0, 1, 1], [], []>} : vector<8x384xbf16>, vector<384x512xbf16>, vector<8x512xf32> -> vector<8x512xf32>
    %c0_31 = arith.constant 0 : index
    %c1024_32 = arith.constant 1024 : index
    %48 = vector.load %arg7[%c0_31, %c1024_32] : memref<1x3072xf32, #tpu.memory_space<vmem>>, vector<1x512xf32>
    %49 = vector.broadcast %48 : vector<1x512xf32> to vector<8x512xf32>
    %50 = arith.addf %47, %49 : vector<8x512xf32>
    %cst_33 = arith.constant 0.000000e+00 : f32
    %51 = vector.broadcast %cst_33 : f32 to vector<8x512xf32>
    %52 = arith.maximumf %50, %51 : vector<8x512xf32>
    %c0_34 = arith.constant 0 : index
    %c1024_35 = arith.constant 1024 : index
    %53 = vector.load %arg8[%c0_34, %c1024_35] : memref<1x3072xf32, #tpu.memory_space<vmem>>, vector<1x512xf32>
    %54 = vector.broadcast %53 : vector<1x512xf32> to vector<8x512xf32>
    %55 = arith.mulf %52, %54 : vector<8x512xf32>
    %cst_36 = arith.constant dense<0.000000e+00> : vector<8xf32>
    %56 = vector.multi_reduction <add>, %55, %cst_36 [1] : vector<8x512xf32> to vector<8xf32>
    %57 = vector.shape_cast %56 : vector<8xf32> to vector<8x1xf32>
    %58 = arith.addf %45, %57 : vector<8x1xf32>
    %c0_37 = arith.constant 0 : index
    %c1536 = arith.constant 1536 : index
    %59 = vector.load %arg6[%c0_37, %c1536] : memref<384x3072xbf16, #tpu.memory_space<vmem>>, vector<384x512xbf16>
    %cst_38 = arith.constant dense<0.000000e+00> : vector<8x512xf32>
    %60 = tpu.matmul %18, %59, %cst_38 {dimension_numbers = #tpu.dot_dimension_numbers<[1], [0], [0], [1], [0, 0, 1, 1], [], []>} : vector<8x384xbf16>, vector<384x512xbf16>, vector<8x512xf32> -> vector<8x512xf32>
    %c0_39 = arith.constant 0 : index
    %c1536_40 = arith.constant 1536 : index
    %61 = vector.load %arg7[%c0_39, %c1536_40] : memref<1x3072xf32, #tpu.memory_space<vmem>>, vector<1x512xf32>
    %62 = vector.broadcast %61 : vector<1x512xf32> to vector<8x512xf32>
    %63 = arith.addf %60, %62 : vector<8x512xf32>
    %cst_41 = arith.constant 0.000000e+00 : f32
    %64 = vector.broadcast %cst_41 : f32 to vector<8x512xf32>
    %65 = arith.maximumf %63, %64 : vector<8x512xf32>
    %c0_42 = arith.constant 0 : index
    %c1536_43 = arith.constant 1536 : index
    %66 = vector.load %arg8[%c0_42, %c1536_43] : memref<1x3072xf32, #tpu.memory_space<vmem>>, vector<1x512xf32>
    %67 = vector.broadcast %66 : vector<1x512xf32> to vector<8x512xf32>
    %68 = arith.mulf %65, %67 : vector<8x512xf32>
    %cst_44 = arith.constant dense<0.000000e+00> : vector<8xf32>
    %69 = vector.multi_reduction <add>, %68, %cst_44 [1] : vector<8x512xf32> to vector<8xf32>
    %70 = vector.shape_cast %69 : vector<8xf32> to vector<8x1xf32>
    %71 = arith.addf %58, %70 : vector<8x1xf32>
    %c0_45 = arith.constant 0 : index
    %c2048 = arith.constant 2048 : index
    %72 = vector.load %arg6[%c0_45, %c2048] : memref<384x3072xbf16, #tpu.memory_space<vmem>>, vector<384x512xbf16>
    %cst_46 = arith.constant dense<0.000000e+00> : vector<8x512xf32>
    %73 = tpu.matmul %18, %72, %cst_46 {dimension_numbers = #tpu.dot_dimension_numbers<[1], [0], [0], [1], [0, 0, 1, 1], [], []>} : vector<8x384xbf16>, vector<384x512xbf16>, vector<8x512xf32> -> vector<8x512xf32>
    %c0_47 = arith.constant 0 : index
    %c2048_48 = arith.constant 2048 : index
    %74 = vector.load %arg7[%c0_47, %c2048_48] : memref<1x3072xf32, #tpu.memory_space<vmem>>, vector<1x512xf32>
    %75 = vector.broadcast %74 : vector<1x512xf32> to vector<8x512xf32>
    %76 = arith.addf %73, %75 : vector<8x512xf32>
    %cst_49 = arith.constant 0.000000e+00 : f32
    %77 = vector.broadcast %cst_49 : f32 to vector<8x512xf32>
    %78 = arith.maximumf %76, %77 : vector<8x512xf32>
    %c0_50 = arith.constant 0 : index
    %c2048_51 = arith.constant 2048 : index
    %79 = vector.load %arg8[%c0_50, %c2048_51] : memref<1x3072xf32, #tpu.memory_space<vmem>>, vector<1x512xf32>
    %80 = vector.broadcast %79 : vector<1x512xf32> to vector<8x512xf32>
    %81 = arith.mulf %78, %80 : vector<8x512xf32>
    %cst_52 = arith.constant dense<0.000000e+00> : vector<8xf32>
    %82 = vector.multi_reduction <add>, %81, %cst_52 [1] : vector<8x512xf32> to vector<8xf32>
    %83 = vector.shape_cast %82 : vector<8xf32> to vector<8x1xf32>
    %84 = arith.addf %71, %83 : vector<8x1xf32>
    %c0_53 = arith.constant 0 : index
    %c2560 = arith.constant 2560 : index
    %85 = vector.load %arg6[%c0_53, %c2560] : memref<384x3072xbf16, #tpu.memory_space<vmem>>, vector<384x512xbf16>
    %cst_54 = arith.constant dense<0.000000e+00> : vector<8x512xf32>
    %86 = tpu.matmul %18, %85, %cst_54 {dimension_numbers = #tpu.dot_dimension_numbers<[1], [0], [0], [1], [0, 0, 1, 1], [], []>} : vector<8x384xbf16>, vector<384x512xbf16>, vector<8x512xf32> -> vector<8x512xf32>
    %c0_55 = arith.constant 0 : index
    %c2560_56 = arith.constant 2560 : index
    %87 = vector.load %arg7[%c0_55, %c2560_56] : memref<1x3072xf32, #tpu.memory_space<vmem>>, vector<1x512xf32>
    %88 = vector.broadcast %87 : vector<1x512xf32> to vector<8x512xf32>
    %89 = arith.addf %86, %88 : vector<8x512xf32>
    %cst_57 = arith.constant 0.000000e+00 : f32
    %90 = vector.broadcast %cst_57 : f32 to vector<8x512xf32>
    %91 = arith.maximumf %89, %90 : vector<8x512xf32>
    %c0_58 = arith.constant 0 : index
    %c2560_59 = arith.constant 2560 : index
    %92 = vector.load %arg8[%c0_58, %c2560_59] : memref<1x3072xf32, #tpu.memory_space<vmem>>, vector<1x512xf32>
    %93 = vector.broadcast %92 : vector<1x512xf32> to vector<8x512xf32>
    %94 = arith.mulf %91, %93 : vector<8x512xf32>
    %cst_60 = arith.constant dense<0.000000e+00> : vector<8xf32>
    %95 = vector.multi_reduction <add>, %94, %cst_60 [1] : vector<8x512xf32> to vector<8xf32>
    %96 = vector.shape_cast %95 : vector<8xf32> to vector<8x1xf32>
    %97 = arith.addf %84, %96 : vector<8x1xf32>
    %c0_61 = arith.constant 0 : index
    %c0_62 = arith.constant 0 : index
    %98 = vector.load %arg9[%c0_61, %c0_62] : memref<1x1xf32, #tpu.memory_space<vmem>>, vector<1x1xf32>
    %99 = vector.broadcast %98 : vector<1x1xf32> to vector<8x1xf32>
    %100 = arith.addf %97, %99 : vector<8x1xf32>
    %c0_63 = arith.constant 0 : index
    %c0_64 = arith.constant 0 : index
    %101 = vector.load %arg10[%c0_63, %c0_64] : memref<8x1xf32, #tpu.memory_space<vmem>>, vector<8x1xf32>
    tpu.vector_store %arg10[%c0_63, %c0_64], %100 {strides = array<i32>} : memref<8x1xf32, #tpu.memory_space<vmem>>, vector<8x1xf32>,
    return
  }
  func.func @transform_0(%arg0: i32) -> (i32, i32) {
    %c0_i32 = arith.constant 0 : i32
    %c0_i32_0 = arith.constant 0 : i32
    return %arg0, %c0_i32 : i32, i32
  }
  func.func @transform_1(%arg0: i32) -> (i32, i32) {
    %c0_i32 = arith.constant 0 : i32
    %c0_i32_0 = arith.constant 0 : i32
    %c0_i32_1 = arith.constant 0 : i32
    return %c0_i32, %c0_i32_0 : i32, i32
  }
  func.func @transform_2(%arg0: i32) -> (i32, i32) {
    %c0_i32 = arith.constant 0 : i32
    %c0_i32_0 = arith.constant 0 : i32
    %c0_i32_1 = arith.constant 0 : i32
    return %c0_i32, %c0_i32_0 : i32, i32
  }
  func.func @transform_3(%arg0: i32) -> (i32, i32) {
    %c0_i32 = arith.constant 0 : i32
    %c0_i32_0 = arith.constant 0 : i32
    %c0_i32_1 = arith.constant 0 : i32
    return %c0_i32, %c0_i32_0 : i32, i32
  }
  func.func @transform_4(%arg0: i32) -> (i32, i32) {
    %c0_i32 = arith.constant 0 : i32
    %c0_i32_0 = arith.constant 0 : i32
    %c0_i32_1 = arith.constant 0 : i32
    return %c0_i32, %c0_i32_0 : i32, i32
  }
  func.func @transform_5(%arg0: i32) -> (i32, i32) {
    %c0_i32 = arith.constant 0 : i32
    %c0_i32_0 = arith.constant 0 : i32
    %c0_i32_1 = arith.constant 0 : i32
    return %c0_i32, %c0_i32_0 : i32, i32
  }
  func.func @transform_6(%arg0: i32) -> (i32, i32) {
    %c0_i32 = arith.constant 0 : i32
    %c0_i32_0 = arith.constant 0 : i32
    %c0_i32_1 = arith.constant 0 : i32
    return %c0_i32, %c0_i32_0 : i32, i32
  }
  func.func @transform_7(%arg0: i32) -> (i32, i32) {
    %c0_i32 = arith.constant 0 : i32
    %c0_i32_0 = arith.constant 0 : i32
    %c0_i32_1 = arith.constant 0 : i32
    return %c0_i32, %c0_i32_0 : i32, i32
  }
  func.func @transform_8(%arg0: i32) -> (i32, i32) {
    %c0_i32 = arith.constant 0 : i32
    %c0_i32_0 = arith.constant 0 : i32
    %c0_i32_1 = arith.constant 0 : i32
    return %c0_i32, %c0_i32_0 : i32, i32
  }
  func.func @transform_9(%arg0: i32) -> (i32, i32) {
    %c0_i32 = arith.constant 0 : i32
    %c0_i32_0 = arith.constant 0 : i32
    return %arg0, %c0_i32 : i32, i32
  }
}

</mosaic_0001>

<llo_original>
// kernel: tpu_custom_call.1
$region0: #{tpu_custom_call.1}
  #allocation0 [shape = 'u32[]', space=smem, size = 0x4, offset = 0x4, fixed_abs, tag = 'smem constant byte address 0x4 - core index']
  #allocation1 [shape = 'u32[144,128]{1,0:T(1,128)}', space=vmem, size = 0x12000, scoped, tag = 'internal scratch']
  #allocation2 [shape = 'f32[1,1]{1,0:T(1,128)S(1)}', space=vmem, size = 0x200, scoped, tag = 'scoped memory for tpu_custom_call.1']
  %s0 = inlined_call_operand.vmem [shape: f32[8,1], index: 0, kind: input, shape index: {}]
  %s1 = inlined_call_operand.hbm [shape: f32[1,128], index: 1, kind: input, shape index: {}]
  %s2 = inlined_call_operand.hbm [shape: f32[1,128], index: 2, kind: input, shape index: {}]
  %s3 = inlined_call_operand.hbm [shape: bf16[128,384], index: 3, kind: input, shape index: {}]
  %s4 = inlined_call_operand.hbm [shape: f32[1,384], index: 4, kind: input, shape index: {}]
  %s5 = inlined_call_operand.hbm [shape: bf16[384,3072], index: 5, kind: input, shape index: {}]
  %s6 = inlined_call_operand.hbm [shape: f32[1,3072], index: 6, kind: input, shape index: {}]
  %s7 = inlined_call_operand.hbm [shape: f32[1,3072], index: 7, kind: input, shape index: {}]
  %s8 = inlined_call_operand.<no memory space> [shape: f32[1,1], index: 8, kind: input, shape index: {}]
  %s9 = inlined_call_operand.vmem [shape: f32[8,1], index: 9, kind: output, shape index: {}]
  %s10 = sld [smem:[#allocation0]]
  $region74: #{tpu_custom_call.1} parent=0
    _
  %s12 = ssub.s32 1, %s10
  %s13 = scalar_select 0, %s12, %s10
  %v14 = vstv %s8
  %15 = vst [vmem:[#allocation2] sm:$0x1] %v14
  $region1: #{tpu_custom_call.1} parent=0
    #allocation3 [shape = 'u8[512]{0}', space=vmem, size = 0x400, scoped, tag = 'input window, operand 1, single buffered']
    #allocation4 [shape = 's32[1]{0}', space=sflag, size = 0x4, scoped, tag = 'scoped memory for tpu_custom_call.1']
    #allocation5 [shape = 'u8[512]{0}', space=vmem, size = 0x400, scoped, tag = 'input window, operand 2, single buffered']
    #allocation6 [shape = 's32[1]{0}', space=sflag, size = 0x4, scoped, tag = 'scoped memory for tpu_custom_call.1']
    #allocation7 [shape = 'u8[98304]{0}', space=vmem, size = 0x18000, scoped, tag = 'input window, operand 3, single buffered']
    #allocation8 [shape = 'u8[1536]{0}', space=vmem, size = 0x800, scoped, tag = 'input window, operand 4, single buffered']
    #allocation9 [shape = 's32[1]{0}', space=sflag, size = 0x4, scoped, tag = 'scoped memory for tpu_custom_call.1']
    #allocation10 [shape = 'u8[2359296]{0}', space=vmem, size = 0x240000, scoped, tag = 'input window, operand 5, single buffered']
    #allocation11 [shape = 'u8[12288]{0}', space=vmem, size = 0x3000, scoped, tag = 'input window, operand 6, single buffered']
    #allocation12 [shape = 's32[1]{0}', space=sflag, size = 0x4, scoped, tag = 'scoped memory for tpu_custom_call.1']
    #allocation13 [shape = 'u8[12288]{0}', space=vmem, size = 0x3000, scoped, tag = 'input window, operand 7, single buffered']
    %16 = vsyncpa [#allocation4], 0
    %17 = vsyncpa [#allocation6], 0
    %18 = vsyncpa [#allocation9], 0
    %19 = vsyncpa [#allocation12], 0
    // Predicated region
    $region2: #{tpu_custom_call.1} parent=1 // pred_check
      _
    $region3: #{tpu_custom_call.1} parent=1 // pred_check_branch
      %21 = sbr.rel (0) target = $region5
    $region4: #{tpu_custom_call.1} parent=1 // pred_region
      _
    $region5: #{tpu_custom_call.1} parent=1 // pred_fallthru
      _
    // Predicated region
    $region6: #{tpu_custom_call.1} parent=1 // pred_check
      _
    $region7: #{tpu_custom_call.1} parent=1 // pred_check_branch
      %23 = sbr.rel (0) target = $region9
    $region8: #{tpu_custom_call.1} parent=1 // pred_region
      %s25 = ssub.s32 16, 16
      %26 = vsyncadd [#allocation4], %s25
      %s28 = sshll.u32 [#allocation3], 4
      %s29 = int_to_ptr.vmem [resolvable:$true] %s28
      %31 = dma.hbm_to_vmem [thread:$0]  %s1, 16, %s29, [#allocation4]
    $region9: #{tpu_custom_call.1} parent=1 // pred_fallthru
      _
    // Predicated region
    $region10: #{tpu_custom_call.1} parent=1 // pred_check
      _
    $region11: #{tpu_custom_call.1} parent=1 // pred_check_branch
      %33 = sbr.rel (0) target = $region13
    $region12: #{tpu_custom_call.1} parent=1 // pred_region
      %s35 = ssub.s32 16, 16
      %36 = vsyncadd [#allocation6], %s35
      %s38 = sshll.u32 [#allocation5], 4
      %s39 = int_to_ptr.vmem [resolvable:$true] %s38
      %41 = dma.hbm_to_vmem [thread:$0]  %s2, 16, %s39, [#allocation6]
    $region13: #{tpu_custom_call.1} parent=1 // pred_fallthru
      _
    // Predicated region
    $region14: #{tpu_custom_call.1} parent=1 // pred_check
      _
    $region15: #{tpu_custom_call.1} parent=1 // pred_check_branch
      %43 = sbr.rel (0) target = $region17
    $region16: #{tpu_custom_call.1} parent=1 // pred_region
      %s45 = ssub.s32 3072, 3072
      %46 = vsyncadd [#allocation6], %s45
      %s47 = sshll.u32 [#allocation7], 4
      %s48 = int_to_ptr.vmem [resolvable:$true] %s47
      %53 = dma.hbm_to_vmem [thread:$0]  %s3, 3072, %s48, [#allocation6], 192, 192, 12
    $region17: #{tpu_custom_call.1} parent=1 // pred_fallthru
      _
    // Predicated region
    $region18: #{tpu_custom_call.1} parent=1 // pred_check
      _
    $region19: #{tpu_custom_call.1} parent=1 // pred_check_branch
      %55 = sbr.rel (0) target = $region21
    $region20: #{tpu_custom_call.1} parent=1 // pred_region
      %s57 = ssub.s32 48, 48
      %58 = vsyncadd [#allocation9], %s57
      %s60 = sshll.u32 [#allocation8], 4
      %s61 = int_to_ptr.vmem [resolvable:$true] %s60
      %63 = dma.hbm_to_vmem [thread:$0]  %s4, 48, %s61, [#allocation9]
    $region21: #{tpu_custom_call.1} parent=1 // pred_fallthru
      _
    // Predicated region
    $region22: #{tpu_custom_call.1} parent=1 // pred_check
      _
    $region23: #{tpu_custom_call.1} parent=1 // pred_check_branch
      %65 = sbr.rel (0) target = $region25
    $region24: #{tpu_custom_call.1} parent=1 // pred_region
      %s67 = ssub.s32 73728, 73728
      %68 = vsyncadd [#allocation9], %s67
      %s69 = sshll.u32 [#allocation10], 4
      %s70 = int_to_ptr.vmem [resolvable:$true] %s69
      %75 = dma.hbm_to_vmem [thread:$0]  %s5, 73728, %s70, [#allocation9], 1536, 1536, 96
    $region25: #{tpu_custom_call.1} parent=1 // pred_fallthru
      _
    // Predicated region
    $region26: #{tpu_custom_call.1} parent=1 // pred_check
      _
    $region27: #{tpu_custom_call.1} parent=1 // pred_check_branch
      %77 = sbr.rel (0) target = $region29
    $region28: #{tpu_custom_call.1} parent=1 // pred_region
      %s79 = ssub.s32 384, 384
      %80 = vsyncadd [#allocation12], %s79
      %s82 = sshll.u32 [#allocation11], 4
      %s83 = int_to_ptr.vmem [resolvable:$true] %s82
      %85 = dma.hbm_to_vmem [thread:$0]  %s6, 384, %s83, [#allocation12]
    $region29: #{tpu_custom_call.1} parent=1 // pred_fallthru
      _
    // Predicated region
    $region30: #{tpu_custom_call.1} parent=1 // pred_check
      _
    $region31: #{tpu_custom_call.1} parent=1 // pred_check_branch
      %87 = sbr.rel (0) target = $region33
    $region32: #{tpu_custom_call.1} parent=1 // pred_region
      %s89 = ssub.s32 384, 384
      %90 = vsyncadd [#allocation12], %s89
      %s92 = sshll.u32 [#allocation13], 4
      %s93 = int_to_ptr.vmem [resolvable:$true] %s92
      %95 = dma.hbm_to_vmem [thread:$0]  %s7, 384, %s93, [#allocation12]
    $region33: #{tpu_custom_call.1} parent=1 // pred_fallthru
      _
    // Predicated region
    $region34: #{tpu_custom_call.1} parent=1 // pred_check
      _
    $region35: #{tpu_custom_call.1} parent=1 // pred_check_branch
      %97 = sbr.rel (0) target = $region37
    $region36: #{tpu_custom_call.1} parent=1 // pred_region
      _
    $region37: #{tpu_custom_call.1} parent=1 // pred_fallthru
      _
    // Predicated region
    $region38: #{tpu_custom_call.1} parent=1 // pred_check
      _
    $region39: #{tpu_custom_call.1} parent=1 // pred_check_branch
      %99 = sbr.rel (0) target = $region41
    $region40: #{tpu_custom_call.1} parent=1 // pred_region
      %100 = dma.done [#allocation4], 16
    $region41: #{tpu_custom_call.1} parent=1 // pred_fallthru
      _
    // Predicated region
    $region42: #{tpu_custom_call.1} parent=1 // pred_check
      _
    $region43: #{tpu_custom_call.1} parent=1 // pred_check_branch
      %102 = sbr.rel (0) target = $region45
    $region44: #{tpu_custom_call.1} parent=1 // pred_region
      %103 = dma.done [#allocation6], 16
    $region45: #{tpu_custom_call.1} parent=1 // pred_fallthru
      _
    // Predicated region
    $region46: #{tpu_custom_call.1} parent=1 // pred_check
      _
    $region47: #{tpu_custom_call.1} parent=1 // pred_check_branch
      %105 = sbr.rel (0) target = $region49
    $region48: #{tpu_custom_call.1} parent=1 // pred_region
      %106 = dma.done [#allocation6], 3072
    $region49: #{tpu_custom_call.1} parent=1 // pred_fallthru
      _
    // Predicated region
    $region50: #{tpu_custom_call.1} parent=1 // pred_check
      _
    $region51: #{tpu_custom_call.1} parent=1 // pred_check_branch
      %108 = sbr.rel (0) target = $region53
    $region52: #{tpu_custom_call.1} parent=1 // pred_region
      %109 = dma.done [#allocation9], 48
    $region53: #{tpu_custom_call.1} parent=1 // pred_fallthru
      _
    // Predicated region
    $region54: #{tpu_custom_call.1} parent=1 // pred_check
      _
    $region55: #{tpu_custom_call.1} parent=1 // pred_check_branch
      %111 = sbr.rel (0) target = $region57
    $region56: #{tpu_custom_call.1} parent=1 // pred_region
      %112 = dma.done [#allocation9], 73728
    $region57: #{tpu_custom_call.1} parent=1 // pred_fallthru
      _
    // Predicated region
    $region58: #{tpu_custom_call.1} parent=1 // pred_check
      _
    $region59: #{tpu_custom_call.1} parent=1 // pred_check_branch
      %114 = sbr.rel (0) target = $region61
    $region60: #{tpu_custom_call.1} parent=1 // pred_region
      %115 = dma.done [#allocation12], 384
    $region61: #{tpu_custom_call.1} parent=1 // pred_fallthru
      _
    // Predicated region
    $region62: #{tpu_custom_call.1} parent=1 // pred_check
      _
    $region63: #{tpu_custom_call.1} parent=1 // pred_check_branch
      %117 = sbr.rel (0) target = $region65
    $region64: #{tpu_custom_call.1} parent=1 // pred_region
      %118 = dma.done [#allocation12], 384
    $region65: #{tpu_custom_call.1} parent=1 // pred_fallthru
      _
    %v120 = vld [vmem:[%s0] sm:$0xff]
    %v121 = vld [vmem:[#allocation3] sm:$0x1]
    %123 = vset.pattern.permute.xlu0 0
    %124 = vperm.xlu0 %123, %v120
    %v125 = vpop.permute.xlu0 %124
    %v128 = vlaneseq
    %v129 = vshrl.u32 %v128, 7
    %v130 = vsub.s32 0, %v129
    %v131 = vrot.slane %v121, %v130
    %v133 = vmul.f32 %v125, %v131
    %v134 = vld [vmem:[#allocation5] sm:$0x1]
    %v136 = vlaneseq
    %v137 = vshrl.u32 %v136, 7
    %v138 = vsub.s32 0, %v137
    %v139 = vrot.slane %v134, %v138
    %v141 = vadd.f32 %v133, %v139
    %v142 = vmax.f32 %v141, 0.0
    %v143 = vpack.c.bf16 %v142, %v142
    %v144 = vld [vmem:[#allocation7] sm:$0xff]
    %v145 = vld [vmem:[#allocation7 + $0x8] sm:$0xf]
    %v146 = vld [vmem:[#allocation7 + $0xc] sm:$0xff]
    %v147 = vld [vmem:[#allocation7 + $0x14] sm:$0xf]
    %v148 = vld [vmem:[#allocation7 + $0x18] sm:$0xff]
    %v149 = vld [vmem:[#allocation7 + $0x20] sm:$0xf]
    %v150 = vld [vmem:[#allocation7 + $0x24] sm:$0xff]
    %v151 = vld [vmem:[#allocation7 + $0x2c] sm:$0xf]
    %v152 = vld [vmem:[#allocation7 + $0x30] sm:$0xff]
    %v153 = vld [vmem:[#allocation7 + $0x38] sm:$0xf]
    %v154 = vld [vmem:[#allocation7 + $0x3c] sm:$0xff]
    %v155 = vld [vmem:[#allocation7 + $0x44] sm:$0xf]
    %v156 = vld [vmem:[#allocation7 + $0x48] sm:$0xff]
    %v157 = vld [vmem:[#allocation7 + $0x50] sm:$0xf]
    %v158 = vld [vmem:[#allocation7 + $0x54] sm:$0xff]
    %v159 = vld [vmem:[#allocation7 + $0x5c] sm:$0xf]
    %v160 = vld [vmem:[#allocation7 + $0x60] sm:$0xff]
    %v161 = vld [vmem:[#allocation7 + $0x68] sm:$0xf]
    %v162 = vld [vmem:[#allocation7 + $0x6c] sm:$0xff]
    %v163 = vld [vmem:[#allocation7 + $0x74] sm:$0xf]
    %v164 = vld [vmem:[#allocation7 + $0x78] sm:$0xff]
    %v165 = vld [vmem:[#allocation7 + $0x80] sm:$0xf]
    %v166 = vld [vmem:[#allocation7 + $0x84] sm:$0xff]
    %v167 = vld [vmem:[#allocation7 + $0x8c] sm:$0xf]
    %v168 = vld [vmem:[#allocation7 + $0x90] sm:$0xff]
    %v169 = vld [vmem:[#allocation7 + $0x98] sm:$0xf]
    %v170 = vld [vmem:[#allocation7 + $0x9c] sm:$0xff]
    %v171 = vld [vmem:[#allocation7 + $0xa4] sm:$0xf]
    %v172 = vld [vmem:[#allocation7 + $0xa8] sm:$0xff]
    %v173 = vld [vmem:[#allocation7 + $0xb0] sm:$0xf]
    %v174 = vld [vmem:[#allocation7 + $0xb4] sm:$0xff]
    %v175 = vld [vmem:[#allocation7 + $0xbc] sm:$0xf]
    %v176 = vld [vmem:[#allocation8] sm:$0x7]
    %v178 = vlaneseq
    %v179 = vshrl.u32 %v178, 7
    %v180 = vsub.s32 0, %v179
    %v181 = vrot.slane %v176, %v180
    %v182 = vlaneseq
    %v183 = vshrl.u32 %v182, 7
    %v184 = vsub.s32 1, %v183
    %v185 = vrot.slane %v176, %v184
    %v186 = vlaneseq
    %v187 = vshrl.u32 %v186, 7
    %v188 = vsub.s32 2, %v187
    %v189 = vrot.slane %v176, %v188
    %v225 = vunpack.c.l.b16 %v144
    %v226 = vunpack.c.h.b16 %v144
    %v227 = vunpack.c.l.b16 %v145
    %v228 = vunpack.c.l.b16 %v146
    %v229 = vunpack.c.h.b16 %v146
    %v230 = vunpack.c.l.b16 %v147
    %v231 = vunpack.c.l.b16 %v148
    %v232 = vunpack.c.h.b16 %v148
    %v233 = vunpack.c.l.b16 %v149
    %v234 = vunpack.c.l.b16 %v150
    %v235 = vunpack.c.h.b16 %v150
    %v236 = vunpack.c.l.b16 %v151
    %v237 = vunpack.c.l.b16 %v152
    %v238 = vunpack.c.h.b16 %v152
    %v239 = vunpack.c.l.b16 %v153
    %v240 = vunpack.c.l.b16 %v154
    %v241 = vunpack.c.h.b16 %v154
    %v242 = vunpack.c.l.b16 %v155
    %v243 = vunpack.c.l.b16 %v156
    %v244 = vunpack.c.h.b16 %v156
    %v245 = vunpack.c.l.b16 %v157
    %v246 = vunpack.c.l.b16 %v158
    %v247 = vunpack.c.h.b16 %v158
    %v248 = vunpack.c.l.b16 %v159
    %v249 = vunpack.c.l.b16 %v160
    %v250 = vunpack.c.h.b16 %v160
    %v251 = vunpack.c.l.b16 %v161
    %v252 = vunpack.c.l.b16 %v162
    %v253 = vunpack.c.h.b16 %v162
    %v254 = vunpack.c.l.b16 %v163
    %v255 = vunpack.c.l.b16 %v164
    %v256 = vunpack.c.h.b16 %v164
    %v257 = vunpack.c.l.b16 %v165
    %v258 = vunpack.c.l.b16 %v166
    %v259 = vunpack.c.h.b16 %v166
    %v260 = vunpack.c.l.b16 %v167
    %v261 = vunpack.c.l.b16 %v168
    %v262 = vunpack.c.h.b16 %v168
    %v263 = vunpack.c.l.b16 %v169
    %v264 = vunpack.c.l.b16 %v170
    %v265 = vunpack.c.h.b16 %v170
    %v266 = vunpack.c.l.b16 %v171
    %v267 = vunpack.c.l.b16 %v172
    %v268 = vunpack.c.h.b16 %v172
    %v269 = vunpack.c.l.b16 %v173
    %v270 = vunpack.c.l.b16 %v174
    %v271 = vunpack.c.h.b16 %v174
    %v272 = vunpack.c.l.b16 %v175
    %v273 = vpack.c.b16 %v228, %v225
    %v274 = vpack.c.b16 %v229, %v226
    %v275 = vpack.c.b16 %v230, %v227
    %v276 = vpack.c.b16 %v234, %v231
    %v277 = vpack.c.b16 %v235, %v232
    %v278 = vpack.c.b16 %v236, %v233
    %v279 = vpack.c.b16 %v240, %v237
    %v280 = vpack.c.b16 %v241, %v238
    %v281 = vpack.c.b16 %v242, %v239
    %v282 = vpack.c.b16 %v246, %v243
    %v283 = vpack.c.b16 %v247, %v244
    %v284 = vpack.c.b16 %v248, %v245
    %v285 = vpack.c.b16 %v252, %v249
    %v286 = vpack.c.b16 %v253, %v250
    %v287 = vpack.c.b16 %v254, %v251
    %v288 = vpack.c.b16 %v258, %v255
    %v289 = vpack.c.b16 %v259, %v256
    %v290 = vpack.c.b16 %v260, %v257
    %v291 = vpack.c.b16 %v264, %v261
    %v292 = vpack.c.b16 %v265, %v262
    %v293 = vpack.c.b16 %v266, %v263
    %v294 = vpack.c.b16 %v270, %v267
    %v295 = vpack.c.b16 %v271, %v268
    %v296 = vpack.c.b16 %v272, %v269
    %321 = vmatprep.subr.bf16.mxu0 %v295
    %322 = vmatpush1.bf16.msra.mxu0 %v294
    %323 = vmatprep.subr.bf16.mxu0 %v292
    %324 = vmatpush1.bf16.msra.mxu0 %v291
    %325 = vmatprep.subr.bf16.mxu0 %v289
    %326 = vmatpush1.bf16.msra.mxu0 %v288
    %327 = vmatprep.subr.bf16.mxu0 %v286
    %328 = vmatpush1.bf16.msra.mxu0 %v285
    %329 = vmatprep.subr.bf16.mxu0 %v283
    %330 = vmatpush1.bf16.msra.mxu0 %v282
    %331 = vmatprep.subr.bf16.mxu0 %v280
    %332 = vmatpush1.bf16.msra.mxu0 %v279
    %333 = vmatprep.subr.bf16.mxu0 %v277
    %334 = vmatpush1.bf16.msra.mxu0 %v276
    %335 = vmatprep.subr.bf16.mxu0 %v274
    %336 = vmatpush1.bf16.msra.mxu0 %v273
    %337 = vmatprep.subr.bf16.mxu0 0
    %338 = vmatpush2.bf16.msra.mxu0 0
    %339 = vmatprep.subr.bf16.mxu0 0
    %340 = vmatpush2.bf16.msra.mxu0 0
    %341 = vmatprep.subr.bf16.mxu0 0
    %342 = vmatpush2.bf16.msra.mxu0 0
    %343 = vmatprep.subr.bf16.mxu0 0
    %344 = vmatpush2.bf16.msra.mxu0 0
    %345 = vmatprep.subr.bf16.mxu0 0
    %346 = vmatpush2.bf16.msra.mxu0 0
    %347 = vmatprep.subr.bf16.mxu0 0
    %348 = vmatpush2.bf16.msra.mxu0 0
    %349 = vmatprep.subr.bf16.mxu0 0
    %350 = vmatpush2.bf16.msra.mxu0 0
    %351 = vmatprep.subr.bf16.mxu0 0
    %352 = vmatpush2.bf16.msra.mxu0 0
    %353 = vmatprep.mubr.bf16.mxu0 0
    %354 = vmatmul.mubr.bf16.gmra.mxu0 %v143
    %v355 = vpop.f32.mrf.mxu0
    %v356 = vadd.f32 %v181, %v355
    %v357 = vpop.f32.mrf.mxu0
    %v358 = vadd.f32 %v185, %v357
    %v359 = vpop.f32.mrf.mxu0
    %v360 = vpop.f32.mrf.mxu0
    %361 = vdwg.mxu0
    %362 = vmatprep.subr.bf16.mxu0 0
    %363 = vmatpush1.bf16.msra.mxu0 %v296
    %364 = vmatprep.subr.bf16.mxu0 0
    %365 = vmatpush1.bf16.msra.mxu0 %v293
    %366 = vmatprep.subr.bf16.mxu0 0
    %367 = vmatpush1.bf16.msra.mxu0 %v290
    %368 = vmatprep.subr.bf16.mxu0 0
    %369 = vmatpush1.bf16.msra.mxu0 %v287
    %370 = vmatprep.subr.bf16.mxu0 0
    %371 = vmatpush1.bf16.msra.mxu0 %v284
    %372 = vmatprep.subr.bf16.mxu0 0
    %373 = vmatpush1.bf16.msra.mxu0 %v281
    %374 = vmatprep.subr.bf16.mxu0 0
    %375 = vmatpush1.bf16.msra.mxu0 %v278
    %376 = vmatprep.subr.bf16.mxu0 0
    %377 = vmatpush1.bf16.msra.mxu0 %v275
    %378 = vmatprep.subr.bf16.mxu0 0
    %379 = vmatpush2.bf16.msra.mxu0 0
    %380 = vmatprep.subr.bf16.mxu0 0
    %381 = vmatpush2.bf16.msra.mxu0 0
    %382 = vmatprep.subr.bf16.mxu0 0
    %383 = vmatpush2.bf16.msra.mxu0 0
    %384 = vmatprep.subr.bf16.mxu0 0
    %385 = vmatpush2.bf16.msra.mxu0 0
    %386 = vmatprep.subr.bf16.mxu0 0
    %387 = vmatpush2.bf16.msra.mxu0 0
    %388 = vmatprep.subr.bf16.mxu0 0
    %389 = vmatpush2.bf16.msra.mxu0 0
    %390 = vmatprep.subr.bf16.mxu0 0
    %391 = vmatpush2.bf16.msra.mxu0 0
    %392 = vmatprep.subr.bf16.mxu0 0
    %393 = vmatpush2.bf16.msra.mxu0 0
    %394 = vmatprep.mubr.bf16.mxu0 0
    %395 = vmatmul.mubr.bf16.gmra.mxu0 %v143
    %v396 = vpop.f32.mrf.mxu0
    %v397 = vadd.f32 %v189, %v396
    %v398 = vpop.f32.mrf.mxu0
    %v399 = vpop.f32.mrf.mxu0
    %v400 = vpop.f32.mrf.mxu0
    %401 = vdwg.mxu0
    %v402 = vmax.f32 %v356, 0.0
    %v403 = vmax.f32 %v358, 0.0
    %v404 = vmax.f32 %v397, 0.0
    %v405 = vpack.c.bf16 %v402, %v402
    %v406 = vpack.c.bf16 %v403, %v403
    %v407 = vpack.c.bf16 %v404, %v404
    %v408 = vld [vmem:[#allocation10] sm:$0xff]
    %v409 = vld [vmem:[#allocation10 + $0x8] sm:$0xff]
    %v410 = vld [vmem:[#allocation10 + $0x60] sm:$0xff]
    %v411 = vld [vmem:[#allocation10 + $0x68] sm:$0xff]
    %v412 = vld [vmem:[#allocation10 + $0xc0] sm:$0xff]
    %v413 = vld [vmem:[#allocation10 + $0xc8] sm:$0xff]
    %v414 = vld [vmem:[#allocation10 + $0x120] sm:$0xff]
    %v415 = vld [vmem:[#allocation10 + $0x128] sm:$0xff]
    %v416 = vld [vmem:[#allocation10 + $0x180] sm:$0xff]
    %v417 = vld [vmem:[#allocation10 + $0x188] sm:$0xff]
    %v418 = vld [vmem:[#allocation10 + $0x1e0] sm:$0xff]
    %v419 = vld [vmem:[#allocation10 + $0x1e8] sm:$0xff]
    %v420 = vld [vmem:[#allocation10 + $0x240] sm:$0xff]
    %v421 = vld [vmem:[#allocation10 + $0x248] sm:$0xff]
    %v422 = vld [vmem:[#allocation10 + $0x2a0] sm:$0xff]
    %v423 = vld [vmem:[#allocation10 + $0x2a8] sm:$0xff]
    %v424 = vld [vmem:[#allocation10 + $0x300] sm:$0xff]
    %v425 = vld [vmem:[#allocation10 + $0x308] sm:$0xff]
    %v426 = vld [vmem:[#allocation10 + $0x360] sm:$0xff]
    %v427 = vld [vmem:[#allocation10 + $0x368] sm:$0xff]
    %v428 = vld [vmem:[#allocation10 + $0x3c0] sm:$0xff]
    %v429 = vld [vmem:[#allocation10 + $0x3c8] sm:$0xff]
    %v430 = vld [vmem:[#allocation10 + $0x420] sm:$0xff]
    %v431 = vld [vmem:[#allocation10 + $0x428] sm:$0xff]
    %v432 = vld [vmem:[#allocation10 + $0x480] sm:$0xff]
    %v433 = vld [vmem:[#allocation10 + $0x488] sm:$0xff]
    %v434 = vld [vmem:[#allocation10 + $0x4e0] sm:$0xff]
    %v435 = vld [vmem:[#allocation10 + $0x4e8] sm:$0xff]
    %v436 = vld [vmem:[#allocation10 + $0x540] sm:$0xff]
    %v437 = vld [vmem:[#allocation10 + $0x548] sm:$0xff]
    %v438 = vld [vmem:[#allocation10 + $0x5a0] sm:$0xff]
    %v439 = vld [vmem:[#allocation10 + $0x5a8] sm:$0xff]
    %v440 = vld [vmem:[#allocation10 + $0x600] sm:$0xff]
    %v441 = vld [vmem:[#allocation10 + $0x608] sm:$0xff]
    %v442 = vld [vmem:[#allocation10 + $0x660] sm:$0xff]
    %v443 = vld [vmem:[#allocation10 + $0x668] sm:$0xff]
    %v444 = vld [vmem:[#allocation10 + $0x6c0] sm:$0xff]
    %v445 = vld [vmem:[#allocation10 + $0x6c8] sm:$0xff]
    %v446 = vld [vmem:[#allocation10 + $0x720] sm:$0xff]
    %v447 = vld [vmem:[#allocation10 + $0x728] sm:$0xff]
    %v448 = vld [vmem:[#allocation10 + $0x780] sm:$0xff]
    %v449 = vld [vmem:[#allocation10 + $0x788] sm:$0xff]
    %v450 = vld [vmem:[#allocation10 + $0x7e0] sm:$0xff]
    %v451 = vld [vmem:[#allocation10 + $0x7e8] sm:$0xff]
    %v452 = vld [vmem:[#allocation10 + $0x840] sm:$0xff]
    %v453 = vld [vmem:[#allocation10 + $0x848] sm:$0xff]
    %v454 = vld [vmem:[#allocation10 + $0x8a0] sm:$0xff]
    %v455 = vld [vmem:[#allocation10 + $0x8a8] sm:$0xff]
    %v456 = vld [vmem:[#allocation10 + $0x900] sm:$0xff]
    %v457 = vld [vmem:[#allocation10 + $0x908] sm:$0xff]
    %v458 = vld [vmem:[#allocation10 + $0x960] sm:$0xff]
    %v459 = vld [vmem:[#allocation10 + $0x968] sm:$0xff]
    %v460 = vld [vmem:[#allocation10 + $0x9c0] sm:$0xff]
    %v461 = vld [vmem:[#allocation10 + $0x9c8] sm:$0xff]
    %v462 = vld [vmem:[#allocation10 + $0xa20] sm:$0xff]
    %v463 = vld [vmem:[#allocation10 + $0xa28] sm:$0xff]
    %v464 = vld [vmem:[#allocation10 + $0xa80] sm:$0xff]
    %v465 = vld [vmem:[#allocation10 + $0xa88] sm:$0xff]
    %v466 = vld [vmem:[#allocation10 + $0xae0] sm:$0xff]
    %v467 = vld [vmem:[#allocation10 + $0xae8] sm:$0xff]
    %v468 = vld [vmem:[#allocation10 + $0xb40] sm:$0xff]
    %v469 = vld [vmem:[#allocation10 + $0xb48] sm:$0xff]
    %v470 = vld [vmem:[#allocation10 + $0xba0] sm:$0xff]
    %v471 = vld [vmem:[#allocation10 + $0xba8] sm:$0xff]
    %v472 = vld [vmem:[#allocation10 + $0xc00] sm:$0xff]
    %v473 = vld [vmem:[#allocation10 + $0xc08] sm:$0xff]
    %v474 = vld [vmem:[#allocation10 + $0xc60] sm:$0xff]
    %v475 = vld [vmem:[#allocation10 + $0xc68] sm:$0xff]
    %v476 = vld [vmem:[#allocation10 + $0xcc0] sm:$0xff]
    %v477 = vld [vmem:[#allocation10 + $0xcc8] sm:$0xff]
    %v478 = vld [vmem:[#allocation10 + $0xd20] sm:$0xff]
    %v479 = vld [vmem:[#allocation10 + $0xd28] sm:$0xff]
    %v480 = vld [vmem:[#allocation10 + $0xd80] sm:$0xff]
    %v481 = vld [vmem:[#allocation10 + $0xd88] sm:$0xff]
    %v482 = vld [vmem:[#allocation10 + $0xde0] sm:$0xff]
    %v483 = vld [vmem:[#allocation10 + $0xde8] sm:$0xff]
    %v484 = vld [vmem:[#allocation10 + $0xe40] sm:$0xff]
    %v485 = vld [vmem:[#allocation10 + $0xe48] sm:$0xff]
    %v486 = vld [vmem:[#allocation10 + $0xea0] sm:$0xff]
    %v487 = vld [vmem:[#allocation10 + $0xea8] sm:$0xff]
    %v488 = vld [vmem:[#allocation10 + $0xf00] sm:$0xff]
    %v489 = vld [vmem:[#allocation10 + $0xf08] sm:$0xff]
    %v490 = vld [vmem:[#allocation10 + $0xf60] sm:$0xff]
    %v491 = vld [vmem:[#allocation10 + $0xf68] sm:$0xff]
    %v492 = vld [vmem:[#allocation10 + $0xfc0] sm:$0xff]
    %v493 = vld [vmem:[#allocation10 + $0xfc8] sm:$0xff]
    %v494 = vld [vmem:[#allocation10 + $0x1020] sm:$0xff]
    %v495 = vld [vmem:[#allocation10 + $0x1028] sm:$0xff]
    %v496 = vld [vmem:[#allocation10 + $0x1080] sm:$0xff]
    %v497 = vld [vmem:[#allocation10 + $0x1088] sm:$0xff]
    %v498 = vld [vmem:[#allocation10 + $0x10e0] sm:$0xff]
    %v499 = vld [vmem:[#allocation10 + $0x10e8] sm:$0xff]
    %v500 = vld [vmem:[#allocation10 + $0x1140] sm:$0xff]
    %v501 = vld [vmem:[#allocation10 + $0x1148] sm:$0xff]
    %v502 = vld [vmem:[#allocation10 + $0x11a0] sm:$0xff]
    %v503 = vld [vmem:[#allocation10 + $0x11a8] sm:$0xff]
    %v504 = vld [vmem:[#allocation11] sm:$0xf]
    %v506 = vlaneseq
    %v507 = vshrl.u32 %v506, 7
    %v508 = vsub.s32 0, %v507
    %v509 = vrot.slane %v504, %v508
    %v510 = vlaneseq
    %v511 = vshrl.u32 %v510, 7
    %v512 = vsub.s32 1, %v511
    %v513 = vrot.slane %v504, %v512
    %v514 = vlaneseq
    %v515 = vshrl.u32 %v514, 7
    %v516 = vsub.s32 2, %v515
    %v517 = vrot.slane %v504, %v516
    %v518 = vlaneseq
    %v519 = vshrl.u32 %v518, 7
    %v520 = vsub.s32 3, %v519
    %v521 = vrot.slane %v504, %v520
    %v622 = vunpack.c.l.b16 %v408
    %v623 = vunpack.c.h.b16 %v408
    %v624 = vunpack.c.l.b16 %v409
    %v625 = vunpack.c.h.b16 %v409
    %v626 = vunpack.c.l.b16 %v410
    %v627 = vunpack.c.h.b16 %v410
    %v628 = vunpack.c.l.b16 %v411
    %v629 = vunpack.c.h.b16 %v411
    %v630 = vunpack.c.l.b16 %v412
    %v631 = vunpack.c.h.b16 %v412
    %v632 = vunpack.c.l.b16 %v413
    %v633 = vunpack.c.h.b16 %v413
    %v634 = vunpack.c.l.b16 %v414
    %v635 = vunpack.c.h.b16 %v414
    %v636 = vunpack.c.l.b16 %v415
    %v637 = vunpack.c.h.b16 %v415
    %v638 = vunpack.c.l.b16 %v416
    %v639 = vunpack.c.h.b16 %v416
    %v640 = vunpack.c.l.b16 %v417
    %v641 = vunpack.c.h.b16 %v417
    %v642 = vunpack.c.l.b16 %v418
    %v643 = vunpack.c.h.b16 %v418
    %v644 = vunpack.c.l.b16 %v419
    %v645 = vunpack.c.h.b16 %v419
    %v646 = vunpack.c.l.b16 %v420
    %v647 = vunpack.c.h.b16 %v420
    %v648 = vunpack.c.l.b16 %v421
    %v649 = vunpack.c.h.b16 %v421
    %v650 = vunpack.c.l.b16 %v422
    %v651 = vunpack.c.h.b16 %v422
    %v652 = vunpack.c.l.b16 %v423
    %v653 = vunpack.c.h.b16 %v423
    %v654 = vunpack.c.l.b16 %v424
    %v655 = vunpack.c.h.b16 %v424
    %v656 = vunpack.c.l.b16 %v425
    %v657 = vunpack.c.h.b16 %v425
    %v658 = vunpack.c.l.b16 %v426
    %v659 = vunpack.c.h.b16 %v426
    %v660 = vunpack.c.l.b16 %v427
    %v661 = vunpack.c.h.b16 %v427
    %v662 = vunpack.c.l.b16 %v428
    %v663 = vunpack.c.h.b16 %v428
    %v664 = vunpack.c.l.b16 %v429
    %v665 = vunpack.c.h.b16 %v429
    %v666 = vunpack.c.l.b16 %v430
    %v667 = vunpack.c.h.b16 %v430
    %v668 = vunpack.c.l.b16 %v431
    %v669 = vunpack.c.h.b16 %v431
    %v670 = vunpack.c.l.b16 %v432
    %v671 = vunpack.c.h.b16 %v432
    %v672 = vunpack.c.l.b16 %v433
    %v673 = vunpack.c.h.b16 %v433
    %v674 = vunpack.c.l.b16 %v434
    %v675 = vunpack.c.h.b16 %v434
    %v676 = vunpack.c.l.b16 %v435
    %v677 = vunpack.c.h.b16 %v435
    %v678 = vunpack.c.l.b16 %v436
    %v679 = vunpack.c.h.b16 %v436
    %v680 = vunpack.c.l.b16 %v437
    %v681 = vunpack.c.h.b16 %v437
    %v682 = vunpack.c.l.b16 %v438
    %v683 = vunpack.c.h.b16 %v438
    %v684 = vunpack.c.l.b16 %v439
    %v685 = vunpack.c.h.b16 %v439
    %v686 = vunpack.c.l.b16 %v440
    %v687 = vunpack.c.h.b16 %v440
    %v688 = vunpack.c.l.b16 %v441
    %v689 = vunpack.c.h.b16 %v441
    %v690 = vunpack.c.l.b16 %v442
    %v691 = vunpack.c.h.b16 %v442
    %v692 = vunpack.c.l.b16 %v443
    %v693 = vunpack.c.h.b16 %v443
    %v694 = vunpack.c.l.b16 %v444
    %v695 = vunpack.c.h.b16 %v444
    %v696 = vunpack.c.l.b16 %v445
    %v697 = vunpack.c.h.b16 %v445
    %v698 = vunpack.c.l.b16 %v446
    %v699 = vunpack.c.h.b16 %v446
    %v700 = vunpack.c.l.b16 %v447
    %v701 = vunpack.c.h.b16 %v447
    %v702 = vunpack.c.l.b16 %v448
    %v703 = vunpack.c.h.b16 %v448
    %v704 = vunpack.c.l.b16 %v449
    %v705 = vunpack.c.h.b16 %v449
    %v706 = vunpack.c.l.b16 %v450
    %v707 = vunpack.c.h.b16 %v450
    %v708 = vunpack.c.l.b16 %v451
    %v709 = vunpack.c.h.b16 %v451
    %v710 = vunpack.c.l.b16 %v452
    %v711 = vunpack.c.h.b16 %v452
    %v712 = vunpack.c.l.b16 %v453
    %v713 = vunpack.c.h.b16 %v453
    %v714 = vunpack.c.l.b16 %v454
    %v715 = vunpack.c.h.b16 %v454
    %v716 = vunpack.c.l.b16 %v455
    %v717 = vunpack.c.h.b16 %v455
    %v718 = vunpack.c.l.b16 %v456
    %v719 = vunpack.c.h.b16 %v456
    %v720 = vunpack.c.l.b16 %v457
    %v721 = vunpack.c.h.b16 %v457
    %v722 = vunpack.c.l.b16 %v458
    %v723 = vunpack.c.h.b16 %v458
    %v724 = vunpack.c.l.b16 %v459
    %v725 = vunpack.c.h.b16 %v459
    %v726 = vunpack.c.l.b16 %v460
    %v727 = vunpack.c.h.b16 %v460
    %v728 = vunpack.c.l.b16 %v461
    %v729 = vunpack.c.h.b16 %v461
    %v730 = vunpack.c.l.b16 %v462
    %v731 = vunpack.c.h.b16 %v462
    %v732 = vunpack.c.l.b16 %v463
    %v733 = vunpack.c.h.b16 %v463
    %v734 = vunpack.c.l.b16 %v464
    %v735 = vunpack.c.h.b16 %v464
    %v736 = vunpack.c.l.b16 %v465
    %v737 = vunpack.c.h.b16 %v465
    %v738 = vunpack.c.l.b16 %v466
    %v739 = vunpack.c.h.b16 %v466
    %v740 = vunpack.c.l.b16 %v467
    %v741 = vunpack.c.h.b16 %v467
    %v742 = vunpack.c.l.b16 %v468
    %v743 = vunpack.c.h.b16 %v468
    %v744 = vunpack.c.l.b16 %v469
    %v745 = vunpack.c.h.b16 %v469
    %v746 = vunpack.c.l.b16 %v470
    %v747 = vunpack.c.h.b16 %v470
    %v748 = vunpack.c.l.b16 %v471
    %v749 = vunpack.c.h.b16 %v471
    %v750 = vunpack.c.l.b16 %v472
    %v751 = vunpack.c.h.b16 %v472
    %v752 = vunpack.c.l.b16 %v473
    %v753 = vunpack.c.h.b16 %v473
    %v754 = vunpack.c.l.b16 %v474
    %v755 = vunpack.c.h.b16 %v474
    %v756 = vunpack.c.l.b16 %v475
    %v757 = vunpack.c.h.b16 %v475
    %v758 = vunpack.c.l.b16 %v476
    %v759 = vunpack.c.h.b16 %v476
    %v760 = vunpack.c.l.b16 %v477
    %v761 = vunpack.c.h.b16 %v477
    %v762 = vunpack.c.l.b16 %v478
    %v763 = vunpack.c.h.b16 %v478
    %v764 = vunpack.c.l.b16 %v479
    %v765 = vunpack.c.h.b16 %v479
    %v766 = vunpack.c.l.b16 %v480
    %v767 = vunpack.c.h.b16 %v480
    %v768 = vunpack.c.l.b16 %v481
    %v769 = vunpack.c.h.b16 %v481
    %v770 = vunpack.c.l.b16 %v482
    %v771 = vunpack.c.h.b16 %v482
    %v772 = vunpack.c.l.b16 %v483
    %v773 = vunpack.c.h.b16 %v483
    %v774 = vunpack.c.l.b16 %v484
    %v775 = vunpack.c.h.b16 %v484
    %v776 = vunpack.c.l.b16 %v485
    %v777 = vunpack.c.h.b16 %v485
    %v778 = vunpack.c.l.b16 %v486
    %v779 = vunpack.c.h.b16 %v486
    %v780 = vunpack.c.l.b16 %v487
    %v781 = vunpack.c.h.b16 %v487
    %v782 = vunpack.c.l.b16 %v488
    %v783 = vunpack.c.h.b16 %v488
    %v784 = vunpack.c.l.b16 %v489
    %v785 = vunpack.c.h.b16 %v489
    %v786 = vunpack.c.l.b16 %v490
    %v787 = vunpack.c.h.b16 %v490
    %v788 = vunpack.c.l.b16 %v491
    %v789 = vunpack.c.h.b16 %v491
    %v790 = vunpack.c.l.b16 %v492
    %v791 = vunpack.c.h.b16 %v492
    %v792 = vunpack.c.l.b16 %v493
    %v793 = vunpack.c.h.b16 %v493
    %v794 = vunpack.c.l.b16 %v494
    %v795 = vunpack.c.h.b16 %v494
    %v796 = vunpack.c.l.b16 %v495
    %v797 = vunpack.c.h.b16 %v495
    %v798 = vunpack.c.l.b16 %v496
    %v799 = vunpack.c.h.b16 %v496
    %v800 = vunpack.c.l.b16 %v497
    %v801 = vunpack.c.h.b16 %v497
    %v802 = vunpack.c.l.b16 %v498
    %v803 = vunpack.c.h.b16 %v498
    %v804 = vunpack.c.l.b16 %v499
    %v805 = vunpack.c.h.b16 %v499
    %v806 = vunpack.c.l.b16 %v500
    %v807 = vunpack.c.h.b16 %v500
    %v808 = vunpack.c.l.b16 %v501
    %v809 = vunpack.c.h.b16 %v501
    %v810 = vunpack.c.l.b16 %v502
    %v811 = vunpack.c.h.b16 %v502
    %v812 = vunpack.c.l.b16 %v503
    %v813 = vunpack.c.h.b16 %v503
    %v814 = vpack.c.b16 %v626, %v622
    %v815 = vpack.c.b16 %v627, %v623
    %v816 = vpack.c.b16 %v628, %v624
    %v817 = vpack.c.b16 %v629, %v625
    %v818 = vpack.c.b16 %v634, %v630
    %v819 = vpack.c.b16 %v635, %v631
    %v820 = vpack.c.b16 %v636, %v632
    %v821 = vpack.c.b16 %v637, %v633
    %v822 = vpack.c.b16 %v642, %v638
    %v823 = vpack.c.b16 %v643, %v639
    %v824 = vpack.c.b16 %v644, %v640
    %v825 = vpack.c.b16 %v645, %v641
    %v826 = vpack.c.b16 %v650, %v646
    %v827 = vpack.c.b16 %v651, %v647
    %v828 = vpack.c.b16 %v652, %v648
    %v829 = vpack.c.b16 %v653, %v649
    %v830 = vpack.c.b16 %v658, %v654
    %v831 = vpack.c.b16 %v659, %v655
    %v832 = vpack.c.b16 %v660, %v656
    %v833 = vpack.c.b16 %v661, %v657
    %v834 = vpack.c.b16 %v666, %v662
    %v835 = vpack.c.b16 %v667, %v663
    %v836 = vpack.c.b16 %v668, %v664
    %v837 = vpack.c.b16 %v669, %v665
    %v838 = vpack.c.b16 %v674, %v670
    %v839 = vpack.c.b16 %v675, %v671
    %v840 = vpack.c.b16 %v676, %v672
    %v841 = vpack.c.b16 %v677, %v673
    %v842 = vpack.c.b16 %v682, %v678
    %v843 = vpack.c.b16 %v683, %v679
    %v844 = vpack.c.b16 %v684, %v680
    %v845 = vpack.c.b16 %v685, %v681
    %v846 = vpack.c.b16 %v690, %v686
    %v847 = vpack.c.b16 %v691, %v687
    %v848 = vpack.c.b16 %v692, %v688
    %v849 = vpack.c.b16 %v693, %v689
    %v850 = vpack.c.b16 %v698, %v694
    %v851 = vpack.c.b16 %v699, %v695
    %v852 = vpack.c.b16 %v700, %v696
    %v853 = vpack.c.b16 %v701, %v697
    %v854 = vpack.c.b16 %v706, %v702
    %v855 = vpack.c.b16 %v707, %v703
    %v856 = vpack.c.b16 %v708, %v704
    %v857 = vpack.c.b16 %v709, %v705
    %v858 = vpack.c.b16 %v714, %v710
    %v859 = vpack.c.b16 %v715, %v711
    %v860 = vpack.c.b16 %v716, %v712
    %v861 = vpack.c.b16 %v717, %v713
    %v862 = vpack.c.b16 %v722, %v718
    %v863 = vpack.c.b16 %v723, %v719
    %v864 = vpack.c.b16 %v724, %v720
    %v865 = vpack.c.b16 %v725, %v721
    %v866 = vpack.c.b16 %v730, %v726
    %v867 = vpack.c.b16 %v731, %v727
    %v868 = vpack.c.b16 %v732, %v728
    %v869 = vpack.c.b16 %v733, %v729
    %v870 = vpack.c.b16 %v738, %v734
    %v871 = vpack.c.b16 %v739, %v735
    %v872 = vpack.c.b16 %v740, %v736
    %v873 = vpack.c.b16 %v741, %v737
    %v874 = vpack.c.b16 %v746, %v742
    %v875 = vpack.c.b16 %v747, %v743
    %v876 = vpack.c.b16 %v748, %v744
    %v877 = vpack.c.b16 %v749, %v745
    %v878 = vpack.c.b16 %v754, %v750
    %v879 = vpack.c.b16 %v755, %v751
    %v880 = vpack.c.b16 %v756, %v752
    %v881 = vpack.c.b16 %v757, %v753
    %v882 = vpack.c.b16 %v762, %v758
    %v883 = vpack.c.b16 %v763, %v759
    %v884 = vpack.c.b16 %v764, %v760
    %v885 = vpack.c.b16 %v765, %v761
    %v886 = vpack.c.b16 %v770, %v766
    %v887 = vpack.c.b16 %v771, %v767
    %v888 = vpack.c.b16 %v772, %v768
    %v889 = vpack.c.b16 %v773, %v769
    %v890 = vpack.c.b16 %v778, %v774
    %v891 = vpack.c.b16 %v779, %v775
    %v892 = vpack.c.b16 %v780, %v776
    %v893 = vpack.c.b16 %v781, %v777
    %v894 = vpack.c.b16 %v786, %v782
    %v895 = vpack.c.b16 %v787, %v783
    %v896 = vpack.c.b16 %v788, %v784
    %v897 = vpack.c.b16 %v789, %v785
    %v898 = vpack.c.b16 %v794, %v790
    %v899 = vpack.c.b16 %v795, %v791
    %v900 = vpack.c.b16 %v796, %v792
    %v901 = vpack.c.b16 %v797, %v793
    %v902 = vpack.c.b16 %v802, %v798
    %v903 = vpack.c.b16 %v803, %v799
    %v904 = vpack.c.b16 %v804, %v800
    %v905 = vpack.c.b16 %v805, %v801
    %v906 = vpack.c.b16 %v810, %v806
    %v907 = vpack.c.b16 %v811, %v807
    %v908 = vpack.c.b16 %v812, %v808
    %v909 = vpack.c.b16 %v813, %v809
    %1006 = vmatprep.subr.bf16.mxu0 %v843
    %1007 = vmatpush1.bf16.msra.mxu0 %v842
    %1008 = vmatprep.subr.bf16.mxu0 %v839
    %1009 = vmatpush1.bf16.msra.mxu0 %v838
    %1010 = vmatprep.subr.bf16.mxu0 %v835
    %1011 = vmatpush1.bf16.msra.mxu0 %v834
    %1012 = vmatprep.subr.bf16.mxu0 %v831
    %1013 = vmatpush1.bf16.msra.mxu0 %v830
    %1014 = vmatprep.subr.bf16.mxu0 %v827
    %1015 = vmatpush1.bf16.msra.mxu0 %v826
    %1016 = vmatprep.subr.bf16.mxu0 %v823
    %1017 = vmatpush1.bf16.msra.mxu0 %v822
    %1018 = vmatprep.subr.bf16.mxu0 %v819
    %1019 = vmatpush1.bf16.msra.mxu0 %v818
    %1020 = vmatprep.subr.bf16.mxu0 %v815
    %1021 = vmatpush1.bf16.msra.mxu0 %v814
    %1022 = vmatprep.subr.bf16.mxu0 %v875
    %1023 = vmatpush2.bf16.msra.mxu0 %v874
    %1024 = vmatprep.subr.bf16.mxu0 %v871
    %1025 = vmatpush2.bf16.msra.mxu0 %v870
    %1026 = vmatprep.subr.bf16.mxu0 %v867
    %1027 = vmatpush2.bf16.msra.mxu0 %v866
    %1028 = vmatprep.subr.bf16.mxu0 %v863
    %1029 = vmatpush2.bf16.msra.mxu0 %v862
    %1030 = vmatprep.subr.bf16.mxu0 %v859
    %1031 = vmatpush2.bf16.msra.mxu0 %v858
    %1032 = vmatprep.subr.bf16.mxu0 %v855
    %1033 = vmatpush2.bf16.msra.mxu0 %v854
    %1034 = vmatprep.subr.bf16.mxu0 %v851
    %1035 = vmatpush2.bf16.msra.mxu0 %v850
    %1036 = vmatprep.subr.bf16.mxu0 %v847
    %1037 = vmatpush2.bf16.msra.mxu0 %v846
    %1038 = vmatprep.mubr.bf16.mxu0 %v406
    %1039 = vmatmul.mubr.bf16.gmra.mxu0 %v405
    %v1040 = vpop.f32.mrf.mxu0
    %v1041 = vadd.f32 %v509, %v1040
    %v1042 = vpop.f32.mrf.mxu0
    %v1043 = vadd.f32 %v513, %v1042
    %v1044 = vpop.f32.mrf.mxu0
    %v1045 = vpop.f32.mrf.mxu0
    %1046 = vdwg.mxu0
    %1047 = vmatprep.subr.bf16.mxu0 %v907
    %1048 = vmatpush1.bf16.msra.mxu0 %v906
    %1049 = vmatprep.subr.bf16.mxu0 %v903
    %1050 = vmatpush1.bf16.msra.mxu0 %v902
    %1051 = vmatprep.subr.bf16.mxu0 %v899
    %1052 = vmatpush1.bf16.msra.mxu0 %v898
    %1053 = vmatprep.subr.bf16.mxu0 %v895
    %1054 = vmatpush1.bf16.msra.mxu0 %v894
    %1055 = vmatprep.subr.bf16.mxu0 %v891
    %1056 = vmatpush1.bf16.msra.mxu0 %v890
    %1057 = vmatprep.subr.bf16.mxu0 %v887
    %1058 = vmatpush1.bf16.msra.mxu0 %v886
    %1059 = vmatprep.subr.bf16.mxu0 %v883
    %1060 = vmatpush1.bf16.msra.mxu0 %v882
    %1061 = vmatprep.subr.bf16.mxu0 %v879
    %1062 = vmatpush1.bf16.msra.mxu0 %v878
    %1063 = vmatprep.subr.bf16.mxu0 0
    %1064 = vmatpush2.bf16.msra.mxu0 0
    %1065 = vmatprep.subr.bf16.mxu0 0
    %1066 = vmatpush2.bf16.msra.mxu0 0
    %1067 = vmatprep.subr.bf16.mxu0 0
    %1068 = vmatpush2.bf16.msra.mxu0 0
    %1069 = vmatprep.subr.bf16.mxu0 0
    %1070 = vmatpush2.bf16.msra.mxu0 0
    %1071 = vmatprep.subr.bf16.mxu0 0
    %1072 = vmatpush2.bf16.msra.mxu0 0
    %1073 = vmatprep.subr.bf16.mxu0 0
    %1074 = vmatpush2.bf16.msra.mxu0 0
    %1075 = vmatprep.subr.bf16.mxu0 0
    %1076 = vmatpush2.bf16.msra.mxu0 0
    %1077 = vmatprep.subr.bf16.mxu0 0
    %1078 = vmatpush2.bf16.msra.mxu0 0
    %1079 = vmatprep.mubr.bf16.mxu0 0
    %1080 = vmatmul.mubr.bf16.gmra.mxu0 %v407
    %v1081 = vpop.f32.mrf.mxu0
    %v1082 = vadd.f32 %v1041, %v1081
    %v1083 = vpop.f32.mrf.mxu0
    %v1084 = vadd.f32 %v1043, %v1083
    %v1085 = vpop.f32.mrf.mxu0
    %v1086 = vpop.f32.mrf.mxu0
    %1087 = vdwg.mxu0
    %1088 = vmatprep.subr.bf16.mxu0 %v845
    %1089 = vmatpush1.bf16.msra.mxu0 %v844
    %1090 = vmatprep.subr.bf16.mxu0 %v841
    %1091 = vmatpush1.bf16.msra.mxu0 %v840
    %1092 = vmatprep.subr.bf16.mxu0 %v837
    %1093 = vmatpush1.bf16.msra.mxu0 %v836
    %1094 = vmatprep.subr.bf16.mxu0 %v833
    %1095 = vmatpush1.bf16.msra.mxu0 %v832
    %1096 = vmatprep.subr.bf16.mxu0 %v829
    %1097 = vmatpush1.bf16.msra.mxu0 %v828
    %1098 = vmatprep.subr.bf16.mxu0 %v825
    %1099 = vmatpush1.bf16.msra.mxu0 %v824
    %1100 = vmatprep.subr.bf16.mxu0 %v821
    %1101 = vmatpush1.bf16.msra.mxu0 %v820
    %1102 = vmatprep.subr.bf16.mxu0 %v817
    %1103 = vmatpush1.bf16.msra.mxu0 %v816
    %1104 = vmatprep.subr.bf16.mxu0 %v877
    %1105 = vmatpush2.bf16.msra.mxu0 %v876
    %1106 = vmatprep.subr.bf16.mxu0 %v873
    %1107 = vmatpush2.bf16.msra.mxu0 %v872
    %1108 = vmatprep.subr.bf16.mxu0 %v869
    %1109 = vmatpush2.bf16.msra.mxu0 %v868
    %1110 = vmatprep.subr.bf16.mxu0 %v865
    %1111 = vmatpush2.bf16.msra.mxu0 %v864
    %1112 = vmatprep.subr.bf16.mxu0 %v861
    %1113 = vmatpush2.bf16.msra.mxu0 %v860
    %1114 = vmatprep.subr.bf16.mxu0 %v857
    %1115 = vmatpush2.bf16.msra.mxu0 %v856
    %1116 = vmatprep.subr.bf16.mxu0 %v853
    %1117 = vmatpush2.bf16.msra.mxu0 %v852
    %1118 = vmatprep.subr.bf16.mxu0 %v849
    %1119 = vmatpush2.bf16.msra.mxu0 %v848
    %1120 = vmatprep.mubr.bf16.mxu0 %v406
    %1121 = vmatmul.mubr.bf16.gmra.mxu0 %v405
    %v1122 = vpop.f32.mrf.mxu0
    %v1123 = vadd.f32 %v517, %v1122
    %v1124 = vpop.f32.mrf.mxu0
    %v1125 = vadd.f32 %v521, %v1124
    %v1126 = vpop.f32.mrf.mxu0
    %v1127 = vpop.f32.mrf.mxu0
    %1128 = vdwg.mxu0
    %1129 = vmatprep.subr.bf16.mxu0 %v909
    %1130 = vmatpush1.bf16.msra.mxu0 %v908
    %1131 = vmatprep.subr.bf16.mxu0 %v905
    %1132 = vmatpush1.bf16.msra.mxu0 %v904
    %1133 = vmatprep.subr.bf16.mxu0 %v901
    %1134 = vmatpush1.bf16.msra.mxu0 %v900
    %1135 = vmatprep.subr.bf16.mxu0 %v897
    %1136 = vmatpush1.bf16.msra.mxu0 %v896
    %1137 = vmatprep.subr.bf16.mxu0 %v893
    %1138 = vmatpush1.bf16.msra.mxu0 %v892
    %1139 = vmatprep.subr.bf16.mxu0 %v889
    %1140 = vmatpush1.bf16.msra.mxu0 %v888
    %1141 = vmatprep.subr.bf16.mxu0 %v885
    %1142 = vmatpush1.bf16.msra.mxu0 %v884
    %1143 = vmatprep.subr.bf16.mxu0 %v881
    %1144 = vmatpush1.bf16.msra.mxu0 %v880
    %1145 = vmatprep.subr.bf16.mxu0 0
    %1146 = vmatpush2.bf16.msra.mxu0 0
    %1147 = vmatprep.subr.bf16.mxu0 0
    %1148 = vmatpush2.bf16.msra.mxu0 0
    %1149 = vmatprep.subr.bf16.mxu0 0
    %1150 = vmatpush2.bf16.msra.mxu0 0
    %1151 = vmatprep.subr.bf16.mxu0 0
    %1152 = vmatpush2.bf16.msra.mxu0 0
    %1153 = vmatprep.subr.bf16.mxu0 0
    %1154 = vmatpush2.bf16.msra.mxu0 0
    %1155 = vmatprep.subr.bf16.mxu0 0
    %1156 = vmatpush2.bf16.msra.mxu0 0
    %1157 = vmatprep.subr.bf16.mxu0 0
    %1158 = vmatpush2.bf16.msra.mxu0 0
    %1159 = vmatprep.subr.bf16.mxu0 0
    %1160 = vmatpush2.bf16.msra.mxu0 0
    %1161 = vmatprep.mubr.bf16.mxu0 0
    %1162 = vmatmul.mubr.bf16.gmra.mxu0 %v407
    %v1163 = vpop.f32.mrf.mxu0
    %v1164 = vadd.f32 %v1123, %v1163
    %v1165 = vpop.f32.mrf.mxu0
    %v1166 = vadd.f32 %v1125, %v1165
    %v1167 = vpop.f32.mrf.mxu0
    %v1168 = vpop.f32.mrf.mxu0
    %1169 = vdwg.mxu0
    %v1170 = vmax.f32 %v1082, 0.0
    %v1171 = vmax.f32 %v1084, 0.0
    %v1172 = vmax.f32 %v1164, 0.0
    %v1173 = vmax.f32 %v1166, 0.0
    %v1174 = vld [vmem:[#allocation13] sm:$0xf]
    %v1176 = vlaneseq
    %v1177 = vshrl.u32 %v1176, 7
    %v1178 = vsub.s32 0, %v1177
    %v1179 = vrot.slane %v1174, %v1178
    %v1180 = vlaneseq
    %v1181 = vshrl.u32 %v1180, 7
    %v1182 = vsub.s32 1, %v1181
    %v1183 = vrot.slane %v1174, %v1182
    %v1184 = vlaneseq
    %v1185 = vshrl.u32 %v1184, 7
    %v1186 = vsub.s32 2, %v1185
    %v1187 = vrot.slane %v1174, %v1186
    %v1188 = vlaneseq
    %v1189 = vshrl.u32 %v1188, 7
    %v1190 = vsub.s32 3, %v1189
    %v1191 = vrot.slane %v1174, %v1190
    %v1196 = vmul.f32 %v1170, %v1179
    %v1197 = vmul.f32 %v1171, %v1183
    %v1198 = vmul.f32 %v1172, %v1187
    %v1199 = vmul.f32 %v1173, %v1191
    %v1200 = vadd.f32 %v1196, %v1197
    %v1201 = vadd.f32 %v1200, %v1198
    %v1202 = vadd.f32 %v1201, %v1199
    %1203 = vadd.xlane.f32.xlu0 %v1202
    %v1204 = vpop.xlane.xlu0 %1203
    %v1205 = vadd.f32 %v1204, 0.0
    %v1206 = vld [vmem:[#allocation10 + $0x10] sm:$0xff]
    %v1207 = vld [vmem:[#allocation10 + $0x18] sm:$0xff]
    %v1208 = vld [vmem:[#allocation10 + $0x70] sm:$0xff]
    %v1209 = vld [vmem:[#allocation10 + $0x78] sm:$0xff]
    %v1210 = vld [vmem:[#allocation10 + $0xd0] sm:$0xff]
    %v1211 = vld [vmem:[#allocation10 + $0xd8] sm:$0xff]
    %v1212 = vld [vmem:[#allocation10 + $0x130] sm:$0xff]
    %v1213 = vld [vmem:[#allocation10 + $0x138] sm:$0xff]
    %v1214 = vld [vmem:[#allocation10 + $0x190] sm:$0xff]
    %v1215 = vld [vmem:[#allocation10 + $0x198] sm:$0xff]
    %v1216 = vld [vmem:[#allocation10 + $0x1f0] sm:$0xff]
    %v1217 = vld [vmem:[#allocation10 + $0x1f8] sm:$0xff]
    %v1218 = vld [vmem:[#allocation10 + $0x250] sm:$0xff]
    %v1219 = vld [vmem:[#allocation10 + $0x258] sm:$0xff]
    %v1220 = vld [vmem:[#allocation10 + $0x2b0] sm:$0xff]
    %v1221 = vld [vmem:[#allocation10 + $0x2b8] sm:$0xff]
    %v1222 = vld [vmem:[#allocation10 + $0x310] sm:$0xff]
    %v1223 = vld [vmem:[#allocation10 + $0x318] sm:$0xff]
    %v1224 = vld [vmem:[#allocation10 + $0x370] sm:$0xff]
    %v1225 = vld [vmem:[#allocation10 + $0x378] sm:$0xff]
    %v1226 = vld [vmem:[#allocation10 + $0x3d0] sm:$0xff]
    %v1227 = vld [vmem:[#allocation10 + $0x3d8] sm:$0xff]
    %v1228 = vld [vmem:[#allocation10 + $0x430] sm:$0xff]
    %v1229 = vld [vmem:[#allocation10 + $0x438] sm:$0xff]
    %v1230 = vld [vmem:[#allocation10 + $0x490] sm:$0xff]
    %v1231 = vld [vmem:[#allocation10 + $0x498] sm:$0xff]
    %v1232 = vld [vmem:[#allocation10 + $0x4f0] sm:$0xff]
    %v1233 = vld [vmem:[#allocation10 + $0x4f8] sm:$0xff]
    %v1234 = vld [vmem:[#allocation10 + $0x550] sm:$0xff]
    %v1235 = vld [vmem:[#allocation10 + $0x558] sm:$0xff]
    %v1236 = vld [vmem:[#allocation10 + $0x5b0] sm:$0xff]
    %v1237 = vld [vmem:[#allocation10 + $0x5b8] sm:$0xff]
    %v1238 = vld [vmem:[#allocation10 + $0x610] sm:$0xff]
    %v1239 = vld [vmem:[#allocation10 + $0x618] sm:$0xff]
    %v1240 = vld [vmem:[#allocation10 + $0x670] sm:$0xff]
    %v1241 = vld [vmem:[#allocation10 + $0x678] sm:$0xff]
    %v1242 = vld [vmem:[#allocation10 + $0x6d0] sm:$0xff]
    %v1243 = vld [vmem:[#allocation10 + $0x6d8] sm:$0xff]
    %v1244 = vld [vmem:[#allocation10 + $0x730] sm:$0xff]
    %v1245 = vld [vmem:[#allocation10 + $0x738] sm:$0xff]
    %v1246 = vld [vmem:[#allocation10 + $0x790] sm:$0xff]
    %v1247 = vld [vmem:[#allocation10 + $0x798] sm:$0xff]
    %v1248 = vld [vmem:[#allocation10 + $0x7f0] sm:$0xff]
    %v1249 = vld [vmem:[#allocation10 + $0x7f8] sm:$0xff]
    %v1250 = vld [vmem:[#allocation10 + $0x850] sm:$0xff]
    %v1251 = vld [vmem:[#allocation10 + $0x858] sm:$0xff]
    %v1252 = vld [vmem:[#allocation10 + $0x8b0] sm:$0xff]
    %v1253 = vld [vmem:[#allocation10 + $0x8b8] sm:$0xff]
    %v1254 = vld [vmem:[#allocation10 + $0x910] sm:$0xff]
    %v1255 = vld [vmem:[#allocation10 + $0x918] sm:$0xff]
    %v1256 = vld [vmem:[#allocation10 + $0x970] sm:$0xff]
    %v1257 = vld [vmem:[#allocation10 + $0x978] sm:$0xff]
    %v1258 = vld [vmem:[#allocation10 + $0x9d0] sm:$0xff]
    %v1259 = vld [vmem:[#allocation10 + $0x9d8] sm:$0xff]
    %v1260 = vld [vmem:[#allocation10 + $0xa30] sm:$0xff]
    %v1261 = vld [vmem:[#allocation10 + $0xa38] sm:$0xff]
    %v1262 = vld [vmem:[#allocation10 + $0xa90] sm:$0xff]
    %v1263 = vld [vmem:[#allocation10 + $0xa98] sm:$0xff]
    %v1264 = vld [vmem:[#allocation10 + $0xaf0] sm:$0xff]
    %v1265 = vld [vmem:[#allocation10 + $0xaf8] sm:$0xff]
    %v1266 = vld [vmem:[#allocation10 + $0xb50] sm:$0xff]
    %v1267 = vld [vmem:[#allocation10 + $0xb58] sm:$0xff]
    %v1268 = vld [vmem:[#allocation10 + $0xbb0] sm:$0xff]
    %v1269 = vld [vmem:[#allocation10 + $0xbb8] sm:$0xff]
    %v1270 = vld [vmem:[#allocation10 + $0xc10] sm:$0xff]
    %v1271 = vld [vmem:[#allocation10 + $0xc18] sm:$0xff]
    %v1272 = vld [vmem:[#allocation10 + $0xc70] sm:$0xff]
    %v1273 = vld [vmem:[#allocation10 + $0xc78] sm:$0xff]
    %v1274 = vld [vmem:[#allocation10 + $0xcd0] sm:$0xff]
    %v1275 = vld [vmem:[#allocation10 + $0xcd8] sm:$0xff]
    %v1276 = vld [vmem:[#allocation10 + $0xd30] sm:$0xff]
    %v1277 = vld [vmem:[#allocation10 + $0xd38] sm:$0xff]
    %v1278 = vld [vmem:[#allocation10 + $0xd90] sm:$0xff]
    %v1279 = vld [vmem:[#allocation10 + $0xd98] sm:$0xff]
    %v1280 = vld [vmem:[#allocation10 + $0xdf0] sm:$0xff]
    %v1281 = vld [vmem:[#allocation10 + $0xdf8] sm:$0xff]
    %v1282 = vld [vmem:[#allocation10 + $0xe50] sm:$0xff]
    %v1283 = vld [vmem:[#allocation10 + $0xe58] sm:$0xff]
    %v1284 = vld [vmem:[#allocation10 + $0xeb0] sm:$0xff]
    %v1285 = vld [vmem:[#allocation10 + $0xeb8] sm:$0xff]
    %v1286 = vld [vmem:[#allocation10 + $0xf10] sm:$0xff]
    %v1287 = vld [vmem:[#allocation10 + $0xf18] sm:$0xff]
    %v1288 = vld [vmem:[#allocation10 + $0xf70] sm:$0xff]
    %v1289 = vld [vmem:[#allocation10 + $0xf78] sm:$0xff]
    %v1290 = vld [vmem:[#allocation10 + $0xfd0] sm:$0xff]
    %v1291 = vld [vmem:[#allocation10 + $0xfd8] sm:$0xff]
    %v1292 = vld [vmem:[#allocation10 + $0x1030] sm:$0xff]
    %v1293 = vld [vmem:[#allocation10 + $0x1038] sm:$0xff]
    %v1294 = vld [vmem:[#allocation10 + $0x1090] sm:$0xff]
    %v1295 = vld [vmem:[#allocation10 + $0x1098] sm:$0xff]
    %v1296 = vld [vmem:[#allocation10 + $0x10f0] sm:$0xff]
    %v1297 = vld [vmem:[#allocation10 + $0x10f8] sm:$0xff]
    %v1298 = vld [vmem:[#allocation10 + $0x1150] sm:$0xff]
    %v1299 = vld [vmem:[#allocation10 + $0x1158] sm:$0xff]
    %v1300 = vld [vmem:[#allocation10 + $0x11b0] sm:$0xff]
    %v1301 = vld [vmem:[#allocation10 + $0x11b8] sm:$0xff]
    %v1302 = vld [vmem:[#allocation11 + $0x4] sm:$0xf]
    %v1304 = vlaneseq
    %v1305 = vshrl.u32 %v1304, 7
    %v1306 = vsub.s32 0, %v1305
    %v1307 = vrot.slane %v1302, %v1306
    %v1308 = vlaneseq
    %v1309 = vshrl.u32 %v1308, 7
    %v1310 = vsub.s32 1, %v1309
    %v1311 = vrot.slane %v1302, %v1310
    %v1312 = vlaneseq
    %v1313 = vshrl.u32 %v1312, 7
    %v1314 = vsub.s32 2, %v1313
    %v1315 = vrot.slane %v1302, %v1314
    %v1316 = vlaneseq
    %v1317 = vshrl.u32 %v1316, 7
    %v1318 = vsub.s32 3, %v1317
    %v1319 = vrot.slane %v1302, %v1318
    %v1420 = vunpack.c.l.b16 %v1206
    %v1421 = vunpack.c.h.b16 %v1206
    %v1422 = vunpack.c.l.b16 %v1207
    %v1423 = vunpack.c.h.b16 %v1207
    %v1424 = vunpack.c.l.b16 %v1208
    %v1425 = vunpack.c.h.b16 %v1208
    %v1426 = vunpack.c.l.b16 %v1209
    %v1427 = vunpack.c.h.b16 %v1209
    %v1428 = vunpack.c.l.b16 %v1210
    %v1429 = vunpack.c.h.b16 %v1210
    %v1430 = vunpack.c.l.b16 %v1211
    %v1431 = vunpack.c.h.b16 %v1211
    %v1432 = vunpack.c.l.b16 %v1212
    %v1433 = vunpack.c.h.b16 %v1212
    %v1434 = vunpack.c.l.b16 %v1213
    %v1435 = vunpack.c.h.b16 %v1213
    %v1436 = vunpack.c.l.b16 %v1214
    %v1437 = vunpack.c.h.b16 %v1214
    %v1438 = vunpack.c.l.b16 %v1215
    %v1439 = vunpack.c.h.b16 %v1215
    %v1440 = vunpack.c.l.b16 %v1216
    %v1441 = vunpack.c.h.b16 %v1216
    %v1442 = vunpack.c.l.b16 %v1217
    %v1443 = vunpack.c.h.b16 %v1217
    %v1444 = vunpack.c.l.b16 %v1218
    %v1445 = vunpack.c.h.b16 %v1218
    %v1446 = vunpack.c.l.b16 %v1219
    %v1447 = vunpack.c.h.b16 %v1219
    %v1448 = vunpack.c.l.b16 %v1220
    %v1449 = vunpack.c.h.b16 %v1220
    %v1450 = vunpack.c.l.b16 %v1221
    %v1451 = vunpack.c.h.b16 %v1221
    %v1452 = vunpack.c.l.b16 %v1222
    %v1453 = vunpack.c.h.b16 %v1222
    %v1454 = vunpack.c.l.b16 %v1223
    %v1455 = vunpack.c.h.b16 %v1223
    %v1456 = vunpack.c.l.b16 %v1224
    %v1457 = vunpack.c.h.b16 %v1224
    %v1458 = vunpack.c.l.b16 %v1225
    %v1459 = vunpack.c.h.b16 %v1225
    %v1460 = vunpack.c.l.b16 %v1226
    %v1461 = vunpack.c.h.b16 %v1226
    %v1462 = vunpack.c.l.b16 %v1227
    %v1463 = vunpack.c.h.b16 %v1227
    %v1464 = vunpack.c.l.b16 %v1228
    %v1465 = vunpack.c.h.b16 %v1228
    %v1466 = vunpack.c.l.b16 %v1229
    %v1467 = vunpack.c.h.b16 %v1229
    %v1468 = vunpack.c.l.b16 %v1230
    %v1469 = vunpack.c.h.b16 %v1230
    %v1470 = vunpack.c.l.b16 %v1231
    %v1471 = vunpack.c.h.b16 %v1231
    %v1472 = vunpack.c.l.b16 %v1232
    %v1473 = vunpack.c.h.b16 %v1232
    %v1474 = vunpack.c.l.b16 %v1233
    %v1475 = vunpack.c.h.b16 %v1233
    %v1476 = vunpack.c.l.b16 %v1234
    %v1477 = vunpack.c.h.b16 %v1234
    %v1478 = vunpack.c.l.b16 %v1235
    %v1479 = vunpack.c.h.b16 %v1235
    %v1480 = vunpack.c.l.b16 %v1236
    %v1481 = vunpack.c.h.b16 %v1236
    %v1482 = vunpack.c.l.b16 %v1237
    %v1483 = vunpack.c.h.b16 %v1237
    %v1484 = vunpack.c.l.b16 %v1238
    %v1485 = vunpack.c.h.b16 %v1238
    %v1486 = vunpack.c.l.b16 %v1239
    %v1487 = vunpack.c.h.b16 %v1239
    %v1488 = vunpack.c.l.b16 %v1240
    %v1489 = vunpack.c.h.b16 %v1240
    %v1490 = vunpack.c.l.b16 %v1241
    %v1491 = vunpack.c.h.b16 %v1241
    %v1492 = vunpack.c.l.b16 %v1242
    %v1493 = vunpack.c.h.b16 %v1242
    %v1494 = vunpack.c.l.b16 %v1243
    %v1495 = vunpack.c.h.b16 %v1243
    %v1496 = vunpack.c.l.b16 %v1244
    %v1497 = vunpack.c.h.b16 %v1244
    %v1498 = vunpack.c.l.b16 %v1245
    %v1499 = vunpack.c.h.b16 %v1245
    %v1500 = vunpack.c.l.b16 %v1246
    %v1501 = vunpack.c.h.b16 %v1246
    %v1502 = vunpack.c.l.b16 %v1247
    %v1503 = vunpack.c.h.b16 %v1247
    %v1504 = vunpack.c.l.b16 %v1248
    %v1505 = vunpack.c.h.b16 %v1248
    %v1506 = vunpack.c.l.b16 %v1249
    %v1507 = vunpack.c.h.b16 %v1249
    %v1508 = vunpack.c.l.b16 %v1250
    %v1509 = vunpack.c.h.b16 %v1250
    %v1510 = vunpack.c.l.b16 %v1251
    %v1511 = vunpack.c.h.b16 %v1251
    %v1512 = vunpack.c.l.b16 %v1252
    %v1513 = vunpack.c.h.b16 %v1252
    %v1514 = vunpack.c.l.b16 %v1253
    %v1515 = vunpack.c.h.b16 %v1253
    %v1516 = vunpack.c.l.b16 %v1254
    %v1517 = vunpack.c.h.b16 %v1254
    %v1518 = vunpack.c.l.b16 %v1255
    %v1519 = vunpack.c.h.b16 %v1255
    %v1520 = vunpack.c.l.b16 %v1256
    %v1521 = vunpack.c.h.b16 %v1256
    %v1522 = vunpack.c.l.b16 %v1257
    %v1523 = vunpack.c.h.b16 %v1257
    %v1524 = vunpack.c.l.b16 %v1258
    %v1525 = vunpack.c.h.b16 %v1258
    %v1526 = vunpack.c.l.b16 %v1259
    %v1527 = vunpack.c.h.b16 %v1259
    %v1528 = vunpack.c.l.b16 %v1260
    %v1529 = vunpack.c.h.b16 %v1260
    %v1530 = vunpack.c.l.b16 %v1261
    %v1531 = vunpack.c.h.b16 %v1261
    %v1532 = vunpack.c.l.b16 %v1262
    %v1533 = vunpack.c.h.b16 %v1262
    %v1534 = vunpack.c.l.b16 %v1263
    %v1535 = vunpack.c.h.b16 %v1263
    %v1536 = vunpack.c.l.b16 %v1264
    %v1537 = vunpack.c.h.b16 %v1264
    %v1538 = vunpack.c.l.b16 %v1265
    %v1539 = vunpack.c.h.b16 %v1265
    %v1540 = vunpack.c.l.b16 %v1266
    %v1541 = vunpack.c.h.b16 %v1266
    %v1542 = vunpack.c.l.b16 %v1267
    %v1543 = vunpack.c.h.b16 %v1267
    %v1544 = vunpack.c.l.b16 %v1268
    %v1545 = vunpack.c.h.b16 %v1268
    %v1546 = vunpack.c.l.b16 %v1269
    %v1547 = vunpack.c.h.b16 %v1269
    %v1548 = vunpack.c.l.b16 %v1270
    %v1549 = vunpack.c.h.b16 %v1270
    %v1550 = vunpack.c.l.b16 %v1271
    %v1551 = vunpack.c.h.b16 %v1271
    %v1552 = vunpack.c.l.b16 %v1272
    %v1553 = vunpack.c.h.b16 %v1272
    %v1554 = vunpack.c.l.b16 %v1273
    %v1555 = vunpack.c.h.b16 %v1273
    %v1556 = vunpack.c.l.b16 %v1274
    %v1557 = vunpack.c.h.b16 %v1274
    %v1558 = vunpack.c.l.b16 %v1275
    %v1559 = vunpack.c.h.b16 %v1275
    %v1560 = vunpack.c.l.b16 %v1276
    %v1561 = vunpack.c.h.b16 %v1276
    %v1562 = vunpack.c.l.b16 %v1277
    %v1563 = vunpack.c.h.b16 %v1277
    %v1564 = vunpack.c.l.b16 %v1278
    %v1565 = vunpack.c.h.b16 %v1278
    %v1566 = vunpack.c.l.b16 %v1279
    %v1567 = vunpack.c.h.b16 %v1279
    %v1568 = vunpack.c.l.b16 %v1280
    %v1569 = vunpack.c.h.b16 %v1280
    %v1570 = vunpack.c.l.b16 %v1281
    %v1571 = vunpack.c.h.b16 %v1281
    %v1572 = vunpack.c.l.b16 %v1282
    %v1573 = vunpack.c.h.b16 %v1282
    %v1574 = vunpack.c.l.b16 %v1283
    %v1575 = vunpack.c.h.b16 %v1283
    %v1576 = vunpack.c.l.b16 %v1284
    %v1577 = vunpack.c.h.b16 %v1284
    %v1578 = vunpack.c.l.b16 %v1285
    %v1579 = vunpack.c.h.b16 %v1285
    %v1580 = vunpack.c.l.b16 %v1286
    %v1581 = vunpack.c.h.b16 %v1286
    %v1582 = vunpack.c.l.b16 %v1287
    %v1583 = vunpack.c.h.b16 %v1287
    %v1584 = vunpack.c.l.b16 %v1288
    %v1585 = vunpack.c.h.b16 %v1288
    %v1586 = vunpack.c.l.b16 %v1289
    %v1587 = vunpack.c.h.b16 %v1289
    %v1588 = vunpack.c.l.b16 %v1290
    %v1589 = vunpack.c.h.b16 %v1290
    %v1590 = vunpack.c.l.b16 %v1291
    %v1591 = vunpack.c.h.b16 %v1291
    %v1592 = vunpack.c.l.b16 %v1292
    %v1593 = vunpack.c.h.b16 %v1292
    %v1594 = vunpack.c.l.b16 %v1293
    %v1595 = vunpack.c.h.b16 %v1293
    %v1596 = vunpack.c.l.b16 %v1294
    %v1597 = vunpack.c.h.b16 %v1294
    %v1598 = vunpack.c.l.b16 %v1295
    %v1599 = vunpack.c.h.b16 %v1295
    %v1600 = vunpack.c.l.b16 %v1296
    %v1601 = vunpack.c.h.b16 %v1296
    %v1602 = vunpack.c.l.b16 %v1297
    %v1603 = vunpack.c.h.b16 %v1297
    %v1604 = vunpack.c.l.b16 %v1298
    %v1605 = vunpack.c.h.b16 %v1298
    %v1606 = vunpack.c.l.b16 %v1299
    %v1607 = vunpack.c.h.b16 %v1299
    %v1608 = vunpack.c.l.b16 %v1300
    %v1609 = vunpack.c.h.b16 %v1300
    %v1610 = vunpack.c.l.b16 %v1301
    %v1611 = vunpack.c.h.b16 %v1301
    %v1612 = vpack.c.b16 %v1424, %v1420
    %v1613 = vpack.c.b16 %v1425, %v1421
    %v1614 = vpack.c.b16 %v1426, %v1422
    %v1615 = vpack.c.b16 %v1427, %v1423
    %v1616 = vpack.c.b16 %v1432, %v1428
    %v1617 = vpack.c.b16 %v1433, %v1429
    %v1618 = vpack.c.b16 %v1434, %v1430
    %v1619 = vpack.c.b16 %v1435, %v1431
    %v1620 = vpack.c.b16 %v1440, %v1436
    %v1621 = vpack.c.b16 %v1441, %v1437
    %v1622 = vpack.c.b16 %v1442, %v1438
    %v1623 = vpack.c.b16 %v1443, %v1439
    %v1624 = vpack.c.b16 %v1448, %v1444
    %v1625 = vpack.c.b16 %v1449, %v1445
    %v1626 = vpack.c.b16 %v1450, %v1446
    %v1627 = vpack.c.b16 %v1451, %v1447
    %v1628 = vpack.c.b16 %v1456, %v1452
    %v1629 = vpack.c.b16 %v1457, %v1453
    %v1630 = vpack.c.b16 %v1458, %v1454
    %v1631 = vpack.c.b16 %v1459, %v1455
    %v1632 = vpack.c.b16 %v1464, %v1460
    %v1633 = vpack.c.b16 %v1465, %v1461
    %v1634 = vpack.c.b16 %v1466, %v1462
    %v1635 = vpack.c.b16 %v1467, %v1463
    %v1636 = vpack.c.b16 %v1472, %v1468
    %v1637 = vpack.c.b16 %v1473, %v1469
    %v1638 = vpack.c.b16 %v1474, %v1470
    %v1639 = vpack.c.b16 %v1475, %v1471
    %v1640 = vpack.c.b16 %v1480, %v1476
    %v1641 = vpack.c.b16 %v1481, %v1477
    %v1642 = vpack.c.b16 %v1482, %v1478
    %v1643 = vpack.c.b16 %v1483, %v1479
    %v1644 = vpack.c.b16 %v1488, %v1484
    %v1645 = vpack.c.b16 %v1489, %v1485
    %v1646 = vpack.c.b16 %v1490, %v1486
    %v1647 = vpack.c.b16 %v1491, %v1487
    %v1648 = vpack.c.b16 %v1496, %v1492
    %v1649 = vpack.c.b16 %v1497, %v1493
    %v1650 = vpack.c.b16 %v1498, %v1494
    %v1651 = vpack.c.b16 %v1499, %v1495
    %v1652 = vpack.c.b16 %v1504, %v1500
    %v1653 = vpack.c.b16 %v1505, %v1501
    %v1654 = vpack.c.b16 %v1506, %v1502
    %v1655 = vpack.c.b16 %v1507, %v1503
    %v1656 = vpack.c.b16 %v1512, %v1508
    %v1657 = vpack.c.b16 %v1513, %v1509
    %v1658 = vpack.c.b16 %v1514, %v1510
    %v1659 = vpack.c.b16 %v1515, %v1511
    %v1660 = vpack.c.b16 %v1520, %v1516
    %v1661 = vpack.c.b16 %v1521, %v1517
    %v1662 = vpack.c.b16 %v1522, %v1518
    %v1663 = vpack.c.b16 %v1523, %v1519
    %v1664 = vpack.c.b16 %v1528, %v1524
    %v1665 = vpack.c.b16 %v1529, %v1525
    %v1666 = vpack.c.b16 %v1530, %v1526
    %v1667 = vpack.c.b16 %v1531, %v1527
    %v1668 = vpack.c.b16 %v1536, %v1532
    %v1669 = vpack.c.b16 %v1537, %v1533
    %v1670 = vpack.c.b16 %v1538, %v1534
    %v1671 = vpack.c.b16 %v1539, %v1535
    %v1672 = vpack.c.b16 %v1544, %v1540
    %v1673 = vpack.c.b16 %v1545, %v1541
    %v1674 = vpack.c.b16 %v1546, %v1542
    %v1675 = vpack.c.b16 %v1547, %v1543
    %v1676 = vpack.c.b16 %v1552, %v1548
    %v1677 = vpack.c.b16 %v1553, %v1549
    %v1678 = vpack.c.b16 %v1554, %v1550
    %v1679 = vpack.c.b16 %v1555, %v1551
    %v1680 = vpack.c.b16 %v1560, %v1556
    %v1681 = vpack.c.b16 %v1561, %v1557
    %v1682 = vpack.c.b16 %v1562, %v1558
    %v1683 = vpack.c.b16 %v1563, %v1559
    %v1684 = vpack.c.b16 %v1568, %v1564
    %v1685 = vpack.c.b16 %v1569, %v1565
    %v1686 = vpack.c.b16 %v1570, %v1566
    %v1687 = vpack.c.b16 %v1571, %v1567
    %v1688 = vpack.c.b16 %v1576, %v1572
    %v1689 = vpack.c.b16 %v1577, %v1573
    %v1690 = vpack.c.b16 %v1578, %v1574
    %v1691 = vpack.c.b16 %v1579, %v1575
    %v1692 = vpack.c.b16 %v1584, %v1580
    %v1693 = vpack.c.b16 %v1585, %v1581
    %v1694 = vpack.c.b16 %v1586, %v1582
    %v1695 = vpack.c.b16 %v1587, %v1583
    %v1696 = vpack.c.b16 %v1592, %v1588
    %v1697 = vpack.c.b16 %v1593, %v1589
    %v1698 = vpack.c.b16 %v1594, %v1590
    %v1699 = vpack.c.b16 %v1595, %v1591
    %v1700 = vpack.c.b16 %v1600, %v1596
    %v1701 = vpack.c.b16 %v1601, %v1597
    %v1702 = vpack.c.b16 %v1602, %v1598
    %v1703 = vpack.c.b16 %v1603, %v1599
    %v1704 = vpack.c.b16 %v1608, %v1604
    %v1705 = vpack.c.b16 %v1609, %v1605
    %v1706 = vpack.c.b16 %v1610, %v1606
    %v1707 = vpack.c.b16 %v1611, %v1607
    %1804 = vmatprep.subr.bf16.mxu0 %v1641
    %1805 = vmatpush1.bf16.msra.mxu0 %v1640
    %1806 = vmatprep.subr.bf16.mxu0 %v1637
    %1807 = vmatpush1.bf16.msra.mxu0 %v1636
    %1808 = vmatprep.subr.bf16.mxu0 %v1633
    %1809 = vmatpush1.bf16.msra.mxu0 %v1632
    %1810 = vmatprep.subr.bf16.mxu0 %v1629
    %1811 = vmatpush1.bf16.msra.mxu0 %v1628
    %1812 = vmatprep.subr.bf16.mxu0 %v1625
    %1813 = vmatpush1.bf16.msra.mxu0 %v1624
    %1814 = vmatprep.subr.bf16.mxu0 %v1621
    %1815 = vmatpush1.bf16.msra.mxu0 %v1620
    %1816 = vmatprep.subr.bf16.mxu0 %v1617
    %1817 = vmatpush1.bf16.msra.mxu0 %v1616
    %1818 = vmatprep.subr.bf16.mxu0 %v1613
    %1819 = vmatpush1.bf16.msra.mxu0 %v1612
    %1820 = vmatprep.subr.bf16.mxu0 %v1673
    %1821 = vmatpush2.bf16.msra.mxu0 %v1672
    %1822 = vmatprep.subr.bf16.mxu0 %v1669
    %1823 = vmatpush2.bf16.msra.mxu0 %v1668
    %1824 = vmatprep.subr.bf16.mxu0 %v1665
    %1825 = vmatpush2.bf16.msra.mxu0 %v1664
    %1826 = vmatprep.subr.bf16.mxu0 %v1661
    %1827 = vmatpush2.bf16.msra.mxu0 %v1660
    %1828 = vmatprep.subr.bf16.mxu0 %v1657
    %1829 = vmatpush2.bf16.msra.mxu0 %v1656
    %1830 = vmatprep.subr.bf16.mxu0 %v1653
    %1831 = vmatpush2.bf16.msra.mxu0 %v1652
    %1832 = vmatprep.subr.bf16.mxu0 %v1649
    %1833 = vmatpush2.bf16.msra.mxu0 %v1648
    %1834 = vmatprep.subr.bf16.mxu0 %v1645
    %1835 = vmatpush2.bf16.msra.mxu0 %v1644
    %1836 = vmatprep.mubr.bf16.mxu0 %v406
    %1837 = vmatmul.mubr.bf16.gmra.mxu0 %v405
    %v1838 = vpop.f32.mrf.mxu0
    %v1839 = vadd.f32 %v1307, %v1838
    %v1840 = vpop.f32.mrf.mxu0
    %v1841 = vadd.f32 %v1311, %v1840
    %v1842 = vpop.f32.mrf.mxu0
    %v1843 = vpop.f32.mrf.mxu0
    %1844 = vdwg.mxu0
    %1845 = vmatprep.subr.bf16.mxu0 %v1705
    %1846 = vmatpush1.bf16.msra.mxu0 %v1704
    %1847 = vmatprep.subr.bf16.mxu0 %v1701
    %1848 = vmatpush1.bf16.msra.mxu0 %v1700
    %1849 = vmatprep.subr.bf16.mxu0 %v1697
    %1850 = vmatpush1.bf16.msra.mxu0 %v1696
    %1851 = vmatprep.subr.bf16.mxu0 %v1693
    %1852 = vmatpush1.bf16.msra.mxu0 %v1692
    %1853 = vmatprep.subr.bf16.mxu0 %v1689
    %1854 = vmatpush1.bf16.msra.mxu0 %v1688
    %1855 = vmatprep.subr.bf16.mxu0 %v1685
    %1856 = vmatpush1.bf16.msra.mxu0 %v1684
    %1857 = vmatprep.subr.bf16.mxu0 %v1681
    %1858 = vmatpush1.bf16.msra.mxu0 %v1680
    %1859 = vmatprep.subr.bf16.mxu0 %v1677
    %1860 = vmatpush1.bf16.msra.mxu0 %v1676
    %1861 = vmatprep.subr.bf16.mxu0 0
    %1862 = vmatpush2.bf16.msra.mxu0 0
    %1863 = vmatprep.subr.bf16.mxu0 0
    %1864 = vmatpush2.bf16.msra.mxu0 0
    %1865 = vmatprep.subr.bf16.mxu0 0
    %1866 = vmatpush2.bf16.msra.mxu0 0
    %1867 = vmatprep.subr.bf16.mxu0 0
    %1868 = vmatpush2.bf16.msra.mxu0 0
    %1869 = vmatprep.subr.bf16.mxu0 0
    %1870 = vmatpush2.bf16.msra.mxu0 0
    %1871 = vmatprep.subr.bf16.mxu0 0
    %1872 = vmatpush2.bf16.msra.mxu0 0
    %1873 = vmatprep.subr.bf16.mxu0 0
    %1874 = vmatpush2.bf16.msra.mxu0 0
    %1875 = vmatprep.subr.bf16.mxu0 0
    %1876 = vmatpush2.bf16.msra.mxu0 0
    %1877 = vmatprep.mubr.bf16.mxu0 0
    %1878 = vmatmul.mubr.bf16.gmra.mxu0 %v407
    %v1879 = vpop.f32.mrf.mxu0
    %v1880 = vadd.f32 %v1839, %v1879
    %v1881 = vpop.f32.mrf.mxu0
    %v1882 = vadd.f32 %v1841, %v1881
    %v1883 = vpop.f32.mrf.mxu0
    %v1884 = vpop.f32.mrf.mxu0
    %1885 = vdwg.mxu0
    %1886 = vmatprep.subr.bf16.mxu0 %v1643
    %1887 = vmatpush1.bf16.msra.mxu0 %v1642
    %1888 = vmatprep.subr.bf16.mxu0 %v1639
    %1889 = vmatpush1.bf16.msra.mxu0 %v1638
    %1890 = vmatprep.subr.bf16.mxu0 %v1635
    %1891 = vmatpush1.bf16.msra.mxu0 %v1634
    %1892 = vmatprep.subr.bf16.mxu0 %v1631
    %1893 = vmatpush1.bf16.msra.mxu0 %v1630
    %1894 = vmatprep.subr.bf16.mxu0 %v1627
    %1895 = vmatpush1.bf16.msra.mxu0 %v1626
    %1896 = vmatprep.subr.bf16.mxu0 %v1623
    %1897 = vmatpush1.bf16.msra.mxu0 %v1622
    %1898 = vmatprep.subr.bf16.mxu0 %v1619
    %1899 = vmatpush1.bf16.msra.mxu0 %v1618
    %1900 = vmatprep.subr.bf16.mxu0 %v1615
    %1901 = vmatpush1.bf16.msra.mxu0 %v1614
    %1902 = vmatprep.subr.bf16.mxu0 %v1675
    %1903 = vmatpush2.bf16.msra.mxu0 %v1674
    %1904 = vmatprep.subr.bf16.mxu0 %v1671
    %1905 = vmatpush2.bf16.msra.mxu0 %v1670
    %1906 = vmatprep.subr.bf16.mxu0 %v1667
    %1907 = vmatpush2.bf16.msra.mxu0 %v1666
    %1908 = vmatprep.subr.bf16.mxu0 %v1663
    %1909 = vmatpush2.bf16.msra.mxu0 %v1662
    %1910 = vmatprep.subr.bf16.mxu0 %v1659
    %1911 = vmatpush2.bf16.msra.mxu0 %v1658
    %1912 = vmatprep.subr.bf16.mxu0 %v1655
    %1913 = vmatpush2.bf16.msra.mxu0 %v1654
    %1914 = vmatprep.subr.bf16.mxu0 %v1651
    %1915 = vmatpush2.bf16.msra.mxu0 %v1650
    %1916 = vmatprep.subr.bf16.mxu0 %v1647
    %1917 = vmatpush2.bf16.msra.mxu0 %v1646
    %1918 = vmatprep.mubr.bf16.mxu0 %v406
    %1919 = vmatmul.mubr.bf16.gmra.mxu0 %v405
    %v1920 = vpop.f32.mrf.mxu0
    %v1921 = vadd.f32 %v1315, %v1920
    %v1922 = vpop.f32.mrf.mxu0
    %v1923 = vadd.f32 %v1319, %v1922
    %v1924 = vpop.f32.mrf.mxu0
    %v1925 = vpop.f32.mrf.mxu0
    %1926 = vdwg.mxu0
    %1927 = vmatprep.subr.bf16.mxu0 %v1707
    %1928 = vmatpush1.bf16.msra.mxu0 %v1706
    %1929 = vmatprep.subr.bf16.mxu0 %v1703
    %1930 = vmatpush1.bf16.msra.mxu0 %v1702
    %1931 = vmatprep.subr.bf16.mxu0 %v1699
    %1932 = vmatpush1.bf16.msra.mxu0 %v1698
    %1933 = vmatprep.subr.bf16.mxu0 %v1695
    %1934 = vmatpush1.bf16.msra.mxu0 %v1694
    %1935 = vmatprep.subr.bf16.mxu0 %v1691
    %1936 = vmatpush1.bf16.msra.mxu0 %v1690
    %1937 = vmatprep.subr.bf16.mxu0 %v1687
    %1938 = vmatpush1.bf16.msra.mxu0 %v1686
    %1939 = vmatprep.subr.bf16.mxu0 %v1683
    %1940 = vmatpush1.bf16.msra.mxu0 %v1682
    %1941 = vmatprep.subr.bf16.mxu0 %v1679
    %1942 = vmatpush1.bf16.msra.mxu0 %v1678
    %1943 = vmatprep.subr.bf16.mxu0 0
    %1944 = vmatpush2.bf16.msra.mxu0 0
    %1945 = vmatprep.subr.bf16.mxu0 0
    %1946 = vmatpush2.bf16.msra.mxu0 0
    %1947 = vmatprep.subr.bf16.mxu0 0
    %1948 = vmatpush2.bf16.msra.mxu0 0
    %1949 = vmatprep.subr.bf16.mxu0 0
    %1950 = vmatpush2.bf16.msra.mxu0 0
    %1951 = vmatprep.subr.bf16.mxu0 0
    %1952 = vmatpush2.bf16.msra.mxu0 0
    %1953 = vmatprep.subr.bf16.mxu0 0
    %1954 = vmatpush2.bf16.msra.mxu0 0
    %1955 = vmatprep.subr.bf16.mxu0 0
    %1956 = vmatpush2.bf16.msra.mxu0 0
    %1957 = vmatprep.subr.bf16.mxu0 0
    %1958 = vmatpush2.bf16.msra.mxu0 0
    %1959 = vmatprep.mubr.bf16.mxu0 0
    %1960 = vmatmul.mubr.bf16.gmra.mxu0 %v407
    %v1961 = vpop.f32.mrf.mxu0
    %v1962 = vadd.f32 %v1921, %v1961
    %v1963 = vpop.f32.mrf.mxu0
    %v1964 = vadd.f32 %v1923, %v1963
    %v1965 = vpop.f32.mrf.mxu0
    %v1966 = vpop.f32.mrf.mxu0
    %1967 = vdwg.mxu0
    %v1968 = vmax.f32 %v1880, 0.0
    %v1969 = vmax.f32 %v1882, 0.0
    %v1970 = vmax.f32 %v1962, 0.0
    %v1971 = vmax.f32 %v1964, 0.0
    %v1972 = vld [vmem:[#allocation13 + $0x4] sm:$0xf]
    %v1974 = vlaneseq
    %v1975 = vshrl.u32 %v1974, 7
    %v1976 = vsub.s32 0, %v1975
    %v1977 = vrot.slane %v1972, %v1976
    %v1978 = vlaneseq
    %v1979 = vshrl.u32 %v1978, 7
    %v1980 = vsub.s32 1, %v1979
    %v1981 = vrot.slane %v1972, %v1980
    %v1982 = vlaneseq
    %v1983 = vshrl.u32 %v1982, 7
    %v1984 = vsub.s32 2, %v1983
    %v1985 = vrot.slane %v1972, %v1984
    %v1986 = vlaneseq
    %v1987 = vshrl.u32 %v1986, 7
    %v1988 = vsub.s32 3, %v1987
    %v1989 = vrot.slane %v1972, %v1988
    %v1994 = vmul.f32 %v1968, %v1977
    %v1995 = vmul.f32 %v1969, %v1981
    %v1996 = vmul.f32 %v1970, %v1985
    %v1997 = vmul.f32 %v1971, %v1989
    %v1998 = vadd.f32 %v1994, %v1995
    %v1999 = vadd.f32 %v1998, %v1996
    %v2000 = vadd.f32 %v1999, %v1997
    %2001 = vadd.xlane.f32.xlu0 %v2000
    %v2002 = vpop.xlane.xlu0 %2001
    %v2003 = vadd.f32 %v1205, %v2002
    %v2004 = vld [vmem:[#allocation10 + $0x20] sm:$0xff]
    %v2005 = vld [vmem:[#allocation10 + $0x28] sm:$0xff]
    %v2006 = vld [vmem:[#allocation10 + $0x80] sm:$0xff]
    %v2007 = vld [vmem:[#allocation10 + $0x88] sm:$0xff]
    %v2008 = vld [vmem:[#allocation10 + $0xe0] sm:$0xff]
    %v2009 = vld [vmem:[#allocation10 + $0xe8] sm:$0xff]
    %v2010 = vld [vmem:[#allocation10 + $0x140] sm:$0xff]
    %v2011 = vld [vmem:[#allocation10 + $0x148] sm:$0xff]
    %v2012 = vld [vmem:[#allocation10 + $0x1a0] sm:$0xff]
    %v2013 = vld [vmem:[#allocation10 + $0x1a8] sm:$0xff]
    %v2014 = vld [vmem:[#allocation10 + $0x200] sm:$0xff]
    %v2015 = vld [vmem:[#allocation10 + $0x208] sm:$0xff]
    %v2016 = vld [vmem:[#allocation10 + $0x260] sm:$0xff]
    %v2017 = vld [vmem:[#allocation10 + $0x268] sm:$0xff]
    %v2018 = vld [vmem:[#allocation10 + $0x2c0] sm:$0xff]
    %v2019 = vld [vmem:[#allocation10 + $0x2c8] sm:$0xff]
    %v2020 = vld [vmem:[#allocation10 + $0x320] sm:$0xff]
    %v2021 = vld [vmem:[#allocation10 + $0x328] sm:$0xff]
    %v2022 = vld [vmem:[#allocation10 + $0x380] sm:$0xff]
    %v2023 = vld [vmem:[#allocation10 + $0x388] sm:$0xff]
    %v2024 = vld [vmem:[#allocation10 + $0x3e0] sm:$0xff]
    %v2025 = vld [vmem:[#allocation10 + $0x3e8] sm:$0xff]
    %v2026 = vld [vmem:[#allocation10 + $0x440] sm:$0xff]
    %v2027 = vld [vmem:[#allocation10 + $0x448] sm:$0xff]
    %v2028 = vld [vmem:[#allocation10 + $0x4a0] sm:$0xff]
    %v2029 = vld [vmem:[#allocation10 + $0x4a8] sm:$0xff]
    %v2030 = vld [vmem:[#allocation10 + $0x500] sm:$0xff]
    %v2031 = vld [vmem:[#allocation10 + $0x508] sm:$0xff]
    %v2032 = vld [vmem:[#allocation10 + $0x560] sm:$0xff]
    %v2033 = vld [vmem:[#allocation10 + $0x568] sm:$0xff]
    %v2034 = vld [vmem:[#allocation10 + $0x5c0] sm:$0xff]
    %v2035 = vld [vmem:[#allocation10 + $0x5c8] sm:$0xff]
    %v2036 = vld [vmem:[#allocation10 + $0x620] sm:$0xff]
    %v2037 = vld [vmem:[#allocation10 + $0x628] sm:$0xff]
    %v2038 = vld [vmem:[#allocation10 + $0x680] sm:$0xff]
    %v2039 = vld [vmem:[#allocation10 + $0x688] sm:$0xff]
    %v2040 = vld [vmem:[#allocation10 + $0x6e0] sm:$0xff]
    %v2041 = vld [vmem:[#allocation10 + $0x6e8] sm:$0xff]
    %v2042 = vld [vmem:[#allocation10 + $0x740] sm:$0xff]
    %v2043 = vld [vmem:[#allocation10 + $0x748] sm:$0xff]
    %v2044 = vld [vmem:[#allocation10 + $0x7a0] sm:$0xff]
    %v2045 = vld [vmem:[#allocation10 + $0x7a8] sm:$0xff]
    %v2046 = vld [vmem:[#allocation10 + $0x800] sm:$0xff]
    %v2047 = vld [vmem:[#allocation10 + $0x808] sm:$0xff]
    %v2048 = vld [vmem:[#allocation10 + $0x860] sm:$0xff]
    %v2049 = vld [vmem:[#allocation10 + $0x868] sm:$0xff]
    %v2050 = vld [vmem:[#allocation10 + $0x8c0] sm:$0xff]
    %v2051 = vld [vmem:[#allocation10 + $0x8c8] sm:$0xff]
    %v2052 = vld [vmem:[#allocation10 + $0x920] sm:$0xff]
    %v2053 = vld [vmem:[#allocation10 + $0x928] sm:$0xff]
    %v2054 = vld [vmem:[#allocation10 + $0x980] sm:$0xff]
    %v2055 = vld [vmem:[#allocation10 + $0x988] sm:$0xff]
    %v2056 = vld [vmem:[#allocation10 + $0x9e0] sm:$0xff]
    %v2057 = vld [vmem:[#allocation10 + $0x9e8] sm:$0xff]
    %v2058 = vld [vmem:[#allocation10 + $0xa40] sm:$0xff]
    %v2059 = vld [vmem:[#allocation10 + $0xa48] sm:$0xff]
    %v2060 = vld [vmem:[#allocation10 + $0xaa0] sm:$0xff]
    %v2061 = vld [vmem:[#allocation10 + $0xaa8] sm:$0xff]
    %v2062 = vld [vmem:[#allocation10 + $0xb00] sm:$0xff]
    %v2063 = vld [vmem:[#allocation10 + $0xb08] sm:$0xff]
    %v2064 = vld [vmem:[#allocation10 + $0xb60] sm:$0xff]
    %v2065 = vld [vmem:[#allocation10 + $0xb68] sm:$0xff]
    %v2066 = vld [vmem:[#allocation10 + $0xbc0] sm:$0xff]
    %v2067 = vld [vmem:[#allocation10 + $0xbc8] sm:$0xff]
    %v2068 = vld [vmem:[#allocation10 + $0xc20] sm:$0xff]
    %v2069 = vld [vmem:[#allocation10 + $0xc28] sm:$0xff]
    %v2070 = vld [vmem:[#allocation10 + $0xc80] sm:$0xff]
    %v2071 = vld [vmem:[#allocation10 + $0xc88] sm:$0xff]
    %v2072 = vld [vmem:[#allocation10 + $0xce0] sm:$0xff]
    %v2073 = vld [vmem:[#allocation10 + $0xce8] sm:$0xff]
    %v2074 = vld [vmem:[#allocation10 + $0xd40] sm:$0xff]
    %v2075 = vld [vmem:[#allocation10 + $0xd48] sm:$0xff]
    %v2076 = vld [vmem:[#allocation10 + $0xda0] sm:$0xff]
    %v2077 = vld [vmem:[#allocation10 + $0xda8] sm:$0xff]
    %v2078 = vld [vmem:[#allocation10 + $0xe00] sm:$0xff]
    %v2079 = vld [vmem:[#allocation10 + $0xe08] sm:$0xff]
    %v2080 = vld [vmem:[#allocation10 + $0xe60] sm:$0xff]
    %v2081 = vld [vmem:[#allocation10 + $0xe68] sm:$0xff]
    %v2082 = vld [vmem:[#allocation10 + $0xec0] sm:$0xff]
    %v2083 = vld [vmem:[#allocation10 + $0xec8] sm:$0xff]
    %v2084 = vld [vmem:[#allocation10 + $0xf20] sm:$0xff]
    %v2085 = vld [vmem:[#allocation10 + $0xf28] sm:$0xff]
    %v2086 = vld [vmem:[#allocation10 + $0xf80] sm:$0xff]
    %v2087 = vld [vmem:[#allocation10 + $0xf88] sm:$0xff]
    %v2088 = vld [vmem:[#allocation10 + $0xfe0] sm:$0xff]
    %v2089 = vld [vmem:[#allocation10 + $0xfe8] sm:$0xff]
    %v2090 = vld [vmem:[#allocation10 + $0x1040] sm:$0xff]
    %v2091 = vld [vmem:[#allocation10 + $0x1048] sm:$0xff]
    %v2092 = vld [vmem:[#allocation10 + $0x10a0] sm:$0xff]
    %v2093 = vld [vmem:[#allocation10 + $0x10a8] sm:$0xff]
    %v2094 = vld [vmem:[#allocation10 + $0x1100] sm:$0xff]
    %v2095 = vld [vmem:[#allocation10 + $0x1108] sm:$0xff]
    %v2096 = vld [vmem:[#allocation10 + $0x1160] sm:$0xff]
    %v2097 = vld [vmem:[#allocation10 + $0x1168] sm:$0xff]
    %v2098 = vld [vmem:[#allocation10 + $0x11c0] sm:$0xff]
    %v2099 = vld [vmem:[#allocation10 + $0x11c8] sm:$0xff]
    %v2100 = vld [vmem:[#allocation11 + $0x8] sm:$0xf]
    %v2102 = vlaneseq
    %v2103 = vshrl.u32 %v2102, 7
    %v2104 = vsub.s32 0, %v2103
    %v2105 = vrot.slane %v2100, %v2104
    %v2106 = vlaneseq
    %v2107 = vshrl.u32 %v2106, 7
    %v2108 = vsub.s32 1, %v2107
    %v2109 = vrot.slane %v2100, %v2108
    %v2110 = vlaneseq
    %v2111 = vshrl.u32 %v2110, 7
    %v2112 = vsub.s32 2, %v2111
    %v2113 = vrot.slane %v2100, %v2112
    %v2114 = vlaneseq
    %v2115 = vshrl.u32 %v2114, 7
    %v2116 = vsub.s32 3, %v2115
    %v2117 = vrot.slane %v2100, %v2116
    %v2218 = vunpack.c.l.b16 %v2004
    %v2219 = vunpack.c.h.b16 %v2004
    %v2220 = vunpack.c.l.b16 %v2005
    %v2221 = vunpack.c.h.b16 %v2005
    %v2222 = vunpack.c.l.b16 %v2006
    %v2223 = vunpack.c.h.b16 %v2006
    %v2224 = vunpack.c.l.b16 %v2007
    %v2225 = vunpack.c.h.b16 %v2007
    %v2226 = vunpack.c.l.b16 %v2008
    %v2227 = vunpack.c.h.b16 %v2008
    %v2228 = vunpack.c.l.b16 %v2009
    %v2229 = vunpack.c.h.b16 %v2009
    %v2230 = vunpack.c.l.b16 %v2010
    %v2231 = vunpack.c.h.b16 %v2010
    %v2232 = vunpack.c.l.b16 %v2011
    %v2233 = vunpack.c.h.b16 %v2011
    %v2234 = vunpack.c.l.b16 %v2012
    %v2235 = vunpack.c.h.b16 %v2012
    %v2236 = vunpack.c.l.b16 %v2013
    %v2237 = vunpack.c.h.b16 %v2013
    %v2238 = vunpack.c.l.b16 %v2014
    %v2239 = vunpack.c.h.b16 %v2014
    %v2240 = vunpack.c.l.b16 %v2015
    %v2241 = vunpack.c.h.b16 %v2015
    %v2242 = vunpack.c.l.b16 %v2016
    %v2243 = vunpack.c.h.b16 %v2016
    %v2244 = vunpack.c.l.b16 %v2017
    %v2245 = vunpack.c.h.b16 %v2017
    %v2246 = vunpack.c.l.b16 %v2018
    %v2247 = vunpack.c.h.b16 %v2018
    %v2248 = vunpack.c.l.b16 %v2019
    %v2249 = vunpack.c.h.b16 %v2019
    %v2250 = vunpack.c.l.b16 %v2020
    %v2251 = vunpack.c.h.b16 %v2020
    %v2252 = vunpack.c.l.b16 %v2021
    %v2253 = vunpack.c.h.b16 %v2021
    %v2254 = vunpack.c.l.b16 %v2022
    %v2255 = vunpack.c.h.b16 %v2022
    %v2256 = vunpack.c.l.b16 %v2023
    %v2257 = vunpack.c.h.b16 %v2023
    %v2258 = vunpack.c.l.b16 %v2024
    %v2259 = vunpack.c.h.b16 %v2024
    %v2260 = vunpack.c.l.b16 %v2025
    %v2261 = vunpack.c.h.b16 %v2025
    %v2262 = vunpack.c.l.b16 %v2026
    %v2263 = vunpack.c.h.b16 %v2026
    %v2264 = vunpack.c.l.b16 %v2027
    %v2265 = vunpack.c.h.b16 %v2027
    %v2266 = vunpack.c.l.b16 %v2028
    %v2267 = vunpack.c.h.b16 %v2028
    %v2268 = vunpack.c.l.b16 %v2029
    %v2269 = vunpack.c.h.b16 %v2029
    %v2270 = vunpack.c.l.b16 %v2030
    %v2271 = vunpack.c.h.b16 %v2030
    %v2272 = vunpack.c.l.b16 %v2031
    %v2273 = vunpack.c.h.b16 %v2031
    %v2274 = vunpack.c.l.b16 %v2032
    %v2275 = vunpack.c.h.b16 %v2032
    %v2276 = vunpack.c.l.b16 %v2033
    %v2277 = vunpack.c.h.b16 %v2033
    %v2278 = vunpack.c.l.b16 %v2034
    %v2279 = vunpack.c.h.b16 %v2034
    %v2280 = vunpack.c.l.b16 %v2035
    %v2281 = vunpack.c.h.b16 %v2035
    %v2282 = vunpack.c.l.b16 %v2036
    %v2283 = vunpack.c.h.b16 %v2036
    %v2284 = vunpack.c.l.b16 %v2037
    %v2285 = vunpack.c.h.b16 %v2037
    %v2286 = vunpack.c.l.b16 %v2038
    %v2287 = vunpack.c.h.b16 %v2038
    %v2288 = vunpack.c.l.b16 %v2039
    %v2289 = vunpack.c.h.b16 %v2039
    %v2290 = vunpack.c.l.b16 %v2040
    %v2291 = vunpack.c.h.b16 %v2040
    %v2292 = vunpack.c.l.b16 %v2041
    %v2293 = vunpack.c.h.b16 %v2041
    %v2294 = vunpack.c.l.b16 %v2042
    %v2295 = vunpack.c.h.b16 %v2042
    %v2296 = vunpack.c.l.b16 %v2043
    %v2297 = vunpack.c.h.b16 %v2043
    %v2298 = vunpack.c.l.b16 %v2044
    %v2299 = vunpack.c.h.b16 %v2044
    %v2300 = vunpack.c.l.b16 %v2045
    %v2301 = vunpack.c.h.b16 %v2045
    %v2302 = vunpack.c.l.b16 %v2046
    %v2303 = vunpack.c.h.b16 %v2046
    %v2304 = vunpack.c.l.b16 %v2047
    %v2305 = vunpack.c.h.b16 %v2047
    %v2306 = vunpack.c.l.b16 %v2048
    %v2307 = vunpack.c.h.b16 %v2048
    %v2308 = vunpack.c.l.b16 %v2049
    %v2309 = vunpack.c.h.b16 %v2049
    %v2310 = vunpack.c.l.b16 %v2050
    %v2311 = vunpack.c.h.b16 %v2050
    %v2312 = vunpack.c.l.b16 %v2051
    %v2313 = vunpack.c.h.b16 %v2051
    %v2314 = vunpack.c.l.b16 %v2052
    %v2315 = vunpack.c.h.b16 %v2052
    %v2316 = vunpack.c.l.b16 %v2053
    %v2317 = vunpack.c.h.b16 %v2053
    %v2318 = vunpack.c.l.b16 %v2054
    %v2319 = vunpack.c.h.b16 %v2054
    %v2320 = vunpack.c.l.b16 %v2055
    %v2321 = vunpack.c.h.b16 %v2055
    %v2322 = vunpack.c.l.b16 %v2056
    %v2323 = vunpack.c.h.b16 %v2056
    %v2324 = vunpack.c.l.b16 %v2057
    %v2325 = vunpack.c.h.b16 %v2057
    %v2326 = vunpack.c.l.b16 %v2058
    %v2327 = vunpack.c.h.b16 %v2058
    %v2328 = vunpack.c.l.b16 %v2059
    %v2329 = vunpack.c.h.b16 %v2059
    %v2330 = vunpack.c.l.b16 %v2060
    %v2331 = vunpack.c.h.b16 %v2060
    %v2332 = vunpack.c.l.b16 %v2061
    %v2333 = vunpack.c.h.b16 %v2061
    %v2334 = vunpack.c.l.b16 %v2062
    %v2335 = vunpack.c.h.b16 %v2062
    %v2336 = vunpack.c.l.b16 %v2063
    %v2337 = vunpack.c.h.b16 %v2063
    %v2338 = vunpack.c.l.b16 %v2064
    %v2339 = vunpack.c.h.b16 %v2064
    %v2340 = vunpack.c.l.b16 %v2065
    %v2341 = vunpack.c.h.b16 %v2065
    %v2342 = vunpack.c.l.b16 %v2066
    %v2343 = vunpack.c.h.b16 %v2066
    %v2344 = vunpack.c.l.b16 %v2067
    %v2345 = vunpack.c.h.b16 %v2067
    %v2346 = vunpack.c.l.b16 %v2068
    %v2347 = vunpack.c.h.b16 %v2068
    %v2348 = vunpack.c.l.b16 %v2069
    %v2349 = vunpack.c.h.b16 %v2069
    %v2350 = vunpack.c.l.b16 %v2070
    %v2351 = vunpack.c.h.b16 %v2070
    %v2352 = vunpack.c.l.b16 %v2071
    %v2353 = vunpack.c.h.b16 %v2071
    %v2354 = vunpack.c.l.b16 %v2072
    %v2355 = vunpack.c.h.b16 %v2072
    %v2356 = vunpack.c.l.b16 %v2073
    %v2357 = vunpack.c.h.b16 %v2073
    %v2358 = vunpack.c.l.b16 %v2074
    %v2359 = vunpack.c.h.b16 %v2074
    %v2360 = vunpack.c.l.b16 %v2075
    %v2361 = vunpack.c.h.b16 %v2075
    %v2362 = vunpack.c.l.b16 %v2076
    %v2363 = vunpack.c.h.b16 %v2076
    %v2364 = vunpack.c.l.b16 %v2077
    %v2365 = vunpack.c.h.b16 %v2077
    %v2366 = vunpack.c.l.b16 %v2078
    %v2367 = vunpack.c.h.b16 %v2078
    %v2368 = vunpack.c.l.b16 %v2079
    %v2369 = vunpack.c.h.b16 %v2079
    %v2370 = vunpack.c.l.b16 %v2080
    %v2371 = vunpack.c.h.b16 %v2080
    %v2372 = vunpack.c.l.b16 %v2081
    %v2373 = vunpack.c.h.b16 %v2081
    %v2374 = vunpack.c.l.b16 %v2082
    %v2375 = vunpack.c.h.b16 %v2082
    %v2376 = vunpack.c.l.b16 %v2083
    %v2377 = vunpack.c.h.b16 %v2083
    %v2378 = vunpack.c.l.b16 %v2084
    %v2379 = vunpack.c.h.b16 %v2084
    %v2380 = vunpack.c.l.b16 %v2085
    %v2381 = vunpack.c.h.b16 %v2085
    %v2382 = vunpack.c.l.b16 %v2086
    %v2383 = vunpack.c.h.b16 %v2086
    %v2384 = vunpack.c.l.b16 %v2087
    %v2385 = vunpack.c.h.b16 %v2087
    %v2386 = vunpack.c.l.b16 %v2088
    %v2387 = vunpack.c.h.b16 %v2088
    %v2388 = vunpack.c.l.b16 %v2089
    %v2389 = vunpack.c.h.b16 %v2089
    %v2390 = vunpack.c.l.b16 %v2090
    %v2391 = vunpack.c.h.b16 %v2090
    %v2392 = vunpack.c.l.b16 %v2091
    %v2393 = vunpack.c.h.b16 %v2091
    %v2394 = vunpack.c.l.b16 %v2092
    %v2395 = vunpack.c.h.b16 %v2092
    %v2396 = vunpack.c.l.b16 %v2093
    %v2397 = vunpack.c.h.b16 %v2093
    %v2398 = vunpack.c.l.b16 %v2094
    %v2399 = vunpack.c.h.b16 %v2094
    %v2400 = vunpack.c.l.b16 %v2095
    %v2401 = vunpack.c.h.b16 %v2095
    %v2402 = vunpack.c.l.b16 %v2096
    %v2403 = vunpack.c.h.b16 %v2096
    %v2404 = vunpack.c.l.b16 %v2097
    %v2405 = vunpack.c.h.b16 %v2097
    %v2406 = vunpack.c.l.b16 %v2098
    %v2407 = vunpack.c.h.b16 %v2098
    %v2408 = vunpack.c.l.b16 %v2099
    %v2409 = vunpack.c.h.b16 %v2099
    %v2410 = vpack.c.b16 %v2222, %v2218
    %v2411 = vpack.c.b16 %v2223, %v2219
    %v2412 = vpack.c.b16 %v2224, %v2220
    %v2413 = vpack.c.b16 %v2225, %v2221
    %v2414 = vpack.c.b16 %v2230, %v2226
    %v2415 = vpack.c.b16 %v2231, %v2227
    %v2416 = vpack.c.b16 %v2232, %v2228
    %v2417 = vpack.c.b16 %v2233, %v2229
    %v2418 = vpack.c.b16 %v2238, %v2234
    %v2419 = vpack.c.b16 %v2239, %v2235
    %v2420 = vpack.c.b16 %v2240, %v2236
    %v2421 = vpack.c.b16 %v2241, %v2237
    %v2422 = vpack.c.b16 %v2246, %v2242
    %v2423 = vpack.c.b16 %v2247, %v2243
    %v2424 = vpack.c.b16 %v2248, %v2244
    %v2425 = vpack.c.b16 %v2249, %v2245
    %v2426 = vpack.c.b16 %v2254, %v2250
    %v2427 = vpack.c.b16 %v2255, %v2251
    %v2428 = vpack.c.b16 %v2256, %v2252
    %v2429 = vpack.c.b16 %v2257, %v2253
    %v2430 = vpack.c.b16 %v2262, %v2258
    %v2431 = vpack.c.b16 %v2263, %v2259
    %v2432 = vpack.c.b16 %v2264, %v2260
    %v2433 = vpack.c.b16 %v2265, %v2261
    %v2434 = vpack.c.b16 %v2270, %v2266
    %v2435 = vpack.c.b16 %v2271, %v2267
    %v2436 = vpack.c.b16 %v2272, %v2268
    %v2437 = vpack.c.b16 %v2273, %v2269
    %v2438 = vpack.c.b16 %v2278, %v2274
    %v2439 = vpack.c.b16 %v2279, %v2275
    %v2440 = vpack.c.b16 %v2280, %v2276
    %v2441 = vpack.c.b16 %v2281, %v2277
    %v2442 = vpack.c.b16 %v2286, %v2282
    %v2443 = vpack.c.b16 %v2287, %v2283
    %v2444 = vpack.c.b16 %v2288, %v2284
    %v2445 = vpack.c.b16 %v2289, %v2285
    %v2446 = vpack.c.b16 %v2294, %v2290
    %v2447 = vpack.c.b16 %v2295, %v2291
    %v2448 = vpack.c.b16 %v2296, %v2292
    %v2449 = vpack.c.b16 %v2297, %v2293
    %v2450 = vpack.c.b16 %v2302, %v2298
    %v2451 = vpack.c.b16 %v2303, %v2299
    %v2452 = vpack.c.b16 %v2304, %v2300
    %v2453 = vpack.c.b16 %v2305, %v2301
    %v2454 = vpack.c.b16 %v2310, %v2306
    %v2455 = vpack.c.b16 %v2311, %v2307
    %v2456 = vpack.c.b16 %v2312, %v2308
    %v2457 = vpack.c.b16 %v2313, %v2309
    %v2458 = vpack.c.b16 %v2318, %v2314
    %v2459 = vpack.c.b16 %v2319, %v2315
    %v2460 = vpack.c.b16 %v2320, %v2316
    %v2461 = vpack.c.b16 %v2321, %v2317
    %v2462 = vpack.c.b16 %v2326, %v2322
    %v2463 = vpack.c.b16 %v2327, %v2323
    %v2464 = vpack.c.b16 %v2328, %v2324
    %v2465 = vpack.c.b16 %v2329, %v2325
    %v2466 = vpack.c.b16 %v2334, %v2330
    %v2467 = vpack.c.b16 %v2335, %v2331
    %v2468 = vpack.c.b16 %v2336, %v2332
    %v2469 = vpack.c.b16 %v2337, %v2333
    %v2470 = vpack.c.b16 %v2342, %v2338
    %v2471 = vpack.c.b16 %v2343, %v2339
    %v2472 = vpack.c.b16 %v2344, %v2340
    %v2473 = vpack.c.b16 %v2345, %v2341
    %v2474 = vpack.c.b16 %v2350, %v2346
    %v2475 = vpack.c.b16 %v2351, %v2347
    %v2476 = vpack.c.b16 %v2352, %v2348
    %v2477 = vpack.c.b16 %v2353, %v2349
    %v2478 = vpack.c.b16 %v2358, %v2354
    %v2479 = vpack.c.b16 %v2359, %v2355
    %v2480 = vpack.c.b16 %v2360, %v2356
    %v2481 = vpack.c.b16 %v2361, %v2357
    %v2482 = vpack.c.b16 %v2366, %v2362
    %v2483 = vpack.c.b16 %v2367, %v2363
    %v2484 = vpack.c.b16 %v2368, %v2364
    %v2485 = vpack.c.b16 %v2369, %v2365
    %v2486 = vpack.c.b16 %v2374, %v2370
    %v2487 = vpack.c.b16 %v2375, %v2371
    %v2488 = vpack.c.b16 %v2376, %v2372
    %v2489 = vpack.c.b16 %v2377, %v2373
    %v2490 = vpack.c.b16 %v2382, %v2378
    %v2491 = vpack.c.b16 %v2383, %v2379
    %v2492 = vpack.c.b16 %v2384, %v2380
    %v2493 = vpack.c.b16 %v2385, %v2381
    %v2494 = vpack.c.b16 %v2390, %v2386
    %v2495 = vpack.c.b16 %v2391, %v2387
    %v2496 = vpack.c.b16 %v2392, %v2388
    %v2497 = vpack.c.b16 %v2393, %v2389
    %v2498 = vpack.c.b16 %v2398, %v2394
    %v2499 = vpack.c.b16 %v2399, %v2395
    %v2500 = vpack.c.b16 %v2400, %v2396
    %v2501 = vpack.c.b16 %v2401, %v2397
    %v2502 = vpack.c.b16 %v2406, %v2402
    %v2503 = vpack.c.b16 %v2407, %v2403
    %v2504 = vpack.c.b16 %v2408, %v2404
    %v2505 = vpack.c.b16 %v2409, %v2405
    %2602 = vmatprep.subr.bf16.mxu0 %v2439
    %2603 = vmatpush1.bf16.msra.mxu0 %v2438
    %2604 = vmatprep.subr.bf16.mxu0 %v2435
    %2605 = vmatpush1.bf16.msra.mxu0 %v2434
    %2606 = vmatprep.subr.bf16.mxu0 %v2431
    %2607 = vmatpush1.bf16.msra.mxu0 %v2430
    %2608 = vmatprep.subr.bf16.mxu0 %v2427
    %2609 = vmatpush1.bf16.msra.mxu0 %v2426
    %2610 = vmatprep.subr.bf16.mxu0 %v2423
    %2611 = vmatpush1.bf16.msra.mxu0 %v2422
    %2612 = vmatprep.subr.bf16.mxu0 %v2419
    %2613 = vmatpush1.bf16.msra.mxu0 %v2418
    %2614 = vmatprep.subr.bf16.mxu0 %v2415
    %2615 = vmatpush1.bf16.msra.mxu0 %v2414
    %2616 = vmatprep.subr.bf16.mxu0 %v2411
    %2617 = vmatpush1.bf16.msra.mxu0 %v2410
    %2618 = vmatprep.subr.bf16.mxu0 %v2471
    %2619 = vmatpush2.bf16.msra.mxu0 %v2470
    %2620 = vmatprep.subr.bf16.mxu0 %v2467
    %2621 = vmatpush2.bf16.msra.mxu0 %v2466
    %2622 = vmatprep.subr.bf16.mxu0 %v2463
    %2623 = vmatpush2.bf16.msra.mxu0 %v2462
    %2624 = vmatprep.subr.bf16.mxu0 %v2459
    %2625 = vmatpush2.bf16.msra.mxu0 %v2458
    %2626 = vmatprep.subr.bf16.mxu0 %v2455
    %2627 = vmatpush2.bf16.msra.mxu0 %v2454
    %2628 = vmatprep.subr.bf16.mxu0 %v2451
    %2629 = vmatpush2.bf16.msra.mxu0 %v2450
    %2630 = vmatprep.subr.bf16.mxu0 %v2447
    %2631 = vmatpush2.bf16.msra.mxu0 %v2446
    %2632 = vmatprep.subr.bf16.mxu0 %v2443
    %2633 = vmatpush2.bf16.msra.mxu0 %v2442
    %2634 = vmatprep.mubr.bf16.mxu0 %v406
    %2635 = vmatmul.mubr.bf16.gmra.mxu0 %v405
    %v2636 = vpop.f32.mrf.mxu0
    %v2637 = vadd.f32 %v2105, %v2636
    %v2638 = vpop.f32.mrf.mxu0
    %v2639 = vadd.f32 %v2109, %v2638
    %v2640 = vpop.f32.mrf.mxu0
    %v2641 = vpop.f32.mrf.mxu0
    %2642 = vdwg.mxu0
    %2643 = vmatprep.subr.bf16.mxu0 %v2503
    %2644 = vmatpush1.bf16.msra.mxu0 %v2502
    %2645 = vmatprep.subr.bf16.mxu0 %v2499
    %2646 = vmatpush1.bf16.msra.mxu0 %v2498
    %2647 = vmatprep.subr.bf16.mxu0 %v2495
    %2648 = vmatpush1.bf16.msra.mxu0 %v2494
    %2649 = vmatprep.subr.bf16.mxu0 %v2491
    %2650 = vmatpush1.bf16.msra.mxu0 %v2490
    %2651 = vmatprep.subr.bf16.mxu0 %v2487
    %2652 = vmatpush1.bf16.msra.mxu0 %v2486
    %2653 = vmatprep.subr.bf16.mxu0 %v2483
    %2654 = vmatpush1.bf16.msra.mxu0 %v2482
    %2655 = vmatprep.subr.bf16.mxu0 %v2479
    %2656 = vmatpush1.bf16.msra.mxu0 %v2478
    %2657 = vmatprep.subr.bf16.mxu0 %v2475
    %2658 = vmatpush1.bf16.msra.mxu0 %v2474
    %2659 = vmatprep.subr.bf16.mxu0 0
    %2660 = vmatpush2.bf16.msra.mxu0 0
    %2661 = vmatprep.subr.bf16.mxu0 0
    %2662 = vmatpush2.bf16.msra.mxu0 0
    %2663 = vmatprep.subr.bf16.mxu0 0
    %2664 = vmatpush2.bf16.msra.mxu0 0
    %2665 = vmatprep.subr.bf16.mxu0 0
    %2666 = vmatpush2.bf16.msra.mxu0 0
    %2667 = vmatprep.subr.bf16.mxu0 0
    %2668 = vmatpush2.bf16.msra.mxu0 0
    %2669 = vmatprep.subr.bf16.mxu0 0
    %2670 = vmatpush2.bf16.msra.mxu0 0
    %2671 = vmatprep.subr.bf16.mxu0 0
    %2672 = vmatpush2.bf16.msra.mxu0 0
    %2673 = vmatprep.subr.bf16.mxu0 0
    %2674 = vmatpush2.bf16.msra.mxu0 0
    %2675 = vmatprep.mubr.bf16.mxu0 0
    %2676 = vmatmul.mubr.bf16.gmra.mxu0 %v407
    %v2677 = vpop.f32.mrf.mxu0
    %v2678 = vadd.f32 %v2637, %v2677
    %v2679 = vpop.f32.mrf.mxu0
    %v2680 = vadd.f32 %v2639, %v2679
    %v2681 = vpop.f32.mrf.mxu0
    %v2682 = vpop.f32.mrf.mxu0
    %2683 = vdwg.mxu0
    %2684 = vmatprep.subr.bf16.mxu0 %v2441
    %2685 = vmatpush1.bf16.msra.mxu0 %v2440
    %2686 = vmatprep.subr.bf16.mxu0 %v2437
    %2687 = vmatpush1.bf16.msra.mxu0 %v2436
    %2688 = vmatprep.subr.bf16.mxu0 %v2433
    %2689 = vmatpush1.bf16.msra.mxu0 %v2432
    %2690 = vmatprep.subr.bf16.mxu0 %v2429
    %2691 = vmatpush1.bf16.msra.mxu0 %v2428
    %2692 = vmatprep.subr.bf16.mxu0 %v2425
    %2693 = vmatpush1.bf16.msra.mxu0 %v2424
    %2694 = vmatprep.subr.bf16.mxu0 %v2421
    %2695 = vmatpush1.bf16.msra.mxu0 %v2420
    %2696 = vmatprep.subr.bf16.mxu0 %v2417
    %2697 = vmatpush1.bf16.msra.mxu0 %v2416
    %2698 = vmatprep.subr.bf16.mxu0 %v2413
    %2699 = vmatpush1.bf16.msra.mxu0 %v2412
    %2700 = vmatprep.subr.bf16.mxu0 %v2473
    %2701 = vmatpush2.bf16.msra.mxu0 %v2472
    %2702 = vmatprep.subr.bf16.mxu0 %v2469
    %2703 = vmatpush2.bf16.msra.mxu0 %v2468
    %2704 = vmatprep.subr.bf16.mxu0 %v2465
    %2705 = vmatpush2.bf16.msra.mxu0 %v2464
    %2706 = vmatprep.subr.bf16.mxu0 %v2461
    %2707 = vmatpush2.bf16.msra.mxu0 %v2460
    %2708 = vmatprep.subr.bf16.mxu0 %v2457
    %2709 = vmatpush2.bf16.msra.mxu0 %v2456
    %2710 = vmatprep.subr.bf16.mxu0 %v2453
    %2711 = vmatpush2.bf16.msra.mxu0 %v2452
    %2712 = vmatprep.subr.bf16.mxu0 %v2449
    %2713 = vmatpush2.bf16.msra.mxu0 %v2448
    %2714 = vmatprep.subr.bf16.mxu0 %v2445
    %2715 = vmatpush2.bf16.msra.mxu0 %v2444
    %2716 = vmatprep.mubr.bf16.mxu0 %v406
    %2717 = vmatmul.mubr.bf16.gmra.mxu0 %v405
    %v2718 = vpop.f32.mrf.mxu0
    %v2719 = vadd.f32 %v2113, %v2718
    %v2720 = vpop.f32.mrf.mxu0
    %v2721 = vadd.f32 %v2117, %v2720
    %v2722 = vpop.f32.mrf.mxu0
    %v2723 = vpop.f32.mrf.mxu0
    %2724 = vdwg.mxu0
    %2725 = vmatprep.subr.bf16.mxu0 %v2505
    %2726 = vmatpush1.bf16.msra.mxu0 %v2504
    %2727 = vmatprep.subr.bf16.mxu0 %v2501
    %2728 = vmatpush1.bf16.msra.mxu0 %v2500
    %2729 = vmatprep.subr.bf16.mxu0 %v2497
    %2730 = vmatpush1.bf16.msra.mxu0 %v2496
    %2731 = vmatprep.subr.bf16.mxu0 %v2493
    %2732 = vmatpush1.bf16.msra.mxu0 %v2492
    %2733 = vmatprep.subr.bf16.mxu0 %v2489
    %2734 = vmatpush1.bf16.msra.mxu0 %v2488
    %2735 = vmatprep.subr.bf16.mxu0 %v2485
    %2736 = vmatpush1.bf16.msra.mxu0 %v2484
    %2737 = vmatprep.subr.bf16.mxu0 %v2481
    %2738 = vmatpush1.bf16.msra.mxu0 %v2480
    %2739 = vmatprep.subr.bf16.mxu0 %v2477
    %2740 = vmatpush1.bf16.msra.mxu0 %v2476
    %2741 = vmatprep.subr.bf16.mxu0 0
    %2742 = vmatpush2.bf16.msra.mxu0 0
    %2743 = vmatprep.subr.bf16.mxu0 0
    %2744 = vmatpush2.bf16.msra.mxu0 0
    %2745 = vmatprep.subr.bf16.mxu0 0
    %2746 = vmatpush2.bf16.msra.mxu0 0
    %2747 = vmatprep.subr.bf16.mxu0 0
    %2748 = vmatpush2.bf16.msra.mxu0 0
    %2749 = vmatprep.subr.bf16.mxu0 0
    %2750 = vmatpush2.bf16.msra.mxu0 0
    %2751 = vmatprep.subr.bf16.mxu0 0
    %2752 = vmatpush2.bf16.msra.mxu0 0
    %2753 = vmatprep.subr.bf16.mxu0 0
    %2754 = vmatpush2.bf16.msra.mxu0 0
    %2755 = vmatprep.subr.bf16.mxu0 0
    %2756 = vmatpush2.bf16.msra.mxu0 0
    %2757 = vmatprep.mubr.bf16.mxu0 0
    %2758 = vmatmul.mubr.bf16.gmra.mxu0 %v407
    %v2759 = vpop.f32.mrf.mxu0
    %v2760 = vadd.f32 %v2719, %v2759
    %v2761 = vpop.f32.mrf.mxu0
    %v2762 = vadd.f32 %v2721, %v2761
    %v2763 = vpop.f32.mrf.mxu0
    %v2764 = vpop.f32.mrf.mxu0
    %2765 = vdwg.mxu0
    %v2766 = vmax.f32 %v2678, 0.0
    %v2767 = vmax.f32 %v2680, 0.0
    %v2768 = vmax.f32 %v2760, 0.0
    %v2769 = vmax.f32 %v2762, 0.0
    %v2770 = vld [vmem:[#allocation13 + $0x8] sm:$0xf]
    %v2772 = vlaneseq
    %v2773 = vshrl.u32 %v2772, 7
    %v2774 = vsub.s32 0, %v2773
    %v2775 = vrot.slane %v2770, %v2774
    %v2776 = vlaneseq
    %v2777 = vshrl.u32 %v2776, 7
    %v2778 = vsub.s32 1, %v2777
    %v2779 = vrot.slane %v2770, %v2778
    %v2780 = vlaneseq
    %v2781 = vshrl.u32 %v2780, 7
    %v2782 = vsub.s32 2, %v2781
    %v2783 = vrot.slane %v2770, %v2782
    %v2784 = vlaneseq
    %v2785 = vshrl.u32 %v2784, 7
    %v2786 = vsub.s32 3, %v2785
    %v2787 = vrot.slane %v2770, %v2786
    %v2792 = vmul.f32 %v2766, %v2775
    %v2793 = vmul.f32 %v2767, %v2779
    %v2794 = vmul.f32 %v2768, %v2783
    %v2795 = vmul.f32 %v2769, %v2787
    %v2796 = vadd.f32 %v2792, %v2793
    %v2797 = vadd.f32 %v2796, %v2794
    %v2798 = vadd.f32 %v2797, %v2795
    %2799 = vadd.xlane.f32.xlu0 %v2798
    %v2800 = vpop.xlane.xlu0 %2799
    %v2801 = vadd.f32 %v2003, %v2800
    %v2802 = vld [vmem:[#allocation10 + $0x30] sm:$0xff]
    %v2803 = vld [vmem:[#allocation10 + $0x38] sm:$0xff]
    %v2804 = vld [vmem:[#allocation10 + $0x90] sm:$0xff]
    %v2805 = vld [vmem:[#allocation10 + $0x98] sm:$0xff]
    %v2806 = vld [vmem:[#allocation10 + $0xf0] sm:$0xff]
    %v2807 = vld [vmem:[#allocation10 + $0xf8] sm:$0xff]
    %v2808 = vld [vmem:[#allocation10 + $0x150] sm:$0xff]
    %v2809 = vld [vmem:[#allocation10 + $0x158] sm:$0xff]
    %v2810 = vld [vmem:[#allocation10 + $0x1b0] sm:$0xff]
    %v2811 = vld [vmem:[#allocation10 + $0x1b8] sm:$0xff]
    %v2812 = vld [vmem:[#allocation10 + $0x210] sm:$0xff]
    %v2813 = vld [vmem:[#allocation10 + $0x218] sm:$0xff]
    %v2814 = vld [vmem:[#allocation10 + $0x270] sm:$0xff]
    %v2815 = vld [vmem:[#allocation10 + $0x278] sm:$0xff]
    %v2816 = vld [vmem:[#allocation10 + $0x2d0] sm:$0xff]
    %v2817 = vld [vmem:[#allocation10 + $0x2d8] sm:$0xff]
    %v2818 = vld [vmem:[#allocation10 + $0x330] sm:$0xff]
    %v2819 = vld [vmem:[#allocation10 + $0x338] sm:$0xff]
    %v2820 = vld [vmem:[#allocation10 + $0x390] sm:$0xff]
    %v2821 = vld [vmem:[#allocation10 + $0x398] sm:$0xff]
    %v2822 = vld [vmem:[#allocation10 + $0x3f0] sm:$0xff]
    %v2823 = vld [vmem:[#allocation10 + $0x3f8] sm:$0xff]
    %v2824 = vld [vmem:[#allocation10 + $0x450] sm:$0xff]
    %v2825 = vld [vmem:[#allocation10 + $0x458] sm:$0xff]
    %v2826 = vld [vmem:[#allocation10 + $0x4b0] sm:$0xff]
    %v2827 = vld [vmem:[#allocation10 + $0x4b8] sm:$0xff]
    %v2828 = vld [vmem:[#allocation10 + $0x510] sm:$0xff]
    %v2829 = vld [vmem:[#allocation10 + $0x518] sm:$0xff]
    %v2830 = vld [vmem:[#allocation10 + $0x570] sm:$0xff]
    %v2831 = vld [vmem:[#allocation10 + $0x578] sm:$0xff]
    %v2832 = vld [vmem:[#allocation10 + $0x5d0] sm:$0xff]
    %v2833 = vld [vmem:[#allocation10 + $0x5d8] sm:$0xff]
    %v2834 = vld [vmem:[#allocation10 + $0x630] sm:$0xff]
    %v2835 = vld [vmem:[#allocation10 + $0x638] sm:$0xff]
    %v2836 = vld [vmem:[#allocation10 + $0x690] sm:$0xff]
    %v2837 = vld [vmem:[#allocation10 + $0x698] sm:$0xff]
    %v2838 = vld [vmem:[#allocation10 + $0x6f0] sm:$0xff]
    %v2839 = vld [vmem:[#allocation10 + $0x6f8] sm:$0xff]
    %v2840 = vld [vmem:[#allocation10 + $0x750] sm:$0xff]
    %v2841 = vld [vmem:[#allocation10 + $0x758] sm:$0xff]
    %v2842 = vld [vmem:[#allocation10 + $0x7b0] sm:$0xff]
    %v2843 = vld [vmem:[#allocation10 + $0x7b8] sm:$0xff]
    %v2844 = vld [vmem:[#allocation10 + $0x810] sm:$0xff]
    %v2845 = vld [vmem:[#allocation10 + $0x818] sm:$0xff]
    %v2846 = vld [vmem:[#allocation10 + $0x870] sm:$0xff]
    %v2847 = vld [vmem:[#allocation10 + $0x878] sm:$0xff]
    %v2848 = vld [vmem:[#allocation10 + $0x8d0] sm:$0xff]
    %v2849 = vld [vmem:[#allocation10 + $0x8d8] sm:$0xff]
    %v2850 = vld [vmem:[#allocation10 + $0x930] sm:$0xff]
    %v2851 = vld [vmem:[#allocation10 + $0x938] sm:$0xff]
    %v2852 = vld [vmem:[#allocation10 + $0x990] sm:$0xff]
    %v2853 = vld [vmem:[#allocation10 + $0x998] sm:$0xff]
    %v2854 = vld [vmem:[#allocation10 + $0x9f0] sm:$0xff]
    %v2855 = vld [vmem:[#allocation10 + $0x9f8] sm:$0xff]
    %v2856 = vld [vmem:[#allocation10 + $0xa50] sm:$0xff]
    %v2857 = vld [vmem:[#allocation10 + $0xa58] sm:$0xff]
    %v2858 = vld [vmem:[#allocation10 + $0xab0] sm:$0xff]
    %v2859 = vld [vmem:[#allocation10 + $0xab8] sm:$0xff]
    %v2860 = vld [vmem:[#allocation10 + $0xb10] sm:$0xff]
    %v2861 = vld [vmem:[#allocation10 + $0xb18] sm:$0xff]
    %v2862 = vld [vmem:[#allocation10 + $0xb70] sm:$0xff]
    %v2863 = vld [vmem:[#allocation10 + $0xb78] sm:$0xff]
    %v2864 = vld [vmem:[#allocation10 + $0xbd0] sm:$0xff]
    %v2865 = vld [vmem:[#allocation10 + $0xbd8] sm:$0xff]
    %v2866 = vld [vmem:[#allocation10 + $0xc30] sm:$0xff]
    %v2867 = vld [vmem:[#allocation10 + $0xc38] sm:$0xff]
    %v2868 = vld [vmem:[#allocation10 + $0xc90] sm:$0xff]
    %v2869 = vld [vmem:[#allocation10 + $0xc98] sm:$0xff]
    %v2870 = vld [vmem:[#allocation10 + $0xcf0] sm:$0xff]
    %v2871 = vld [vmem:[#allocation10 + $0xcf8] sm:$0xff]
    %v2872 = vld [vmem:[#allocation10 + $0xd50] sm:$0xff]
    %v2873 = vld [vmem:[#allocation10 + $0xd58] sm:$0xff]
    %v2874 = vld [vmem:[#allocation10 + $0xdb0] sm:$0xff]
    %v2875 = vld [vmem:[#allocation10 + $0xdb8] sm:$0xff]
    %v2876 = vld [vmem:[#allocation10 + $0xe10] sm:$0xff]
    %v2877 = vld [vmem:[#allocation10 + $0xe18] sm:$0xff]
    %v2878 = vld [vmem:[#allocation10 + $0xe70] sm:$0xff]
    %v2879 = vld [vmem:[#allocation10 + $0xe78] sm:$0xff]
    %v2880 = vld [vmem:[#allocation10 + $0xed0] sm:$0xff]
    %v2881 = vld [vmem:[#allocation10 + $0xed8] sm:$0xff]
    %v2882 = vld [vmem:[#allocation10 + $0xf30] sm:$0xff]
    %v2883 = vld [vmem:[#allocation10 + $0xf38] sm:$0xff]
    %v2884 = vld [vmem:[#allocation10 + $0xf90] sm:$0xff]
    %v2885 = vld [vmem:[#allocation10 + $0xf98] sm:$0xff]
    %v2886 = vld [vmem:[#allocation10 + $0xff0] sm:$0xff]
    %v2887 = vld [vmem:[#allocation10 + $0xff8] sm:$0xff]
    %v2888 = vld [vmem:[#allocation10 + $0x1050] sm:$0xff]
    %v2889 = vld [vmem:[#allocation10 + $0x1058] sm:$0xff]
    %v2890 = vld [vmem:[#allocation10 + $0x10b0] sm:$0xff]
    %v2891 = vld [vmem:[#allocation10 + $0x10b8] sm:$0xff]
    %v2892 = vld [vmem:[#allocation10 + $0x1110] sm:$0xff]
    %v2893 = vld [vmem:[#allocation10 + $0x1118] sm:$0xff]
    %v2894 = vld [vmem:[#allocation10 + $0x1170] sm:$0xff]
    %v2895 = vld [vmem:[#allocation10 + $0x1178] sm:$0xff]
    %v2896 = vld [vmem:[#allocation10 + $0x11d0] sm:$0xff]
    %v2897 = vld [vmem:[#allocation10 + $0x11d8] sm:$0xff]
    %v2898 = vld [vmem:[#allocation11 + $0xc] sm:$0xf]
    %v2900 = vlaneseq
    %v2901 = vshrl.u32 %v2900, 7
    %v2902 = vsub.s32 0, %v2901
    %v2903 = vrot.slane %v2898, %v2902
    %v2904 = vlaneseq
    %v2905 = vshrl.u32 %v2904, 7
    %v2906 = vsub.s32 1, %v2905
    %v2907 = vrot.slane %v2898, %v2906
    %v2908 = vlaneseq
    %v2909 = vshrl.u32 %v2908, 7
    %v2910 = vsub.s32 2, %v2909
    %v2911 = vrot.slane %v2898, %v2910
    %v2912 = vlaneseq
    %v2913 = vshrl.u32 %v2912, 7
    %v2914 = vsub.s32 3, %v2913
    %v2915 = vrot.slane %v2898, %v2914
    %v3016 = vunpack.c.l.b16 %v2802
    %v3017 = vunpack.c.h.b16 %v2802
    %v3018 = vunpack.c.l.b16 %v2803
    %v3019 = vunpack.c.h.b16 %v2803
    %v3020 = vunpack.c.l.b16 %v2804
    %v3021 = vunpack.c.h.b16 %v2804
    %v3022 = vunpack.c.l.b16 %v2805
    %v3023 = vunpack.c.h.b16 %v2805
    %v3024 = vunpack.c.l.b16 %v2806
    %v3025 = vunpack.c.h.b16 %v2806
    %v3026 = vunpack.c.l.b16 %v2807
    %v3027 = vunpack.c.h.b16 %v2807
    %v3028 = vunpack.c.l.b16 %v2808
    %v3029 = vunpack.c.h.b16 %v2808
    %v3030 = vunpack.c.l.b16 %v2809
    %v3031 = vunpack.c.h.b16 %v2809
    %v3032 = vunpack.c.l.b16 %v2810
    %v3033 = vunpack.c.h.b16 %v2810
    %v3034 = vunpack.c.l.b16 %v2811
    %v3035 = vunpack.c.h.b16 %v2811
    %v3036 = vunpack.c.l.b16 %v2812
    %v3037 = vunpack.c.h.b16 %v2812
    %v3038 = vunpack.c.l.b16 %v2813
    %v3039 = vunpack.c.h.b16 %v2813
    %v3040 = vunpack.c.l.b16 %v2814
    %v3041 = vunpack.c.h.b16 %v2814
    %v3042 = vunpack.c.l.b16 %v2815
    %v3043 = vunpack.c.h.b16 %v2815
    %v3044 = vunpack.c.l.b16 %v2816
    %v3045 = vunpack.c.h.b16 %v2816
    %v3046 = vunpack.c.l.b16 %v2817
    %v3047 = vunpack.c.h.b16 %v2817
    %v3048 = vunpack.c.l.b16 %v2818
    %v3049 = vunpack.c.h.b16 %v2818
    %v3050 = vunpack.c.l.b16 %v2819
    %v3051 = vunpack.c.h.b16 %v2819
    %v3052 = vunpack.c.l.b16 %v2820
    %v3053 = vunpack.c.h.b16 %v2820
    %v3054 = vunpack.c.l.b16 %v2821
    %v3055 = vunpack.c.h.b16 %v2821
    %v3056 = vunpack.c.l.b16 %v2822
    %v3057 = vunpack.c.h.b16 %v2822
    %v3058 = vunpack.c.l.b16 %v2823
    %v3059 = vunpack.c.h.b16 %v2823
    %v3060 = vunpack.c.l.b16 %v2824
    %v3061 = vunpack.c.h.b16 %v2824
    %v3062 = vunpack.c.l.b16 %v2825
    %v3063 = vunpack.c.h.b16 %v2825
    %v3064 = vunpack.c.l.b16 %v2826
    %v3065 = vunpack.c.h.b16 %v2826
    %v3066 = vunpack.c.l.b16 %v2827
    %v3067 = vunpack.c.h.b16 %v2827
    %v3068 = vunpack.c.l.b16 %v2828
    %v3069 = vunpack.c.h.b16 %v2828
    %v3070 = vunpack.c.l.b16 %v2829
    %v3071 = vunpack.c.h.b16 %v2829
    %v3072 = vunpack.c.l.b16 %v2830
    %v3073 = vunpack.c.h.b16 %v2830
    %v3074 = vunpack.c.l.b16 %v2831
    %v3075 = vunpack.c.h.b16 %v2831
    %v3076 = vunpack.c.l.b16 %v2832
    %v3077 = vunpack.c.h.b16 %v2832
    %v3078 = vunpack.c.l.b16 %v2833
    %v3079 = vunpack.c.h.b16 %v2833
    %v3080 = vunpack.c.l.b16 %v2834
    %v3081 = vunpack.c.h.b16 %v2834
    %v3082 = vunpack.c.l.b16 %v2835
    %v3083 = vunpack.c.h.b16 %v2835
    %v3084 = vunpack.c.l.b16 %v2836
    %v3085 = vunpack.c.h.b16 %v2836
    %v3086 = vunpack.c.l.b16 %v2837
    %v3087 = vunpack.c.h.b16 %v2837
    %v3088 = vunpack.c.l.b16 %v2838
    %v3089 = vunpack.c.h.b16 %v2838
    %v3090 = vunpack.c.l.b16 %v2839
    %v3091 = vunpack.c.h.b16 %v2839
    %v3092 = vunpack.c.l.b16 %v2840
    %v3093 = vunpack.c.h.b16 %v2840
    %v3094 = vunpack.c.l.b16 %v2841
    %v3095 = vunpack.c.h.b16 %v2841
    %v3096 = vunpack.c.l.b16 %v2842
    %v3097 = vunpack.c.h.b16 %v2842
    %v3098 = vunpack.c.l.b16 %v2843
    %v3099 = vunpack.c.h.b16 %v2843
    %v3100 = vunpack.c.l.b16 %v2844
    %v3101 = vunpack.c.h.b16 %v2844
    %v3102 = vunpack.c.l.b16 %v2845
    %v3103 = vunpack.c.h.b16 %v2845
    %v3104 = vunpack.c.l.b16 %v2846
    %v3105 = vunpack.c.h.b16 %v2846
    %v3106 = vunpack.c.l.b16 %v2847
    %v3107 = vunpack.c.h.b16 %v2847
    %v3108 = vunpack.c.l.b16 %v2848
    %v3109 = vunpack.c.h.b16 %v2848
    %v3110 = vunpack.c.l.b16 %v2849
    %v3111 = vunpack.c.h.b16 %v2849
    %v3112 = vunpack.c.l.b16 %v2850
    %v3113 = vunpack.c.h.b16 %v2850
    %v3114 = vunpack.c.l.b16 %v2851
    %v3115 = vunpack.c.h.b16 %v2851
    %v3116 = vunpack.c.l.b16 %v2852
    %v3117 = vunpack.c.h.b16 %v2852
    %v3118 = vunpack.c.l.b16 %v2853
    %v3119 = vunpack.c.h.b16 %v2853
    %v3120 = vunpack.c.l.b16 %v2854
    %v3121 = vunpack.c.h.b16 %v2854
    %v3122 = vunpack.c.l.b16 %v2855
    %v3123 = vunpack.c.h.b16 %v2855
    %v3124 = vunpack.c.l.b16 %v2856
    %v3125 = vunpack.c.h.b16 %v2856
    %v3126 = vunpack.c.l.b16 %v2857
    %v3127 = vunpack.c.h.b16 %v2857
    %v3128 = vunpack.c.l.b16 %v2858
    %v3129 = vunpack.c.h.b16 %v2858
    %v3130 = vunpack.c.l.b16 %v2859
    %v3131 = vunpack.c.h.b16 %v2859
    %v3132 = vunpack.c.l.b16 %v2860
    %v3133 = vunpack.c.h.b16 %v2860
    %v3134 = vunpack.c.l.b16 %v2861
    %v3135 = vunpack.c.h.b16 %v2861
    %v3136 = vunpack.c.l.b16 %v2862
    %v3137 = vunpack.c.h.b16 %v2862
    %v3138 = vunpack.c.l.b16 %v2863
    %v3139 = vunpack.c.h.b16 %v2863
    %v3140 = vunpack.c.l.b16 %v2864
    %v3141 = vunpack.c.h.b16 %v2864
    %v3142 = vunpack.c.l.b16 %v2865
    %v3143 = vunpack.c.h.b16 %v2865
    %v3144 = vunpack.c.l.b16 %v2866
    %v3145 = vunpack.c.h.b16 %v2866
    %v3146 = vunpack.c.l.b16 %v2867
    %v3147 = vunpack.c.h.b16 %v2867
    %v3148 = vunpack.c.l.b16 %v2868
    %v3149 = vunpack.c.h.b16 %v2868
    %v3150 = vunpack.c.l.b16 %v2869
    %v3151 = vunpack.c.h.b16 %v2869
    %v3152 = vunpack.c.l.b16 %v2870
    %v3153 = vunpack.c.h.b16 %v2870
    %v3154 = vunpack.c.l.b16 %v2871
    %v3155 = vunpack.c.h.b16 %v2871
    %v3156 = vunpack.c.l.b16 %v2872
    %v3157 = vunpack.c.h.b16 %v2872
    %v3158 = vunpack.c.l.b16 %v2873
    %v3159 = vunpack.c.h.b16 %v2873
    %v3160 = vunpack.c.l.b16 %v2874
    %v3161 = vunpack.c.h.b16 %v2874
    %v3162 = vunpack.c.l.b16 %v2875
    %v3163 = vunpack.c.h.b16 %v2875
    %v3164 = vunpack.c.l.b16 %v2876
    %v3165 = vunpack.c.h.b16 %v2876
    %v3166 = vunpack.c.l.b16 %v2877
    %v3167 = vunpack.c.h.b16 %v2877
    %v3168 = vunpack.c.l.b16 %v2878
    %v3169 = vunpack.c.h.b16 %v2878
    %v3170 = vunpack.c.l.b16 %v2879
    %v3171 = vunpack.c.h.b16 %v2879
    %v3172 = vunpack.c.l.b16 %v2880
    %v3173 = vunpack.c.h.b16 %v2880
    %v3174 = vunpack.c.l.b16 %v2881
    %v3175 = vunpack.c.h.b16 %v2881
    %v3176 = vunpack.c.l.b16 %v2882
    %v3177 = vunpack.c.h.b16 %v2882
    %v3178 = vunpack.c.l.b16 %v2883
    %v3179 = vunpack.c.h.b16 %v2883
    %v3180 = vunpack.c.l.b16 %v2884
    %v3181 = vunpack.c.h.b16 %v2884
    %v3182 = vunpack.c.l.b16 %v2885
    %v3183 = vunpack.c.h.b16 %v2885
    %v3184 = vunpack.c.l.b16 %v2886
    %v3185 = vunpack.c.h.b16 %v2886
    %v3186 = vunpack.c.l.b16 %v2887
    %v3187 = vunpack.c.h.b16 %v2887
    %v3188 = vunpack.c.l.b16 %v2888
    %v3189 = vunpack.c.h.b16 %v2888
    %v3190 = vunpack.c.l.b16 %v2889
    %v3191 = vunpack.c.h.b16 %v2889
    %v3192 = vunpack.c.l.b16 %v2890
    %v3193 = vunpack.c.h.b16 %v2890
    %v3194 = vunpack.c.l.b16 %v2891
    %v3195 = vunpack.c.h.b16 %v2891
    %v3196 = vunpack.c.l.b16 %v2892
    %v3197 = vunpack.c.h.b16 %v2892
    %v3198 = vunpack.c.l.b16 %v2893
    %v3199 = vunpack.c.h.b16 %v2893
    %v3200 = vunpack.c.l.b16 %v2894
    %v3201 = vunpack.c.h.b16 %v2894
    %v3202 = vunpack.c.l.b16 %v2895
    %v3203 = vunpack.c.h.b16 %v2895
    %v3204 = vunpack.c.l.b16 %v2896
    %v3205 = vunpack.c.h.b16 %v2896
    %v3206 = vunpack.c.l.b16 %v2897
    %v3207 = vunpack.c.h.b16 %v2897
    %v3208 = vpack.c.b16 %v3020, %v3016
    %v3209 = vpack.c.b16 %v3021, %v3017
    %v3210 = vpack.c.b16 %v3022, %v3018
    %v3211 = vpack.c.b16 %v3023, %v3019
    %v3212 = vpack.c.b16 %v3028, %v3024
    %v3213 = vpack.c.b16 %v3029, %v3025
    %v3214 = vpack.c.b16 %v3030, %v3026
    %v3215 = vpack.c.b16 %v3031, %v3027
    %v3216 = vpack.c.b16 %v3036, %v3032
    %v3217 = vpack.c.b16 %v3037, %v3033
    %v3218 = vpack.c.b16 %v3038, %v3034
    %v3219 = vpack.c.b16 %v3039, %v3035
    %v3220 = vpack.c.b16 %v3044, %v3040
    %v3221 = vpack.c.b16 %v3045, %v3041
    %v3222 = vpack.c.b16 %v3046, %v3042
    %v3223 = vpack.c.b16 %v3047, %v3043
    %v3224 = vpack.c.b16 %v3052, %v3048
    %v3225 = vpack.c.b16 %v3053, %v3049
    %v3226 = vpack.c.b16 %v3054, %v3050
    %v3227 = vpack.c.b16 %v3055, %v3051
    %v3228 = vpack.c.b16 %v3060, %v3056
    %v3229 = vpack.c.b16 %v3061, %v3057
    %v3230 = vpack.c.b16 %v3062, %v3058
    %v3231 = vpack.c.b16 %v3063, %v3059
    %v3232 = vpack.c.b16 %v3068, %v3064
    %v3233 = vpack.c.b16 %v3069, %v3065
    %v3234 = vpack.c.b16 %v3070, %v3066
    %v3235 = vpack.c.b16 %v3071, %v3067
    %v3236 = vpack.c.b16 %v3076, %v3072
    %v3237 = vpack.c.b16 %v3077, %v3073
    %v3238 = vpack.c.b16 %v3078, %v3074
    %v3239 = vpack.c.b16 %v3079, %v3075
    %v3240 = vpack.c.b16 %v3084, %v3080
    %v3241 = vpack.c.b16 %v3085, %v3081
    %v3242 = vpack.c.b16 %v3086, %v3082
    %v3243 = vpack.c.b16 %v3087, %v3083
    %v3244 = vpack.c.b16 %v3092, %v3088
    %v3245 = vpack.c.b16 %v3093, %v3089
    %v3246 = vpack.c.b16 %v3094, %v3090
    %v3247 = vpack.c.b16 %v3095, %v3091
    %v3248 = vpack.c.b16 %v3100, %v3096
    %v3249 = vpack.c.b16 %v3101, %v3097
    %v3250 = vpack.c.b16 %v3102, %v3098
    %v3251 = vpack.c.b16 %v3103, %v3099
    %v3252 = vpack.c.b16 %v3108, %v3104
    %v3253 = vpack.c.b16 %v3109, %v3105
    %v3254 = vpack.c.b16 %v3110, %v3106
    %v3255 = vpack.c.b16 %v3111, %v3107
    %v3256 = vpack.c.b16 %v3116, %v3112
    %v3257 = vpack.c.b16 %v3117, %v3113
    %v3258 = vpack.c.b16 %v3118, %v3114
    %v3259 = vpack.c.b16 %v3119, %v3115
    %v3260 = vpack.c.b16 %v3124, %v3120
    %v3261 = vpack.c.b16 %v3125, %v3121
    %v3262 = vpack.c.b16 %v3126, %v3122
    %v3263 = vpack.c.b16 %v3127, %v3123
    %v3264 = vpack.c.b16 %v3132, %v3128
    %v3265 = vpack.c.b16 %v3133, %v3129
    %v3266 = vpack.c.b16 %v3134, %v3130
    %v3267 = vpack.c.b16 %v3135, %v3131
    %v3268 = vpack.c.b16 %v3140, %v3136
    %v3269 = vpack.c.b16 %v3141, %v3137
    %v3270 = vpack.c.b16 %v3142, %v3138
    %v3271 = vpack.c.b16 %v3143, %v3139
    %v3272 = vpack.c.b16 %v3148, %v3144
    %v3273 = vpack.c.b16 %v3149, %v3145
    %v3274 = vpack.c.b16 %v3150, %v3146
    %v3275 = vpack.c.b16 %v3151, %v3147
    %v3276 = vpack.c.b16 %v3156, %v3152
    %v3277 = vpack.c.b16 %v3157, %v3153
    %v3278 = vpack.c.b16 %v3158, %v3154
    %v3279 = vpack.c.b16 %v3159, %v3155
    %v3280 = vpack.c.b16 %v3164, %v3160
    %v3281 = vpack.c.b16 %v3165, %v3161
    %v3282 = vpack.c.b16 %v3166, %v3162
    %v3283 = vpack.c.b16 %v3167, %v3163
    %v3284 = vpack.c.b16 %v3172, %v3168
    %v3285 = vpack.c.b16 %v3173, %v3169
    %v3286 = vpack.c.b16 %v3174, %v3170
    %v3287 = vpack.c.b16 %v3175, %v3171
    %v3288 = vpack.c.b16 %v3180, %v3176
    %v3289 = vpack.c.b16 %v3181, %v3177
    %v3290 = vpack.c.b16 %v3182, %v3178
    %v3291 = vpack.c.b16 %v3183, %v3179
    %v3292 = vpack.c.b16 %v3188, %v3184
    %v3293 = vpack.c.b16 %v3189, %v3185
    %v3294 = vpack.c.b16 %v3190, %v3186
    %v3295 = vpack.c.b16 %v3191, %v3187
    %v3296 = vpack.c.b16 %v3196, %v3192
    %v3297 = vpack.c.b16 %v3197, %v3193
    %v3298 = vpack.c.b16 %v3198, %v3194
    %v3299 = vpack.c.b16 %v3199, %v3195
    %v3300 = vpack.c.b16 %v3204, %v3200
    %v3301 = vpack.c.b16 %v3205, %v3201
    %v3302 = vpack.c.b16 %v3206, %v3202
    %v3303 = vpack.c.b16 %v3207, %v3203
    %3400 = vmatprep.subr.bf16.mxu0 %v3237
    %3401 = vmatpush1.bf16.msra.mxu0 %v3236
    %3402 = vmatprep.subr.bf16.mxu0 %v3233
    %3403 = vmatpush1.bf16.msra.mxu0 %v3232
    %3404 = vmatprep.subr.bf16.mxu0 %v3229
    %3405 = vmatpush1.bf16.msra.mxu0 %v3228
    %3406 = vmatprep.subr.bf16.mxu0 %v3225
    %3407 = vmatpush1.bf16.msra.mxu0 %v3224
    %3408 = vmatprep.subr.bf16.mxu0 %v3221
    %3409 = vmatpush1.bf16.msra.mxu0 %v3220
    %3410 = vmatprep.subr.bf16.mxu0 %v3217
    %3411 = vmatpush1.bf16.msra.mxu0 %v3216
    %3412 = vmatprep.subr.bf16.mxu0 %v3213
    %3413 = vmatpush1.bf16.msra.mxu0 %v3212
    %3414 = vmatprep.subr.bf16.mxu0 %v3209
    %3415 = vmatpush1.bf16.msra.mxu0 %v3208
    %3416 = vmatprep.subr.bf16.mxu0 %v3269
    %3417 = vmatpush2.bf16.msra.mxu0 %v3268
    %3418 = vmatprep.subr.bf16.mxu0 %v3265
    %3419 = vmatpush2.bf16.msra.mxu0 %v3264
    %3420 = vmatprep.subr.bf16.mxu0 %v3261
    %3421 = vmatpush2.bf16.msra.mxu0 %v3260
    %3422 = vmatprep.subr.bf16.mxu0 %v3257
    %3423 = vmatpush2.bf16.msra.mxu0 %v3256
    %3424 = vmatprep.subr.bf16.mxu0 %v3253
    %3425 = vmatpush2.bf16.msra.mxu0 %v3252
    %3426 = vmatprep.subr.bf16.mxu0 %v3249
    %3427 = vmatpush2.bf16.msra.mxu0 %v3248
    %3428 = vmatprep.subr.bf16.mxu0 %v3245
    %3429 = vmatpush2.bf16.msra.mxu0 %v3244
    %3430 = vmatprep.subr.bf16.mxu0 %v3241
    %3431 = vmatpush2.bf16.msra.mxu0 %v3240
    %3432 = vmatprep.mubr.bf16.mxu0 %v406
    %3433 = vmatmul.mubr.bf16.gmra.mxu0 %v405
    %v3434 = vpop.f32.mrf.mxu0
    %v3435 = vadd.f32 %v2903, %v3434
    %v3436 = vpop.f32.mrf.mxu0
    %v3437 = vadd.f32 %v2907, %v3436
    %v3438 = vpop.f32.mrf.mxu0
    %v3439 = vpop.f32.mrf.mxu0
    %3440 = vdwg.mxu0
    %3441 = vmatprep.subr.bf16.mxu0 %v3301
    %3442 = vmatpush1.bf16.msra.mxu0 %v3300
    %3443 = vmatprep.subr.bf16.mxu0 %v3297
    %3444 = vmatpush1.bf16.msra.mxu0 %v3296
    %3445 = vmatprep.subr.bf16.mxu0 %v3293
    %3446 = vmatpush1.bf16.msra.mxu0 %v3292
    %3447 = vmatprep.subr.bf16.mxu0 %v3289
    %3448 = vmatpush1.bf16.msra.mxu0 %v3288
    %3449 = vmatprep.subr.bf16.mxu0 %v3285
    %3450 = vmatpush1.bf16.msra.mxu0 %v3284
    %3451 = vmatprep.subr.bf16.mxu0 %v3281
    %3452 = vmatpush1.bf16.msra.mxu0 %v3280
    %3453 = vmatprep.subr.bf16.mxu0 %v3277
    %3454 = vmatpush1.bf16.msra.mxu0 %v3276
    %3455 = vmatprep.subr.bf16.mxu0 %v3273
    %3456 = vmatpush1.bf16.msra.mxu0 %v3272
    %3457 = vmatprep.subr.bf16.mxu0 0
    %3458 = vmatpush2.bf16.msra.mxu0 0
    %3459 = vmatprep.subr.bf16.mxu0 0
    %3460 = vmatpush2.bf16.msra.mxu0 0
    %3461 = vmatprep.subr.bf16.mxu0 0
    %3462 = vmatpush2.bf16.msra.mxu0 0
    %3463 = vmatprep.subr.bf16.mxu0 0
    %3464 = vmatpush2.bf16.msra.mxu0 0
    %3465 = vmatprep.subr.bf16.mxu0 0
    %3466 = vmatpush2.bf16.msra.mxu0 0
    %3467 = vmatprep.subr.bf16.mxu0 0
    %3468 = vmatpush2.bf16.msra.mxu0 0
    %3469 = vmatprep.subr.bf16.mxu0 0
    %3470 = vmatpush2.bf16.msra.mxu0 0
    %3471 = vmatprep.subr.bf16.mxu0 0
    %3472 = vmatpush2.bf16.msra.mxu0 0
    %3473 = vmatprep.mubr.bf16.mxu0 0
    %3474 = vmatmul.mubr.bf16.gmra.mxu0 %v407
    %v3475 = vpop.f32.mrf.mxu0
    %v3476 = vadd.f32 %v3435, %v3475
    %v3477 = vpop.f32.mrf.mxu0
    %v3478 = vadd.f32 %v3437, %v3477
    %v3479 = vpop.f32.mrf.mxu0
    %v3480 = vpop.f32.mrf.mxu0
    %3481 = vdwg.mxu0
    %3482 = vmatprep.subr.bf16.mxu0 %v3239
    %3483 = vmatpush1.bf16.msra.mxu0 %v3238
    %3484 = vmatprep.subr.bf16.mxu0 %v3235
    %3485 = vmatpush1.bf16.msra.mxu0 %v3234
    %3486 = vmatprep.subr.bf16.mxu0 %v3231
    %3487 = vmatpush1.bf16.msra.mxu0 %v3230
    %3488 = vmatprep.subr.bf16.mxu0 %v3227
    %3489 = vmatpush1.bf16.msra.mxu0 %v3226
    %3490 = vmatprep.subr.bf16.mxu0 %v3223
    %3491 = vmatpush1.bf16.msra.mxu0 %v3222
    %3492 = vmatprep.subr.bf16.mxu0 %v3219
    %3493 = vmatpush1.bf16.msra.mxu0 %v3218
    %3494 = vmatprep.subr.bf16.mxu0 %v3215
    %3495 = vmatpush1.bf16.msra.mxu0 %v3214
    %3496 = vmatprep.subr.bf16.mxu0 %v3211
    %3497 = vmatpush1.bf16.msra.mxu0 %v3210
    %3498 = vmatprep.subr.bf16.mxu0 %v3271
    %3499 = vmatpush2.bf16.msra.mxu0 %v3270
    %3500 = vmatprep.subr.bf16.mxu0 %v3267
    %3501 = vmatpush2.bf16.msra.mxu0 %v3266
    %3502 = vmatprep.subr.bf16.mxu0 %v3263
    %3503 = vmatpush2.bf16.msra.mxu0 %v3262
    %3504 = vmatprep.subr.bf16.mxu0 %v3259
    %3505 = vmatpush2.bf16.msra.mxu0 %v3258
    %3506 = vmatprep.subr.bf16.mxu0 %v3255
    %3507 = vmatpush2.bf16.msra.mxu0 %v3254
    %3508 = vmatprep.subr.bf16.mxu0 %v3251
    %3509 = vmatpush2.bf16.msra.mxu0 %v3250
    %3510 = vmatprep.subr.bf16.mxu0 %v3247
    %3511 = vmatpush2.bf16.msra.mxu0 %v3246
    %3512 = vmatprep.subr.bf16.mxu0 %v3243
    %3513 = vmatpush2.bf16.msra.mxu0 %v3242
    %3514 = vmatprep.mubr.bf16.mxu0 %v406
    %3515 = vmatmul.mubr.bf16.gmra.mxu0 %v405
    %v3516 = vpop.f32.mrf.mxu0
    %v3517 = vadd.f32 %v2911, %v3516
    %v3518 = vpop.f32.mrf.mxu0
    %v3519 = vadd.f32 %v2915, %v3518
    %v3520 = vpop.f32.mrf.mxu0
    %v3521 = vpop.f32.mrf.mxu0
    %3522 = vdwg.mxu0
    %3523 = vmatprep.subr.bf16.mxu0 %v3303
    %3524 = vmatpush1.bf16.msra.mxu0 %v3302
    %3525 = vmatprep.subr.bf16.mxu0 %v3299
    %3526 = vmatpush1.bf16.msra.mxu0 %v3298
    %3527 = vmatprep.subr.bf16.mxu0 %v3295
    %3528 = vmatpush1.bf16.msra.mxu0 %v3294
    %3529 = vmatprep.subr.bf16.mxu0 %v3291
    %3530 = vmatpush1.bf16.msra.mxu0 %v3290
    %3531 = vmatprep.subr.bf16.mxu0 %v3287
    %3532 = vmatpush1.bf16.msra.mxu0 %v3286
    %3533 = vmatprep.subr.bf16.mxu0 %v3283
    %3534 = vmatpush1.bf16.msra.mxu0 %v3282
    %3535 = vmatprep.subr.bf16.mxu0 %v3279
    %3536 = vmatpush1.bf16.msra.mxu0 %v3278
    %3537 = vmatprep.subr.bf16.mxu0 %v3275
    %3538 = vmatpush1.bf16.msra.mxu0 %v3274
    %3539 = vmatprep.subr.bf16.mxu0 0
    %3540 = vmatpush2.bf16.msra.mxu0 0
    %3541 = vmatprep.subr.bf16.mxu0 0
    %3542 = vmatpush2.bf16.msra.mxu0 0
    %3543 = vmatprep.subr.bf16.mxu0 0
    %3544 = vmatpush2.bf16.msra.mxu0 0
    %3545 = vmatprep.subr.bf16.mxu0 0
    %3546 = vmatpush2.bf16.msra.mxu0 0
    %3547 = vmatprep.subr.bf16.mxu0 0
    %3548 = vmatpush2.bf16.msra.mxu0 0
    %3549 = vmatprep.subr.bf16.mxu0 0
    %3550 = vmatpush2.bf16.msra.mxu0 0
    %3551 = vmatprep.subr.bf16.mxu0 0
    %3552 = vmatpush2.bf16.msra.mxu0 0
    %3553 = vmatprep.subr.bf16.mxu0 0
    %3554 = vmatpush2.bf16.msra.mxu0 0
    %3555 = vmatprep.mubr.bf16.mxu0 0
    %3556 = vmatmul.mubr.bf16.gmra.mxu0 %v407
    %v3557 = vpop.f32.mrf.mxu0
    %v3558 = vadd.f32 %v3517, %v3557
    %v3559 = vpop.f32.mrf.mxu0
    %v3560 = vadd.f32 %v3519, %v3559
    %v3561 = vpop.f32.mrf.mxu0
    %v3562 = vpop.f32.mrf.mxu0
    %3563 = vdwg.mxu0
    %v3564 = vmax.f32 %v3476, 0.0
    %v3565 = vmax.f32 %v3478, 0.0
    %v3566 = vmax.f32 %v3558, 0.0
    %v3567 = vmax.f32 %v3560, 0.0
    %v3568 = vld [vmem:[#allocation13 + $0xc] sm:$0xf]
    %v3570 = vlaneseq
    %v3571 = vshrl.u32 %v3570, 7
    %v3572 = vsub.s32 0, %v3571
    %v3573 = vrot.slane %v3568, %v3572
    %v3574 = vlaneseq
    %v3575 = vshrl.u32 %v3574, 7
    %v3576 = vsub.s32 1, %v3575
    %v3577 = vrot.slane %v3568, %v3576
    %v3578 = vlaneseq
    %v3579 = vshrl.u32 %v3578, 7
    %v3580 = vsub.s32 2, %v3579
    %v3581 = vrot.slane %v3568, %v3580
    %v3582 = vlaneseq
    %v3583 = vshrl.u32 %v3582, 7
    %v3584 = vsub.s32 3, %v3583
    %v3585 = vrot.slane %v3568, %v3584
    %v3590 = vmul.f32 %v3564, %v3573
    %v3591 = vmul.f32 %v3565, %v3577
    %v3592 = vmul.f32 %v3566, %v3581
    %v3593 = vmul.f32 %v3567, %v3585
    %v3594 = vadd.f32 %v3590, %v3591
    %v3595 = vadd.f32 %v3594, %v3592
    %v3596 = vadd.f32 %v3595, %v3593
    %3597 = vadd.xlane.f32.xlu0 %v3596
    %v3598 = vpop.xlane.xlu0 %3597
    %v3599 = vadd.f32 %v2801, %v3598
    %v3600 = vld [vmem:[#allocation10 + $0x40] sm:$0xff]
    %v3601 = vld [vmem:[#allocation10 + $0x48] sm:$0xff]
    %v3602 = vld [vmem:[#allocation10 + $0xa0] sm:$0xff]
    %v3603 = vld [vmem:[#allocation10 + $0xa8] sm:$0xff]
    %v3604 = vld [vmem:[#allocation10 + $0x100] sm:$0xff]
    %v3605 = vld [vmem:[#allocation10 + $0x108] sm:$0xff]
    %v3606 = vld [vmem:[#allocation10 + $0x160] sm:$0xff]
    %v3607 = vld [vmem:[#allocation10 + $0x168] sm:$0xff]
    %v3608 = vld [vmem:[#allocation10 + $0x1c0] sm:$0xff]
    %v3609 = vld [vmem:[#allocation10 + $0x1c8] sm:$0xff]
    %v3610 = vld [vmem:[#allocation10 + $0x220] sm:$0xff]
    %v3611 = vld [vmem:[#allocation10 + $0x228] sm:$0xff]
    %v3612 = vld [vmem:[#allocation10 + $0x280] sm:$0xff]
    %v3613 = vld [vmem:[#allocation10 + $0x288] sm:$0xff]
    %v3614 = vld [vmem:[#allocation10 + $0x2e0] sm:$0xff]
    %v3615 = vld [vmem:[#allocation10 + $0x2e8] sm:$0xff]
    %v3616 = vld [vmem:[#allocation10 + $0x340] sm:$0xff]
    %v3617 = vld [vmem:[#allocation10 + $0x348] sm:$0xff]
    %v3618 = vld [vmem:[#allocation10 + $0x3a0] sm:$0xff]
    %v3619 = vld [vmem:[#allocation10 + $0x3a8] sm:$0xff]
    %v3620 = vld [vmem:[#allocation10 + $0x400] sm:$0xff]
    %v3621 = vld [vmem:[#allocation10 + $0x408] sm:$0xff]
    %v3622 = vld [vmem:[#allocation10 + $0x460] sm:$0xff]
    %v3623 = vld [vmem:[#allocation10 + $0x468] sm:$0xff]
    %v3624 = vld [vmem:[#allocation10 + $0x4c0] sm:$0xff]
    %v3625 = vld [vmem:[#allocation10 + $0x4c8] sm:$0xff]
    %v3626 = vld [vmem:[#allocation10 + $0x520] sm:$0xff]
    %v3627 = vld [vmem:[#allocation10 + $0x528] sm:$0xff]
    %v3628 = vld [vmem:[#allocation10 + $0x580] sm:$0xff]
    %v3629 = vld [vmem:[#allocation10 + $0x588] sm:$0xff]
    %v3630 = vld [vmem:[#allocation10 + $0x5e0] sm:$0xff]
    %v3631 = vld [vmem:[#allocation10 + $0x5e8] sm:$0xff]
    %v3632 = vld [vmem:[#allocation10 + $0x640] sm:$0xff]
    %v3633 = vld [vmem:[#allocation10 + $0x648] sm:$0xff]
    %v3634 = vld [vmem:[#allocation10 + $0x6a0] sm:$0xff]
    %v3635 = vld [vmem:[#allocation10 + $0x6a8] sm:$0xff]
    %v3636 = vld [vmem:[#allocation10 + $0x700] sm:$0xff]
    %v3637 = vld [vmem:[#allocation10 + $0x708] sm:$0xff]
    %v3638 = vld [vmem:[#allocation10 + $0x760] sm:$0xff]
    %v3639 = vld [vmem:[#allocation10 + $0x768] sm:$0xff]
    %v3640 = vld [vmem:[#allocation10 + $0x7c0] sm:$0xff]
    %v3641 = vld [vmem:[#allocation10 + $0x7c8] sm:$0xff]
    %v3642 = vld [vmem:[#allocation10 + $0x820] sm:$0xff]
    %v3643 = vld [vmem:[#allocation10 + $0x828] sm:$0xff]
    %v3644 = vld [vmem:[#allocation10 + $0x880] sm:$0xff]
    %v3645 = vld [vmem:[#allocation10 + $0x888] sm:$0xff]
    %v3646 = vld [vmem:[#allocation10 + $0x8e0] sm:$0xff]
    %v3647 = vld [vmem:[#allocation10 + $0x8e8] sm:$0xff]
    %v3648 = vld [vmem:[#allocation10 + $0x940] sm:$0xff]
    %v3649 = vld [vmem:[#allocation10 + $0x948] sm:$0xff]
    %v3650 = vld [vmem:[#allocation10 + $0x9a0] sm:$0xff]
    %v3651 = vld [vmem:[#allocation10 + $0x9a8] sm:$0xff]
    %v3652 = vld [vmem:[#allocation10 + $0xa00] sm:$0xff]
    %v3653 = vld [vmem:[#allocation10 + $0xa08] sm:$0xff]
    %v3654 = vld [vmem:[#allocation10 + $0xa60] sm:$0xff]
    %v3655 = vld [vmem:[#allocation10 + $0xa68] sm:$0xff]
    %v3656 = vld [vmem:[#allocation10 + $0xac0] sm:$0xff]
    %v3657 = vld [vmem:[#allocation10 + $0xac8] sm:$0xff]
    %v3658 = vld [vmem:[#allocation10 + $0xb20] sm:$0xff]
    %v3659 = vld [vmem:[#allocation10 + $0xb28] sm:$0xff]
    %v3660 = vld [vmem:[#allocation10 + $0xb80] sm:$0xff]
    %v3661 = vld [vmem:[#allocation10 + $0xb88] sm:$0xff]
    %v3662 = vld [vmem:[#allocation10 + $0xbe0] sm:$0xff]
    %v3663 = vld [vmem:[#allocation10 + $0xbe8] sm:$0xff]
    %v3664 = vld [vmem:[#allocation10 + $0xc40] sm:$0xff]
    %v3665 = vld [vmem:[#allocation10 + $0xc48] sm:$0xff]
    %v3666 = vld [vmem:[#allocation10 + $0xca0] sm:$0xff]
    %v3667 = vld [vmem:[#allocation10 + $0xca8] sm:$0xff]
    %v3668 = vld [vmem:[#allocation10 + $0xd00] sm:$0xff]
    %v3669 = vld [vmem:[#allocation10 + $0xd08] sm:$0xff]
    %v3670 = vld [vmem:[#allocation10 + $0xd60] sm:$0xff]
    %v3671 = vld [vmem:[#allocation10 + $0xd68] sm:$0xff]
    %v3672 = vld [vmem:[#allocation10 + $0xdc0] sm:$0xff]
    %v3673 = vld [vmem:[#allocation10 + $0xdc8] sm:$0xff]
    %v3674 = vld [vmem:[#allocation10 + $0xe20] sm:$0xff]
    %v3675 = vld [vmem:[#allocation10 + $0xe28] sm:$0xff]
    %v3676 = vld [vmem:[#allocation10 + $0xe80] sm:$0xff]
    %v3677 = vld [vmem:[#allocation10 + $0xe88] sm:$0xff]
    %v3678 = vld [vmem:[#allocation10 + $0xee0] sm:$0xff]
    %v3679 = vld [vmem:[#allocation10 + $0xee8] sm:$0xff]
    %v3680 = vld [vmem:[#allocation10 + $0xf40] sm:$0xff]
    %v3681 = vld [vmem:[#allocation10 + $0xf48] sm:$0xff]
    %v3682 = vld [vmem:[#allocation10 + $0xfa0] sm:$0xff]
    %v3683 = vld [vmem:[#allocation10 + $0xfa8] sm:$0xff]
    %v3684 = vld [vmem:[#allocation10 + $0x1000] sm:$0xff]
    %v3685 = vld [vmem:[#allocation10 + $0x1008] sm:$0xff]
    %v3686 = vld [vmem:[#allocation10 + $0x1060] sm:$0xff]
    %v3687 = vld [vmem:[#allocation10 + $0x1068] sm:$0xff]
    %v3688 = vld [vmem:[#allocation10 + $0x10c0] sm:$0xff]
    %v3689 = vld [vmem:[#allocation10 + $0x10c8] sm:$0xff]
    %v3690 = vld [vmem:[#allocation10 + $0x1120] sm:$0xff]
    %v3691 = vld [vmem:[#allocation10 + $0x1128] sm:$0xff]
    %v3692 = vld [vmem:[#allocation10 + $0x1180] sm:$0xff]
    %v3693 = vld [vmem:[#allocation10 + $0x1188] sm:$0xff]
    %v3694 = vld [vmem:[#allocation10 + $0x11e0] sm:$0xff]
    %v3695 = vld [vmem:[#allocation10 + $0x11e8] sm:$0xff]
    %v3696 = vld [vmem:[#allocation11 + $0x10] sm:$0xf]
    %v3698 = vlaneseq
    %v3699 = vshrl.u32 %v3698, 7
    %v3700 = vsub.s32 0, %v3699
    %v3701 = vrot.slane %v3696, %v3700
    %v3702 = vlaneseq
    %v3703 = vshrl.u32 %v3702, 7
    %v3704 = vsub.s32 1, %v3703
    %v3705 = vrot.slane %v3696, %v3704
    %v3706 = vlaneseq
    %v3707 = vshrl.u32 %v3706, 7
    %v3708 = vsub.s32 2, %v3707
    %v3709 = vrot.slane %v3696, %v3708
    %v3710 = vlaneseq
    %v3711 = vshrl.u32 %v3710, 7
    %v3712 = vsub.s32 3, %v3711
    %v3713 = vrot.slane %v3696, %v3712
    %v3814 = vunpack.c.l.b16 %v3600
    %v3815 = vunpack.c.h.b16 %v3600
    %v3816 = vunpack.c.l.b16 %v3601
    %v3817 = vunpack.c.h.b16 %v3601
    %v3818 = vunpack.c.l.b16 %v3602
    %v3819 = vunpack.c.h.b16 %v3602
    %v3820 = vunpack.c.l.b16 %v3603
    %v3821 = vunpack.c.h.b16 %v3603
    %v3822 = vunpack.c.l.b16 %v3604
    %v3823 = vunpack.c.h.b16 %v3604
    %v3824 = vunpack.c.l.b16 %v3605
    %v3825 = vunpack.c.h.b16 %v3605
    %v3826 = vunpack.c.l.b16 %v3606
    %v3827 = vunpack.c.h.b16 %v3606
    %v3828 = vunpack.c.l.b16 %v3607
    %v3829 = vunpack.c.h.b16 %v3607
    %v3830 = vunpack.c.l.b16 %v3608
    %v3831 = vunpack.c.h.b16 %v3608
    %v3832 = vunpack.c.l.b16 %v3609
    %v3833 = vunpack.c.h.b16 %v3609
    %v3834 = vunpack.c.l.b16 %v3610
    %v3835 = vunpack.c.h.b16 %v3610
    %v3836 = vunpack.c.l.b16 %v3611
    %v3837 = vunpack.c.h.b16 %v3611
    %v3838 = vunpack.c.l.b16 %v3612
    %v3839 = vunpack.c.h.b16 %v3612
    %v3840 = vunpack.c.l.b16 %v3613
    %v3841 = vunpack.c.h.b16 %v3613
    %v3842 = vunpack.c.l.b16 %v3614
    %v3843 = vunpack.c.h.b16 %v3614
    %v3844 = vunpack.c.l.b16 %v3615
    %v3845 = vunpack.c.h.b16 %v3615
    %v3846 = vunpack.c.l.b16 %v3616
    %v3847 = vunpack.c.h.b16 %v3616
    %v3848 = vunpack.c.l.b16 %v3617
    %v3849 = vunpack.c.h.b16 %v3617
    %v3850 = vunpack.c.l.b16 %v3618
    %v3851 = vunpack.c.h.b16 %v3618
    %v3852 = vunpack.c.l.b16 %v3619
    %v3853 = vunpack.c.h.b16 %v3619
    %v3854 = vunpack.c.l.b16 %v3620
    %v3855 = vunpack.c.h.b16 %v3620
    %v3856 = vunpack.c.l.b16 %v3621
    %v3857 = vunpack.c.h.b16 %v3621
    %v3858 = vunpack.c.l.b16 %v3622
    %v3859 = vunpack.c.h.b16 %v3622
    %v3860 = vunpack.c.l.b16 %v3623
    %v3861 = vunpack.c.h.b16 %v3623
    %v3862 = vunpack.c.l.b16 %v3624
    %v3863 = vunpack.c.h.b16 %v3624
    %v3864 = vunpack.c.l.b16 %v3625
    %v3865 = vunpack.c.h.b16 %v3625
    %v3866 = vunpack.c.l.b16 %v3626
    %v3867 = vunpack.c.h.b16 %v3626
    %v3868 = vunpack.c.l.b16 %v3627
    %v3869 = vunpack.c.h.b16 %v3627
    %v3870 = vunpack.c.l.b16 %v3628
    %v3871 = vunpack.c.h.b16 %v3628
    %v3872 = vunpack.c.l.b16 %v3629
    %v3873 = vunpack.c.h.b16 %v3629
    %v3874 = vunpack.c.l.b16 %v3630
    %v3875 = vunpack.c.h.b16 %v3630
    %v3876 = vunpack.c.l.b16 %v3631
    %v3877 = vunpack.c.h.b16 %v3631
    %v3878 = vunpack.c.l.b16 %v3632
    %v3879 = vunpack.c.h.b16 %v3632
    %v3880 = vunpack.c.l.b16 %v3633
    %v3881 = vunpack.c.h.b16 %v3633
    %v3882 = vunpack.c.l.b16 %v3634
    %v3883 = vunpack.c.h.b16 %v3634
    %v3884 = vunpack.c.l.b16 %v3635
    %v3885 = vunpack.c.h.b16 %v3635
    %v3886 = vunpack.c.l.b16 %v3636
    %v3887 = vunpack.c.h.b16 %v3636
    %v3888 = vunpack.c.l.b16 %v3637
    %v3889 = vunpack.c.h.b16 %v3637
    %v3890 = vunpack.c.l.b16 %v3638
    %v3891 = vunpack.c.h.b16 %v3638
    %v3892 = vunpack.c.l.b16 %v3639
    %v3893 = vunpack.c.h.b16 %v3639
    %v3894 = vunpack.c.l.b16 %v3640
    %v3895 = vunpack.c.h.b16 %v3640
    %v3896 = vunpack.c.l.b16 %v3641
    %v3897 = vunpack.c.h.b16 %v3641
    %v3898 = vunpack.c.l.b16 %v3642
    %v3899 = vunpack.c.h.b16 %v3642
    %v3900 = vunpack.c.l.b16 %v3643
    %v3901 = vunpack.c.h.b16 %v3643
    %v3902 = vunpack.c.l.b16 %v3644
    %v3903 = vunpack.c.h.b16 %v3644
    %v3904 = vunpack.c.l.b16 %v3645
    %v3905 = vunpack.c.h.b16 %v3645
    %v3906 = vunpack.c.l.b16 %v3646
    %v3907 = vunpack.c.h.b16 %v3646
    %v3908 = vunpack.c.l.b16 %v3647
    %v3909 = vunpack.c.h.b16 %v3647
    %v3910 = vunpack.c.l.b16 %v3648
    %v3911 = vunpack.c.h.b16 %v3648
    %v3912 = vunpack.c.l.b16 %v3649
    %v3913 = vunpack.c.h.b16 %v3649
    %v3914 = vunpack.c.l.b16 %v3650
    %v3915 = vunpack.c.h.b16 %v3650
    %v3916 = vunpack.c.l.b16 %v3651
    %v3917 = vunpack.c.h.b16 %v3651
    %v3918 = vunpack.c.l.b16 %v3652
    %v3919 = vunpack.c.h.b16 %v3652
    %v3920 = vunpack.c.l.b16 %v3653
    %v3921 = vunpack.c.h.b16 %v3653
    %v3922 = vunpack.c.l.b16 %v3654
    %v3923 = vunpack.c.h.b16 %v3654
    %v3924 = vunpack.c.l.b16 %v3655
    %v3925 = vunpack.c.h.b16 %v3655
    %v3926 = vunpack.c.l.b16 %v3656
    %v3927 = vunpack.c.h.b16 %v3656
    %v3928 = vunpack.c.l.b16 %v3657
    %v3929 = vunpack.c.h.b16 %v3657
    %v3930 = vunpack.c.l.b16 %v3658
    %v3931 = vunpack.c.h.b16 %v3658
    %v3932 = vunpack.c.l.b16 %v3659
    %v3933 = vunpack.c.h.b16 %v3659
    %v3934 = vunpack.c.l.b16 %v3660
    %v3935 = vunpack.c.h.b16 %v3660
    %v3936 = vunpack.c.l.b16 %v3661
    %v3937 = vunpack.c.h.b16 %v3661
    %v3938 = vunpack.c.l.b16 %v3662
    %v3939 = vunpack.c.h.b16 %v3662
    %v3940 = vunpack.c.l.b16 %v3663
    %v3941 = vunpack.c.h.b16 %v3663
    %v3942 = vunpack.c.l.b16 %v3664
    %v3943 = vunpack.c.h.b16 %v3664
    %v3944 = vunpack.c.l.b16 %v3665
    %v3945 = vunpack.c.h.b16 %v3665
    %v3946 = vunpack.c.l.b16 %v3666
    %v3947 = vunpack.c.h.b16 %v3666
    %v3948 = vunpack.c.l.b16 %v3667
    %v3949 = vunpack.c.h.b16 %v3667
    %v3950 = vunpack.c.l.b16 %v3668
    %v3951 = vunpack.c.h.b16 %v3668
    %v3952 = vunpack.c.l.b16 %v3669
    %v3953 = vunpack.c.h.b16 %v3669
    %v3954 = vunpack.c.l.b16 %v3670
    %v3955 = vunpack.c.h.b16 %v3670
    %v3956 = vunpack.c.l.b16 %v3671
    %v3957 = vunpack.c.h.b16 %v3671
    %v3958 = vunpack.c.l.b16 %v3672
    %v3959 = vunpack.c.h.b16 %v3672
    %v3960 = vunpack.c.l.b16 %v3673
    %v3961 = vunpack.c.h.b16 %v3673
    %v3962 = vunpack.c.l.b16 %v3674
    %v3963 = vunpack.c.h.b16 %v3674
    %v3964 = vunpack.c.l.b16 %v3675
    %v3965 = vunpack.c.h.b16 %v3675
    %v3966 = vunpack.c.l.b16 %v3676
    %v3967 = vunpack.c.h.b16 %v3676
    %v3968 = vunpack.c.l.b16 %v3677
    %v3969 = vunpack.c.h.b16 %v3677
    %v3970 = vunpack.c.l.b16 %v3678
    %v3971 = vunpack.c.h.b16 %v3678
    %v3972 = vunpack.c.l.b16 %v3679
    %v3973 = vunpack.c.h.b16 %v3679
    %v3974 = vunpack.c.l.b16 %v3680
    %v3975 = vunpack.c.h.b16 %v3680
    %v3976 = vunpack.c.l.b16 %v3681
    %v3977 = vunpack.c.h.b16 %v3681
    %v3978 = vunpack.c.l.b16 %v3682
    %v3979 = vunpack.c.h.b16 %v3682
    %v3980 = vunpack.c.l.b16 %v3683
    %v3981 = vunpack.c.h.b16 %v3683
    %v3982 = vunpack.c.l.b16 %v3684
    %v3983 = vunpack.c.h.b16 %v3684
    %v3984 = vunpack.c.l.b16 %v3685
    %v3985 = vunpack.c.h.b16 %v3685
    %v3986 = vunpack.c.l.b16 %v3686
    %v3987 = vunpack.c.h.b16 %v3686
    %v3988 = vunpack.c.l.b16 %v3687
    %v3989 = vunpack.c.h.b16 %v3687
    %v3990 = vunpack.c.l.b16 %v3688
    %v3991 = vunpack.c.h.b16 %v3688
    %v3992 = vunpack.c.l.b16 %v3689
    %v3993 = vunpack.c.h.b16 %v3689
    %v3994 = vunpack.c.l.b16 %v3690
    %v3995 = vunpack.c.h.b16 %v3690
    %v3996 = vunpack.c.l.b16 %v3691
    %v3997 = vunpack.c.h.b16 %v3691
    %v3998 = vunpack.c.l.b16 %v3692
    %v3999 = vunpack.c.h.b16 %v3692
    %v4000 = vunpack.c.l.b16 %v3693
    %v4001 = vunpack.c.h.b16 %v3693
    %v4002 = vunpack.c.l.b16 %v3694
    %v4003 = vunpack.c.h.b16 %v3694
    %v4004 = vunpack.c.l.b16 %v3695
    %v4005 = vunpack.c.h.b16 %v3695
    %v4006 = vpack.c.b16 %v3818, %v3814
    %v4007 = vpack.c.b16 %v3819, %v3815
    %v4008 = vpack.c.b16 %v3820, %v3816
    %v4009 = vpack.c.b16 %v3821, %v3817
    %v4010 = vpack.c.b16 %v3826, %v3822
    %v4011 = vpack.c.b16 %v3827, %v3823
    %v4012 = vpack.c.b16 %v3828, %v3824
    %v4013 = vpack.c.b16 %v3829, %v3825
    %v4014 = vpack.c.b16 %v3834, %v3830
    %v4015 = vpack.c.b16 %v3835, %v3831
    %v4016 = vpack.c.b16 %v3836, %v3832
    %v4017 = vpack.c.b16 %v3837, %v3833
    %v4018 = vpack.c.b16 %v3842, %v3838
    %v4019 = vpack.c.b16 %v3843, %v3839
    %v4020 = vpack.c.b16 %v3844, %v3840
    %v4021 = vpack.c.b16 %v3845, %v3841
    %v4022 = vpack.c.b16 %v3850, %v3846
    %v4023 = vpack.c.b16 %v3851, %v3847
    %v4024 = vpack.c.b16 %v3852, %v3848
    %v4025 = vpack.c.b16 %v3853, %v3849
    %v4026 = vpack.c.b16 %v3858, %v3854
    %v4027 = vpack.c.b16 %v3859, %v3855
    %v4028 = vpack.c.b16 %v3860, %v3856
    %v4029 = vpack.c.b16 %v3861, %v3857
    %v4030 = vpack.c.b16 %v3866, %v3862
    %v4031 = vpack.c.b16 %v3867, %v3863
    %v4032 = vpack.c.b16 %v3868, %v3864
    %v4033 = vpack.c.b16 %v3869, %v3865
    %v4034 = vpack.c.b16 %v3874, %v3870
    %v4035 = vpack.c.b16 %v3875, %v3871
    %v4036 = vpack.c.b16 %v3876, %v3872
    %v4037 = vpack.c.b16 %v3877, %v3873
    %v4038 = vpack.c.b16 %v3882, %v3878
    %v4039 = vpack.c.b16 %v3883, %v3879
    %v4040 = vpack.c.b16 %v3884, %v3880
    %v4041 = vpack.c.b16 %v3885, %v3881
    %v4042 = vpack.c.b16 %v3890, %v3886
    %v4043 = vpack.c.b16 %v3891, %v3887
    %v4044 = vpack.c.b16 %v3892, %v3888
    %v4045 = vpack.c.b16 %v3893, %v3889
    %v4046 = vpack.c.b16 %v3898, %v3894
    %v4047 = vpack.c.b16 %v3899, %v3895
    %v4048 = vpack.c.b16 %v3900, %v3896
    %v4049 = vpack.c.b16 %v3901, %v3897
    %v4050 = vpack.c.b16 %v3906, %v3902
    %v4051 = vpack.c.b16 %v3907, %v3903
    %v4052 = vpack.c.b16 %v3908, %v3904
    %v4053 = vpack.c.b16 %v3909, %v3905
    %v4054 = vpack.c.b16 %v3914, %v3910
    %v4055 = vpack.c.b16 %v3915, %v3911
    %v4056 = vpack.c.b16 %v3916, %v3912
    %v4057 = vpack.c.b16 %v3917, %v3913
    %v4058 = vpack.c.b16 %v3922, %v3918
    %v4059 = vpack.c.b16 %v3923, %v3919
    %v4060 = vpack.c.b16 %v3924, %v3920
    %v4061 = vpack.c.b16 %v3925, %v3921
    %v4062 = vpack.c.b16 %v3930, %v3926
    %v4063 = vpack.c.b16 %v3931, %v3927
    %v4064 = vpack.c.b16 %v3932, %v3928
    %v4065 = vpack.c.b16 %v3933, %v3929
    %v4066 = vpack.c.b16 %v3938, %v3934
    %v4067 = vpack.c.b16 %v3939, %v3935
    %v4068 = vpack.c.b16 %v3940, %v3936
    %v4069 = vpack.c.b16 %v3941, %v3937
    %v4070 = vpack.c.b16 %v3946, %v3942
    %v4071 = vpack.c.b16 %v3947, %v3943
    %v4072 = vpack.c.b16 %v3948, %v3944
    %v4073 = vpack.c.b16 %v3949, %v3945
    %v4074 = vpack.c.b16 %v3954, %v3950
    %v4075 = vpack.c.b16 %v3955, %v3951
    %v4076 = vpack.c.b16 %v3956, %v3952
    %v4077 = vpack.c.b16 %v3957, %v3953
    %v4078 = vpack.c.b16 %v3962, %v3958
    %v4079 = vpack.c.b16 %v3963, %v3959
    %v4080 = vpack.c.b16 %v3964, %v3960
    %v4081 = vpack.c.b16 %v3965, %v3961
    %v4082 = vpack.c.b16 %v3970, %v3966
    %v4083 = vpack.c.b16 %v3971, %v3967
    %v4084 = vpack.c.b16 %v3972, %v3968
    %v4085 = vpack.c.b16 %v3973, %v3969
    %v4086 = vpack.c.b16 %v3978, %v3974
    %v4087 = vpack.c.b16 %v3979, %v3975
    %v4088 = vpack.c.b16 %v3980, %v3976
    %v4089 = vpack.c.b16 %v3981, %v3977
    %v4090 = vpack.c.b16 %v3986, %v3982
    %v4091 = vpack.c.b16 %v3987, %v3983
    %v4092 = vpack.c.b16 %v3988, %v3984
    %v4093 = vpack.c.b16 %v3989, %v3985
    %v4094 = vpack.c.b16 %v3994, %v3990
    %v4095 = vpack.c.b16 %v3995, %v3991
    %v4096 = vpack.c.b16 %v3996, %v3992
    %v4097 = vpack.c.b16 %v3997, %v3993
    %v4098 = vpack.c.b16 %v4002, %v3998
    %v4099 = vpack.c.b16 %v4003, %v3999
    %v4100 = vpack.c.b16 %v4004, %v4000
    %v4101 = vpack.c.b16 %v4005, %v4001
    %4198 = vmatprep.subr.bf16.mxu0 %v4035
    %4199 = vmatpush1.bf16.msra.mxu0 %v4034
    %4200 = vmatprep.subr.bf16.mxu0 %v4031
    %4201 = vmatpush1.bf16.msra.mxu0 %v4030
    %4202 = vmatprep.subr.bf16.mxu0 %v4027
    %4203 = vmatpush1.bf16.msra.mxu0 %v4026
    %4204 = vmatprep.subr.bf16.mxu0 %v4023
    %4205 = vmatpush1.bf16.msra.mxu0 %v4022
    %4206 = vmatprep.subr.bf16.mxu0 %v4019
    %4207 = vmatpush1.bf16.msra.mxu0 %v4018
    %4208 = vmatprep.subr.bf16.mxu0 %v4015
    %4209 = vmatpush1.bf16.msra.mxu0 %v4014
    %4210 = vmatprep.subr.bf16.mxu0 %v4011
    %4211 = vmatpush1.bf16.msra.mxu0 %v4010
    %4212 = vmatprep.subr.bf16.mxu0 %v4007
    %4213 = vmatpush1.bf16.msra.mxu0 %v4006
    %4214 = vmatprep.subr.bf16.mxu0 %v4067
    %4215 = vmatpush2.bf16.msra.mxu0 %v4066
    %4216 = vmatprep.subr.bf16.mxu0 %v4063
    %4217 = vmatpush2.bf16.msra.mxu0 %v4062
    %4218 = vmatprep.subr.bf16.mxu0 %v4059
    %4219 = vmatpush2.bf16.msra.mxu0 %v4058
    %4220 = vmatprep.subr.bf16.mxu0 %v4055
    %4221 = vmatpush2.bf16.msra.mxu0 %v4054
    %4222 = vmatprep.subr.bf16.mxu0 %v4051
    %4223 = vmatpush2.bf16.msra.mxu0 %v4050
    %4224 = vmatprep.subr.bf16.mxu0 %v4047
    %4225 = vmatpush2.bf16.msra.mxu0 %v4046
    %4226 = vmatprep.subr.bf16.mxu0 %v4043
    %4227 = vmatpush2.bf16.msra.mxu0 %v4042
    %4228 = vmatprep.subr.bf16.mxu0 %v4039
    %4229 = vmatpush2.bf16.msra.mxu0 %v4038
    %4230 = vmatprep.mubr.bf16.mxu0 %v406
    %4231 = vmatmul.mubr.bf16.gmra.mxu0 %v405
    %v4232 = vpop.f32.mrf.mxu0
    %v4233 = vadd.f32 %v3701, %v4232
    %v4234 = vpop.f32.mrf.mxu0
    %v4235 = vadd.f32 %v3705, %v4234
    %v4236 = vpop.f32.mrf.mxu0
    %v4237 = vpop.f32.mrf.mxu0
    %4238 = vdwg.mxu0
    %4239 = vmatprep.subr.bf16.mxu0 %v4099
    %4240 = vmatpush1.bf16.msra.mxu0 %v4098
    %4241 = vmatprep.subr.bf16.mxu0 %v4095
    %4242 = vmatpush1.bf16.msra.mxu0 %v4094
    %4243 = vmatprep.subr.bf16.mxu0 %v4091
    %4244 = vmatpush1.bf16.msra.mxu0 %v4090
    %4245 = vmatprep.subr.bf16.mxu0 %v4087
    %4246 = vmatpush1.bf16.msra.mxu0 %v4086
    %4247 = vmatprep.subr.bf16.mxu0 %v4083
    %4248 = vmatpush1.bf16.msra.mxu0 %v4082
    %4249 = vmatprep.subr.bf16.mxu0 %v4079
    %4250 = vmatpush1.bf16.msra.mxu0 %v4078
    %4251 = vmatprep.subr.bf16.mxu0 %v4075
    %4252 = vmatpush1.bf16.msra.mxu0 %v4074
    %4253 = vmatprep.subr.bf16.mxu0 %v4071
    %4254 = vmatpush1.bf16.msra.mxu0 %v4070
    %4255 = vmatprep.subr.bf16.mxu0 0
    %4256 = vmatpush2.bf16.msra.mxu0 0
    %4257 = vmatprep.subr.bf16.mxu0 0
    %4258 = vmatpush2.bf16.msra.mxu0 0
    %4259 = vmatprep.subr.bf16.mxu0 0
    %4260 = vmatpush2.bf16.msra.mxu0 0
    %4261 = vmatprep.subr.bf16.mxu0 0
    %4262 = vmatpush2.bf16.msra.mxu0 0
    %4263 = vmatprep.subr.bf16.mxu0 0
    %4264 = vmatpush2.bf16.msra.mxu0 0
    %4265 = vmatprep.subr.bf16.mxu0 0
    %4266 = vmatpush2.bf16.msra.mxu0 0
    %4267 = vmatprep.subr.bf16.mxu0 0
    %4268 = vmatpush2.bf16.msra.mxu0 0
    %4269 = vmatprep.subr.bf16.mxu0 0
    %4270 = vmatpush2.bf16.msra.mxu0 0
    %4271 = vmatprep.mubr.bf16.mxu0 0
    %4272 = vmatmul.mubr.bf16.gmra.mxu0 %v407
    %v4273 = vpop.f32.mrf.mxu0
    %v4274 = vadd.f32 %v4233, %v4273
    %v4275 = vpop.f32.mrf.mxu0
    %v4276 = vadd.f32 %v4235, %v4275
    %v4277 = vpop.f32.mrf.mxu0
    %v4278 = vpop.f32.mrf.mxu0
    %4279 = vdwg.mxu0
    %4280 = vmatprep.subr.bf16.mxu0 %v4037
    %4281 = vmatpush1.bf16.msra.mxu0 %v4036
    %4282 = vmatprep.subr.bf16.mxu0 %v4033
    %4283 = vmatpush1.bf16.msra.mxu0 %v4032
    %4284 = vmatprep.subr.bf16.mxu0 %v4029
    %4285 = vmatpush1.bf16.msra.mxu0 %v4028
    %4286 = vmatprep.subr.bf16.mxu0 %v4025
    %4287 = vmatpush1.bf16.msra.mxu0 %v4024
    %4288 = vmatprep.subr.bf16.mxu0 %v4021
    %4289 = vmatpush1.bf16.msra.mxu0 %v4020
    %4290 = vmatprep.subr.bf16.mxu0 %v4017
    %4291 = vmatpush1.bf16.msra.mxu0 %v4016
    %4292 = vmatprep.subr.bf16.mxu0 %v4013
    %4293 = vmatpush1.bf16.msra.mxu0 %v4012
    %4294 = vmatprep.subr.bf16.mxu0 %v4009
    %4295 = vmatpush1.bf16.msra.mxu0 %v4008
    %4296 = vmatprep.subr.bf16.mxu0 %v4069
    %4297 = vmatpush2.bf16.msra.mxu0 %v4068
    %4298 = vmatprep.subr.bf16.mxu0 %v4065
    %4299 = vmatpush2.bf16.msra.mxu0 %v4064
    %4300 = vmatprep.subr.bf16.mxu0 %v4061
    %4301 = vmatpush2.bf16.msra.mxu0 %v4060
    %4302 = vmatprep.subr.bf16.mxu0 %v4057
    %4303 = vmatpush2.bf16.msra.mxu0 %v4056
    %4304 = vmatprep.subr.bf16.mxu0 %v4053
    %4305 = vmatpush2.bf16.msra.mxu0 %v4052
    %4306 = vmatprep.subr.bf16.mxu0 %v4049
    %4307 = vmatpush2.bf16.msra.mxu0 %v4048
    %4308 = vmatprep.subr.bf16.mxu0 %v4045
    %4309 = vmatpush2.bf16.msra.mxu0 %v4044
    %4310 = vmatprep.subr.bf16.mxu0 %v4041
    %4311 = vmatpush2.bf16.msra.mxu0 %v4040
    %4312 = vmatprep.mubr.bf16.mxu0 %v406
    %4313 = vmatmul.mubr.bf16.gmra.mxu0 %v405
    %v4314 = vpop.f32.mrf.mxu0
    %v4315 = vadd.f32 %v3709, %v4314
    %v4316 = vpop.f32.mrf.mxu0
    %v4317 = vadd.f32 %v3713, %v4316
    %v4318 = vpop.f32.mrf.mxu0
    %v4319 = vpop.f32.mrf.mxu0
    %4320 = vdwg.mxu0
    %4321 = vmatprep.subr.bf16.mxu0 %v4101
    %4322 = vmatpush1.bf16.msra.mxu0 %v4100
    %4323 = vmatprep.subr.bf16.mxu0 %v4097
    %4324 = vmatpush1.bf16.msra.mxu0 %v4096
    %4325 = vmatprep.subr.bf16.mxu0 %v4093
    %4326 = vmatpush1.bf16.msra.mxu0 %v4092
    %4327 = vmatprep.subr.bf16.mxu0 %v4089
    %4328 = vmatpush1.bf16.msra.mxu0 %v4088
    %4329 = vmatprep.subr.bf16.mxu0 %v4085
    %4330 = vmatpush1.bf16.msra.mxu0 %v4084
    %4331 = vmatprep.subr.bf16.mxu0 %v4081
    %4332 = vmatpush1.bf16.msra.mxu0 %v4080
    %4333 = vmatprep.subr.bf16.mxu0 %v4077
    %4334 = vmatpush1.bf16.msra.mxu0 %v4076
    %4335 = vmatprep.subr.bf16.mxu0 %v4073
    %4336 = vmatpush1.bf16.msra.mxu0 %v4072
    %4337 = vmatprep.subr.bf16.mxu0 0
    %4338 = vmatpush2.bf16.msra.mxu0 0
    %4339 = vmatprep.subr.bf16.mxu0 0
    %4340 = vmatpush2.bf16.msra.mxu0 0
    %4341 = vmatprep.subr.bf16.mxu0 0
    %4342 = vmatpush2.bf16.msra.mxu0 0
    %4343 = vmatprep.subr.bf16.mxu0 0
    %4344 = vmatpush2.bf16.msra.mxu0 0
    %4345 = vmatprep.subr.bf16.mxu0 0
    %4346 = vmatpush2.bf16.msra.mxu0 0
    %4347 = vmatprep.subr.bf16.mxu0 0
    %4348 = vmatpush2.bf16.msra.mxu0 0
    %4349 = vmatprep.subr.bf16.mxu0 0
    %4350 = vmatpush2.bf16.msra.mxu0 0
    %4351 = vmatprep.subr.bf16.mxu0 0
    %4352 = vmatpush2.bf16.msra.mxu0 0
    %4353 = vmatprep.mubr.bf16.mxu0 0
    %4354 = vmatmul.mubr.bf16.gmra.mxu0 %v407
    %v4355 = vpop.f32.mrf.mxu0
    %v4356 = vadd.f32 %v4315, %v4355
    %v4357 = vpop.f32.mrf.mxu0
    %v4358 = vadd.f32 %v4317, %v4357
    %v4359 = vpop.f32.mrf.mxu0
    %v4360 = vpop.f32.mrf.mxu0
    %4361 = vdwg.mxu0
    %v4362 = vmax.f32 %v4274, 0.0
    %v4363 = vmax.f32 %v4276, 0.0
    %v4364 = vmax.f32 %v4356, 0.0
    %v4365 = vmax.f32 %v4358, 0.0
    %v4366 = vld [vmem:[#allocation13 + $0x10] sm:$0xf]
    %v4368 = vlaneseq
    %v4369 = vshrl.u32 %v4368, 7
    %v4370 = vsub.s32 0, %v4369
    %v4371 = vrot.slane %v4366, %v4370
    %v4372 = vlaneseq
    %v4373 = vshrl.u32 %v4372, 7
    %v4374 = vsub.s32 1, %v4373
    %v4375 = vrot.slane %v4366, %v4374
    %v4376 = vlaneseq
    %v4377 = vshrl.u32 %v4376, 7
    %v4378 = vsub.s32 2, %v4377
    %v4379 = vrot.slane %v4366, %v4378
    %v4380 = vlaneseq
    %v4381 = vshrl.u32 %v4380, 7
    %v4382 = vsub.s32 3, %v4381
    %v4383 = vrot.slane %v4366, %v4382
    %v4388 = vmul.f32 %v4362, %v4371
    %v4389 = vmul.f32 %v4363, %v4375
    %v4390 = vmul.f32 %v4364, %v4379
    %v4391 = vmul.f32 %v4365, %v4383
    %v4392 = vadd.f32 %v4388, %v4389
    %v4393 = vadd.f32 %v4392, %v4390
    %v4394 = vadd.f32 %v4393, %v4391
    %4395 = vadd.xlane.f32.xlu0 %v4394
    %v4396 = vpop.xlane.xlu0 %4395
    %v4397 = vadd.f32 %v3599, %v4396
    %v4398 = vld [vmem:[#allocation10 + $0x50] sm:$0xff]
    %v4399 = vld [vmem:[#allocation10 + $0x58] sm:$0xff]
    %v4400 = vld [vmem:[#allocation10 + $0xb0] sm:$0xff]
    %v4401 = vld [vmem:[#allocation10 + $0xb8] sm:$0xff]
    %v4402 = vld [vmem:[#allocation10 + $0x110] sm:$0xff]
    %v4403 = vld [vmem:[#allocation10 + $0x118] sm:$0xff]
    %v4404 = vld [vmem:[#allocation10 + $0x170] sm:$0xff]
    %v4405 = vld [vmem:[#allocation10 + $0x178] sm:$0xff]
    %v4406 = vld [vmem:[#allocation10 + $0x1d0] sm:$0xff]
    %v4407 = vld [vmem:[#allocation10 + $0x1d8] sm:$0xff]
    %v4408 = vld [vmem:[#allocation10 + $0x230] sm:$0xff]
    %v4409 = vld [vmem:[#allocation10 + $0x238] sm:$0xff]
    %v4410 = vld [vmem:[#allocation10 + $0x290] sm:$0xff]
    %v4411 = vld [vmem:[#allocation10 + $0x298] sm:$0xff]
    %v4412 = vld [vmem:[#allocation10 + $0x2f0] sm:$0xff]
    %v4413 = vld [vmem:[#allocation10 + $0x2f8] sm:$0xff]
    %v4414 = vld [vmem:[#allocation10 + $0x350] sm:$0xff]
    %v4415 = vld [vmem:[#allocation10 + $0x358] sm:$0xff]
    %v4416 = vld [vmem:[#allocation10 + $0x3b0] sm:$0xff]
    %v4417 = vld [vmem:[#allocation10 + $0x3b8] sm:$0xff]
    %v4418 = vld [vmem:[#allocation10 + $0x410] sm:$0xff]
    %v4419 = vld [vmem:[#allocation10 + $0x418] sm:$0xff]
    %v4420 = vld [vmem:[#allocation10 + $0x470] sm:$0xff]
    %v4421 = vld [vmem:[#allocation10 + $0x478] sm:$0xff]
    %v4422 = vld [vmem:[#allocation10 + $0x4d0] sm:$0xff]
    %v4423 = vld [vmem:[#allocation10 + $0x4d8] sm:$0xff]
    %v4424 = vld [vmem:[#allocation10 + $0x530] sm:$0xff]
    %v4425 = vld [vmem:[#allocation10 + $0x538] sm:$0xff]
    %v4426 = vld [vmem:[#allocation10 + $0x590] sm:$0xff]
    %v4427 = vld [vmem:[#allocation10 + $0x598] sm:$0xff]
    %v4428 = vld [vmem:[#allocation10 + $0x5f0] sm:$0xff]
    %v4429 = vld [vmem:[#allocation10 + $0x5f8] sm:$0xff]
    %v4430 = vld [vmem:[#allocation10 + $0x650] sm:$0xff]
    %v4431 = vld [vmem:[#allocation10 + $0x658] sm:$0xff]
    %v4432 = vld [vmem:[#allocation10 + $0x6b0] sm:$0xff]
    %v4433 = vld [vmem:[#allocation10 + $0x6b8] sm:$0xff]
    %v4434 = vld [vmem:[#allocation10 + $0x710] sm:$0xff]
    %v4435 = vld [vmem:[#allocation10 + $0x718] sm:$0xff]
    %v4436 = vld [vmem:[#allocation10 + $0x770] sm:$0xff]
    %v4437 = vld [vmem:[#allocation10 + $0x778] sm:$0xff]
    %v4438 = vld [vmem:[#allocation10 + $0x7d0] sm:$0xff]
    %v4439 = vld [vmem:[#allocation10 + $0x7d8] sm:$0xff]
    %v4440 = vld [vmem:[#allocation10 + $0x830] sm:$0xff]
    %v4441 = vld [vmem:[#allocation10 + $0x838] sm:$0xff]
    %v4442 = vld [vmem:[#allocation10 + $0x890] sm:$0xff]
    %v4443 = vld [vmem:[#allocation10 + $0x898] sm:$0xff]
    %v4444 = vld [vmem:[#allocation10 + $0x8f0] sm:$0xff]
    %v4445 = vld [vmem:[#allocation10 + $0x8f8] sm:$0xff]
    %v4446 = vld [vmem:[#allocation10 + $0x950] sm:$0xff]
    %v4447 = vld [vmem:[#allocation10 + $0x958] sm:$0xff]
    %v4448 = vld [vmem:[#allocation10 + $0x9b0] sm:$0xff]
    %v4449 = vld [vmem:[#allocation10 + $0x9b8] sm:$0xff]
    %v4450 = vld [vmem:[#allocation10 + $0xa10] sm:$0xff]
    %v4451 = vld [vmem:[#allocation10 + $0xa18] sm:$0xff]
    %v4452 = vld [vmem:[#allocation10 + $0xa70] sm:$0xff]
    %v4453 = vld [vmem:[#allocation10 + $0xa78] sm:$0xff]
    %v4454 = vld [vmem:[#allocation10 + $0xad0] sm:$0xff]
    %v4455 = vld [vmem:[#allocation10 + $0xad8] sm:$0xff]
    %v4456 = vld [vmem:[#allocation10 + $0xb30] sm:$0xff]
    %v4457 = vld [vmem:[#allocation10 + $0xb38] sm:$0xff]
    %v4458 = vld [vmem:[#allocation10 + $0xb90] sm:$0xff]
    %v4459 = vld [vmem:[#allocation10 + $0xb98] sm:$0xff]
    %v4460 = vld [vmem:[#allocation10 + $0xbf0] sm:$0xff]
    %v4461 = vld [vmem:[#allocation10 + $0xbf8] sm:$0xff]
    %v4462 = vld [vmem:[#allocation10 + $0xc50] sm:$0xff]
    %v4463 = vld [vmem:[#allocation10 + $0xc58] sm:$0xff]
    %v4464 = vld [vmem:[#allocation10 + $0xcb0] sm:$0xff]
    %v4465 = vld [vmem:[#allocation10 + $0xcb8] sm:$0xff]
    %v4466 = vld [vmem:[#allocation10 + $0xd10] sm:$0xff]
    %v4467 = vld [vmem:[#allocation10 + $0xd18] sm:$0xff]
    %v4468 = vld [vmem:[#allocation10 + $0xd70] sm:$0xff]
    %v4469 = vld [vmem:[#allocation10 + $0xd78] sm:$0xff]
    %v4470 = vld [vmem:[#allocation10 + $0xdd0] sm:$0xff]
    %v4471 = vld [vmem:[#allocation10 + $0xdd8] sm:$0xff]
    %v4472 = vld [vmem:[#allocation10 + $0xe30] sm:$0xff]
    %v4473 = vld [vmem:[#allocation10 + $0xe38] sm:$0xff]
    %v4474 = vld [vmem:[#allocation10 + $0xe90] sm:$0xff]
    %v4475 = vld [vmem:[#allocation10 + $0xe98] sm:$0xff]
    %v4476 = vld [vmem:[#allocation10 + $0xef0] sm:$0xff]
    %v4477 = vld [vmem:[#allocation10 + $0xef8] sm:$0xff]
    %v4478 = vld [vmem:[#allocation10 + $0xf50] sm:$0xff]
    %v4479 = vld [vmem:[#allocation10 + $0xf58] sm:$0xff]
    %v4480 = vld [vmem:[#allocation10 + $0xfb0] sm:$0xff]
    %v4481 = vld [vmem:[#allocation10 + $0xfb8] sm:$0xff]
    %v4482 = vld [vmem:[#allocation10 + $0x1010] sm:$0xff]
    %v4483 = vld [vmem:[#allocation10 + $0x1018] sm:$0xff]
    %v4484 = vld [vmem:[#allocation10 + $0x1070] sm:$0xff]
    %v4485 = vld [vmem:[#allocation10 + $0x1078] sm:$0xff]
    %v4486 = vld [vmem:[#allocation10 + $0x10d0] sm:$0xff]
    %v4487 = vld [vmem:[#allocation10 + $0x10d8] sm:$0xff]
    %v4488 = vld [vmem:[#allocation10 + $0x1130] sm:$0xff]
    %v4489 = vld [vmem:[#allocation10 + $0x1138] sm:$0xff]
    %v4490 = vld [vmem:[#allocation10 + $0x1190] sm:$0xff]
    %v4491 = vld [vmem:[#allocation10 + $0x1198] sm:$0xff]
    %v4492 = vld [vmem:[#allocation10 + $0x11f0] sm:$0xff]
    %v4493 = vld [vmem:[#allocation10 + $0x11f8] sm:$0xff]
    %v4494 = vld [vmem:[#allocation11 + $0x14] sm:$0xf]
    %v4496 = vlaneseq
    %v4497 = vshrl.u32 %v4496, 7
    %v4498 = vsub.s32 0, %v4497
    %v4499 = vrot.slane %v4494, %v4498
    %v4500 = vlaneseq
    %v4501 = vshrl.u32 %v4500, 7
    %v4502 = vsub.s32 1, %v4501
    %v4503 = vrot.slane %v4494, %v4502
    %v4504 = vlaneseq
    %v4505 = vshrl.u32 %v4504, 7
    %v4506 = vsub.s32 2, %v4505
    %v4507 = vrot.slane %v4494, %v4506
    %v4508 = vlaneseq
    %v4509 = vshrl.u32 %v4508, 7
    %v4510 = vsub.s32 3, %v4509
    %v4511 = vrot.slane %v4494, %v4510
    %v4612 = vunpack.c.l.b16 %v4398
    %v4613 = vunpack.c.h.b16 %v4398
    %v4614 = vunpack.c.l.b16 %v4399
    %v4615 = vunpack.c.h.b16 %v4399
    %v4616 = vunpack.c.l.b16 %v4400
    %v4617 = vunpack.c.h.b16 %v4400
    %v4618 = vunpack.c.l.b16 %v4401
    %v4619 = vunpack.c.h.b16 %v4401
    %v4620 = vunpack.c.l.b16 %v4402
    %v4621 = vunpack.c.h.b16 %v4402
    %v4622 = vunpack.c.l.b16 %v4403
    %v4623 = vunpack.c.h.b16 %v4403
    %v4624 = vunpack.c.l.b16 %v4404
    %v4625 = vunpack.c.h.b16 %v4404
    %v4626 = vunpack.c.l.b16 %v4405
    %v4627 = vunpack.c.h.b16 %v4405
    %v4628 = vunpack.c.l.b16 %v4406
    %v4629 = vunpack.c.h.b16 %v4406
    %v4630 = vunpack.c.l.b16 %v4407
    %v4631 = vunpack.c.h.b16 %v4407
    %v4632 = vunpack.c.l.b16 %v4408
    %v4633 = vunpack.c.h.b16 %v4408
    %v4634 = vunpack.c.l.b16 %v4409
    %v4635 = vunpack.c.h.b16 %v4409
    %v4636 = vunpack.c.l.b16 %v4410
    %v4637 = vunpack.c.h.b16 %v4410
    %v4638 = vunpack.c.l.b16 %v4411
    %v4639 = vunpack.c.h.b16 %v4411
    %v4640 = vunpack.c.l.b16 %v4412
    %v4641 = vunpack.c.h.b16 %v4412
    %v4642 = vunpack.c.l.b16 %v4413
    %v4643 = vunpack.c.h.b16 %v4413
    %v4644 = vunpack.c.l.b16 %v4414
    %v4645 = vunpack.c.h.b16 %v4414
    %v4646 = vunpack.c.l.b16 %v4415
    %v4647 = vunpack.c.h.b16 %v4415
    %v4648 = vunpack.c.l.b16 %v4416
    %v4649 = vunpack.c.h.b16 %v4416
    %v4650 = vunpack.c.l.b16 %v4417
    %v4651 = vunpack.c.h.b16 %v4417
    %v4652 = vunpack.c.l.b16 %v4418
    %v4653 = vunpack.c.h.b16 %v4418
    %v4654 = vunpack.c.l.b16 %v4419
    %v4655 = vunpack.c.h.b16 %v4419
    %v4656 = vunpack.c.l.b16 %v4420
    %v4657 = vunpack.c.h.b16 %v4420
    %v4658 = vunpack.c.l.b16 %v4421
    %v4659 = vunpack.c.h.b16 %v4421
    %v4660 = vunpack.c.l.b16 %v4422
    %v4661 = vunpack.c.h.b16 %v4422
    %v4662 = vunpack.c.l.b16 %v4423
    %v4663 = vunpack.c.h.b16 %v4423
    %v4664 = vunpack.c.l.b16 %v4424
    %v4665 = vunpack.c.h.b16 %v4424
    %v4666 = vunpack.c.l.b16 %v4425
    %v4667 = vunpack.c.h.b16 %v4425
    %v4668 = vunpack.c.l.b16 %v4426
    %v4669 = vunpack.c.h.b16 %v4426
    %v4670 = vunpack.c.l.b16 %v4427
    %v4671 = vunpack.c.h.b16 %v4427
    %v4672 = vunpack.c.l.b16 %v4428
    %v4673 = vunpack.c.h.b16 %v4428
    %v4674 = vunpack.c.l.b16 %v4429
    %v4675 = vunpack.c.h.b16 %v4429
    %v4676 = vunpack.c.l.b16 %v4430
    %v4677 = vunpack.c.h.b16 %v4430
    %v4678 = vunpack.c.l.b16 %v4431
    %v4679 = vunpack.c.h.b16 %v4431
    %v4680 = vunpack.c.l.b16 %v4432
    %v4681 = vunpack.c.h.b16 %v4432
    %v4682 = vunpack.c.l.b16 %v4433
    %v4683 = vunpack.c.h.b16 %v4433
    %v4684 = vunpack.c.l.b16 %v4434
    %v4685 = vunpack.c.h.b16 %v4434
    %v4686 = vunpack.c.l.b16 %v4435
    %v4687 = vunpack.c.h.b16 %v4435
    %v4688 = vunpack.c.l.b16 %v4436
    %v4689 = vunpack.c.h.b16 %v4436
    %v4690 = vunpack.c.l.b16 %v4437
    %v4691 = vunpack.c.h.b16 %v4437
    %v4692 = vunpack.c.l.b16 %v4438
    %v4693 = vunpack.c.h.b16 %v4438
    %v4694 = vunpack.c.l.b16 %v4439
    %v4695 = vunpack.c.h.b16 %v4439
    %v4696 = vunpack.c.l.b16 %v4440
    %v4697 = vunpack.c.h.b16 %v4440
    %v4698 = vunpack.c.l.b16 %v4441
    %v4699 = vunpack.c.h.b16 %v4441
    %v4700 = vunpack.c.l.b16 %v4442
    %v4701 = vunpack.c.h.b16 %v4442
    %v4702 = vunpack.c.l.b16 %v4443
    %v4703 = vunpack.c.h.b16 %v4443
    %v4704 = vunpack.c.l.b16 %v4444
    %v4705 = vunpack.c.h.b16 %v4444
    %v4706 = vunpack.c.l.b16 %v4445
    %v4707 = vunpack.c.h.b16 %v4445
    %v4708 = vunpack.c.l.b16 %v4446
    %v4709 = vunpack.c.h.b16 %v4446
    %v4710 = vunpack.c.l.b16 %v4447
    %v4711 = vunpack.c.h.b16 %v4447
    %v4712 = vunpack.c.l.b16 %v4448
    %v4713 = vunpack.c.h.b16 %v4448
    %v4714 = vunpack.c.l.b16 %v4449
    %v4715 = vunpack.c.h.b16 %v4449
    %v4716 = vunpack.c.l.b16 %v4450
    %v4717 = vunpack.c.h.b16 %v4450
    %v4718 = vunpack.c.l.b16 %v4451
    %v4719 = vunpack.c.h.b16 %v4451
    %v4720 = vunpack.c.l.b16 %v4452
    %v4721 = vunpack.c.h.b16 %v4452
    %v4722 = vunpack.c.l.b16 %v4453
    %v4723 = vunpack.c.h.b16 %v4453
    %v4724 = vunpack.c.l.b16 %v4454
    %v4725 = vunpack.c.h.b16 %v4454
    %v4726 = vunpack.c.l.b16 %v4455
    %v4727 = vunpack.c.h.b16 %v4455
    %v4728 = vunpack.c.l.b16 %v4456
    %v4729 = vunpack.c.h.b16 %v4456
    %v4730 = vunpack.c.l.b16 %v4457
    %v4731 = vunpack.c.h.b16 %v4457
    %v4732 = vunpack.c.l.b16 %v4458
    %v4733 = vunpack.c.h.b16 %v4458
    %v4734 = vunpack.c.l.b16 %v4459
    %v4735 = vunpack.c.h.b16 %v4459
    %v4736 = vunpack.c.l.b16 %v4460
    %v4737 = vunpack.c.h.b16 %v4460
    %v4738 = vunpack.c.l.b16 %v4461
    %v4739 = vunpack.c.h.b16 %v4461
    %v4740 = vunpack.c.l.b16 %v4462
    %v4741 = vunpack.c.h.b16 %v4462
    %v4742 = vunpack.c.l.b16 %v4463
    %v4743 = vunpack.c.h.b16 %v4463
    %v4744 = vunpack.c.l.b16 %v4464
    %v4745 = vunpack.c.h.b16 %v4464
    %v4746 = vunpack.c.l.b16 %v4465
    %v4747 = vunpack.c.h.b16 %v4465
    %v4748 = vunpack.c.l.b16 %v4466
    %v4749 = vunpack.c.h.b16 %v4466
    %v4750 = vunpack.c.l.b16 %v4467
    %v4751 = vunpack.c.h.b16 %v4467
    %v4752 = vunpack.c.l.b16 %v4468
    %v4753 = vunpack.c.h.b16 %v4468
    %v4754 = vunpack.c.l.b16 %v4469
    %v4755 = vunpack.c.h.b16 %v4469
    %v4756 = vunpack.c.l.b16 %v4470
    %v4757 = vunpack.c.h.b16 %v4470
    %v4758 = vunpack.c.l.b16 %v4471
    %v4759 = vunpack.c.h.b16 %v4471
    %v4760 = vunpack.c.l.b16 %v4472
    %v4761 = vunpack.c.h.b16 %v4472
    %v4762 = vunpack.c.l.b16 %v4473
    %v4763 = vunpack.c.h.b16 %v4473
    %v4764 = vunpack.c.l.b16 %v4474
    %v4765 = vunpack.c.h.b16 %v4474
    %v4766 = vunpack.c.l.b16 %v4475
    %v4767 = vunpack.c.h.b16 %v4475
    %v4768 = vunpack.c.l.b16 %v4476
    %v4769 = vunpack.c.h.b16 %v4476
    %v4770 = vunpack.c.l.b16 %v4477
    %v4771 = vunpack.c.h.b16 %v4477
    %v4772 = vunpack.c.l.b16 %v4478
    %v4773 = vunpack.c.h.b16 %v4478
    %v4774 = vunpack.c.l.b16 %v4479
    %v4775 = vunpack.c.h.b16 %v4479
    %v4776 = vunpack.c.l.b16 %v4480
    %v4777 = vunpack.c.h.b16 %v4480
    %v4778 = vunpack.c.l.b16 %v4481
    %v4779 = vunpack.c.h.b16 %v4481
    %v4780 = vunpack.c.l.b16 %v4482
    %v4781 = vunpack.c.h.b16 %v4482
    %v4782 = vunpack.c.l.b16 %v4483
    %v4783 = vunpack.c.h.b16 %v4483
    %v4784 = vunpack.c.l.b16 %v4484
    %v4785 = vunpack.c.h.b16 %v4484
    %v4786 = vunpack.c.l.b16 %v4485
    %v4787 = vunpack.c.h.b16 %v4485
    %v4788 = vunpack.c.l.b16 %v4486
    %v4789 = vunpack.c.h.b16 %v4486
    %v4790 = vunpack.c.l.b16 %v4487
    %v4791 = vunpack.c.h.b16 %v4487
    %v4792 = vunpack.c.l.b16 %v4488
    %v4793 = vunpack.c.h.b16 %v4488
    %v4794 = vunpack.c.l.b16 %v4489
    %v4795 = vunpack.c.h.b16 %v4489
    %v4796 = vunpack.c.l.b16 %v4490
    %v4797 = vunpack.c.h.b16 %v4490
    %v4798 = vunpack.c.l.b16 %v4491
    %v4799 = vunpack.c.h.b16 %v4491
    %v4800 = vunpack.c.l.b16 %v4492
    %v4801 = vunpack.c.h.b16 %v4492
    %v4802 = vunpack.c.l.b16 %v4493
    %v4803 = vunpack.c.h.b16 %v4493
    %v4804 = vpack.c.b16 %v4616, %v4612
    %v4805 = vpack.c.b16 %v4617, %v4613
    %v4806 = vpack.c.b16 %v4618, %v4614
    %v4807 = vpack.c.b16 %v4619, %v4615
    %v4808 = vpack.c.b16 %v4624, %v4620
    %v4809 = vpack.c.b16 %v4625, %v4621
    %v4810 = vpack.c.b16 %v4626, %v4622
    %v4811 = vpack.c.b16 %v4627, %v4623
    %v4812 = vpack.c.b16 %v4632, %v4628
    %v4813 = vpack.c.b16 %v4633, %v4629
    %v4814 = vpack.c.b16 %v4634, %v4630
    %v4815 = vpack.c.b16 %v4635, %v4631
    %v4816 = vpack.c.b16 %v4640, %v4636
    %v4817 = vpack.c.b16 %v4641, %v4637
    %v4818 = vpack.c.b16 %v4642, %v4638
    %v4819 = vpack.c.b16 %v4643, %v4639
    %v4820 = vpack.c.b16 %v4648, %v4644
    %v4821 = vpack.c.b16 %v4649, %v4645
    %v4822 = vpack.c.b16 %v4650, %v4646
    %v4823 = vpack.c.b16 %v4651, %v4647
    %v4824 = vpack.c.b16 %v4656, %v4652
    %v4825 = vpack.c.b16 %v4657, %v4653
    %v4826 = vpack.c.b16 %v4658, %v4654
    %v4827 = vpack.c.b16 %v4659, %v4655
    %v4828 = vpack.c.b16 %v4664, %v4660
    %v4829 = vpack.c.b16 %v4665, %v4661
    %v4830 = vpack.c.b16 %v4666, %v4662
    %v4831 = vpack.c.b16 %v4667, %v4663
    %v4832 = vpack.c.b16 %v4672, %v4668
    %v4833 = vpack.c.b16 %v4673, %v4669
    %v4834 = vpack.c.b16 %v4674, %v4670
    %v4835 = vpack.c.b16 %v4675, %v4671
    %v4836 = vpack.c.b16 %v4680, %v4676
    %v4837 = vpack.c.b16 %v4681, %v4677
    %v4838 = vpack.c.b16 %v4682, %v4678
    %v4839 = vpack.c.b16 %v4683, %v4679
    %v4840 = vpack.c.b16 %v4688, %v4684
    %v4841 = vpack.c.b16 %v4689, %v4685
    %v4842 = vpack.c.b16 %v4690, %v4686
    %v4843 = vpack.c.b16 %v4691, %v4687
    %v4844 = vpack.c.b16 %v4696, %v4692
    %v4845 = vpack.c.b16 %v4697, %v4693
    %v4846 = vpack.c.b16 %v4698, %v4694
    %v4847 = vpack.c.b16 %v4699, %v4695
    %v4848 = vpack.c.b16 %v4704, %v4700
    %v4849 = vpack.c.b16 %v4705, %v4701
    %v4850 = vpack.c.b16 %v4706, %v4702
    %v4851 = vpack.c.b16 %v4707, %v4703
    %v4852 = vpack.c.b16 %v4712, %v4708
    %v4853 = vpack.c.b16 %v4713, %v4709
    %v4854 = vpack.c.b16 %v4714, %v4710
    %v4855 = vpack.c.b16 %v4715, %v4711
    %v4856 = vpack.c.b16 %v4720, %v4716
    %v4857 = vpack.c.b16 %v4721, %v4717
    %v4858 = vpack.c.b16 %v4722, %v4718
    %v4859 = vpack.c.b16 %v4723, %v4719
    %v4860 = vpack.c.b16 %v4728, %v4724
    %v4861 = vpack.c.b16 %v4729, %v4725
    %v4862 = vpack.c.b16 %v4730, %v4726
    %v4863 = vpack.c.b16 %v4731, %v4727
    %v4864 = vpack.c.b16 %v4736, %v4732
    %v4865 = vpack.c.b16 %v4737, %v4733
    %v4866 = vpack.c.b16 %v4738, %v4734
    %v4867 = vpack.c.b16 %v4739, %v4735
    %v4868 = vpack.c.b16 %v4744, %v4740
    %v4869 = vpack.c.b16 %v4745, %v4741
    %v4870 = vpack.c.b16 %v4746, %v4742
    %v4871 = vpack.c.b16 %v4747, %v4743
    %v4872 = vpack.c.b16 %v4752, %v4748
    %v4873 = vpack.c.b16 %v4753, %v4749
    %v4874 = vpack.c.b16 %v4754, %v4750
    %v4875 = vpack.c.b16 %v4755, %v4751
    %v4876 = vpack.c.b16 %v4760, %v4756
    %v4877 = vpack.c.b16 %v4761, %v4757
    %v4878 = vpack.c.b16 %v4762, %v4758
    %v4879 = vpack.c.b16 %v4763, %v4759
    %v4880 = vpack.c.b16 %v4768, %v4764
    %v4881 = vpack.c.b16 %v4769, %v4765
    %v4882 = vpack.c.b16 %v4770, %v4766
    %v4883 = vpack.c.b16 %v4771, %v4767
    %v4884 = vpack.c.b16 %v4776, %v4772
    %v4885 = vpack.c.b16 %v4777, %v4773
    %v4886 = vpack.c.b16 %v4778, %v4774
    %v4887 = vpack.c.b16 %v4779, %v4775
    %v4888 = vpack.c.b16 %v4784, %v4780
    %v4889 = vpack.c.b16 %v4785, %v4781
    %v4890 = vpack.c.b16 %v4786, %v4782
    %v4891 = vpack.c.b16 %v4787, %v4783
    %v4892 = vpack.c.b16 %v4792, %v4788
    %v4893 = vpack.c.b16 %v4793, %v4789
    %v4894 = vpack.c.b16 %v4794, %v4790
    %v4895 = vpack.c.b16 %v4795, %v4791
    %v4896 = vpack.c.b16 %v4800, %v4796
    %v4897 = vpack.c.b16 %v4801, %v4797
    %v4898 = vpack.c.b16 %v4802, %v4798
    %v4899 = vpack.c.b16 %v4803, %v4799
    %4996 = vmatprep.subr.bf16.mxu0 %v4833
    %4997 = vmatpush1.bf16.msra.mxu0 %v4832
    %4998 = vmatprep.subr.bf16.mxu0 %v4829
    %4999 = vmatpush1.bf16.msra.mxu0 %v4828
    %5000 = vmatprep.subr.bf16.mxu0 %v4825
    %5001 = vmatpush1.bf16.msra.mxu0 %v4824
    %5002 = vmatprep.subr.bf16.mxu0 %v4821
    %5003 = vmatpush1.bf16.msra.mxu0 %v4820
    %5004 = vmatprep.subr.bf16.mxu0 %v4817
    %5005 = vmatpush1.bf16.msra.mxu0 %v4816
    %5006 = vmatprep.subr.bf16.mxu0 %v4813
    %5007 = vmatpush1.bf16.msra.mxu0 %v4812
    %5008 = vmatprep.subr.bf16.mxu0 %v4809
    %5009 = vmatpush1.bf16.msra.mxu0 %v4808
    %5010 = vmatprep.subr.bf16.mxu0 %v4805
    %5011 = vmatpush1.bf16.msra.mxu0 %v4804
    %5012 = vmatprep.subr.bf16.mxu0 %v4865
    %5013 = vmatpush2.bf16.msra.mxu0 %v4864
    %5014 = vmatprep.subr.bf16.mxu0 %v4861
    %5015 = vmatpush2.bf16.msra.mxu0 %v4860
    %5016 = vmatprep.subr.bf16.mxu0 %v4857
    %5017 = vmatpush2.bf16.msra.mxu0 %v4856
    %5018 = vmatprep.subr.bf16.mxu0 %v4853
    %5019 = vmatpush2.bf16.msra.mxu0 %v4852
    %5020 = vmatprep.subr.bf16.mxu0 %v4849
    %5021 = vmatpush2.bf16.msra.mxu0 %v4848
    %5022 = vmatprep.subr.bf16.mxu0 %v4845
    %5023 = vmatpush2.bf16.msra.mxu0 %v4844
    %5024 = vmatprep.subr.bf16.mxu0 %v4841
    %5025 = vmatpush2.bf16.msra.mxu0 %v4840
    %5026 = vmatprep.subr.bf16.mxu0 %v4837
    %5027 = vmatpush2.bf16.msra.mxu0 %v4836
    %5028 = vmatprep.mubr.bf16.mxu0 %v406
    %5029 = vmatmul.mubr.bf16.gmra.mxu0 %v405
    %v5030 = vpop.f32.mrf.mxu0
    %v5031 = vadd.f32 %v4499, %v5030
    %v5032 = vpop.f32.mrf.mxu0
    %v5033 = vadd.f32 %v4503, %v5032
    %v5034 = vpop.f32.mrf.mxu0
    %v5035 = vpop.f32.mrf.mxu0
    %5036 = vdwg.mxu0
    %5037 = vmatprep.subr.bf16.mxu0 %v4897
    %5038 = vmatpush1.bf16.msra.mxu0 %v4896
    %5039 = vmatprep.subr.bf16.mxu0 %v4893
    %5040 = vmatpush1.bf16.msra.mxu0 %v4892
    %5041 = vmatprep.subr.bf16.mxu0 %v4889
    %5042 = vmatpush1.bf16.msra.mxu0 %v4888
    %5043 = vmatprep.subr.bf16.mxu0 %v4885
    %5044 = vmatpush1.bf16.msra.mxu0 %v4884
    %5045 = vmatprep.subr.bf16.mxu0 %v4881
    %5046 = vmatpush1.bf16.msra.mxu0 %v4880
    %5047 = vmatprep.subr.bf16.mxu0 %v4877
    %5048 = vmatpush1.bf16.msra.mxu0 %v4876
    %5049 = vmatprep.subr.bf16.mxu0 %v4873
    %5050 = vmatpush1.bf16.msra.mxu0 %v4872
    %5051 = vmatprep.subr.bf16.mxu0 %v4869
    %5052 = vmatpush1.bf16.msra.mxu0 %v4868
    %5053 = vmatprep.subr.bf16.mxu0 0
    %5054 = vmatpush2.bf16.msra.mxu0 0
    %5055 = vmatprep.subr.bf16.mxu0 0
    %5056 = vmatpush2.bf16.msra.mxu0 0
    %5057 = vmatprep.subr.bf16.mxu0 0
    %5058 = vmatpush2.bf16.msra.mxu0 0
    %5059 = vmatprep.subr.bf16.mxu0 0
    %5060 = vmatpush2.bf16.msra.mxu0 0
    %5061 = vmatprep.subr.bf16.mxu0 0
    %5062 = vmatpush2.bf16.msra.mxu0 0
    %5063 = vmatprep.subr.bf16.mxu0 0
    %5064 = vmatpush2.bf16.msra.mxu0 0
    %5065 = vmatprep.subr.bf16.mxu0 0
    %5066 = vmatpush2.bf16.msra.mxu0 0
    %5067 = vmatprep.subr.bf16.mxu0 0
    %5068 = vmatpush2.bf16.msra.mxu0 0
    %5069 = vmatprep.mubr.bf16.mxu0 0
    %5070 = vmatmul.mubr.bf16.gmra.mxu0 %v407
    %v5071 = vpop.f32.mrf.mxu0
    %v5072 = vadd.f32 %v5031, %v5071
    %v5073 = vpop.f32.mrf.mxu0
    %v5074 = vadd.f32 %v5033, %v5073
    %v5075 = vpop.f32.mrf.mxu0
    %v5076 = vpop.f32.mrf.mxu0
    %5077 = vdwg.mxu0
    %5078 = vmatprep.subr.bf16.mxu0 %v4835
    %5079 = vmatpush1.bf16.msra.mxu0 %v4834
    %5080 = vmatprep.subr.bf16.mxu0 %v4831
    %5081 = vmatpush1.bf16.msra.mxu0 %v4830
    %5082 = vmatprep.subr.bf16.mxu0 %v4827
    %5083 = vmatpush1.bf16.msra.mxu0 %v4826
    %5084 = vmatprep.subr.bf16.mxu0 %v4823
    %5085 = vmatpush1.bf16.msra.mxu0 %v4822
    %5086 = vmatprep.subr.bf16.mxu0 %v4819
    %5087 = vmatpush1.bf16.msra.mxu0 %v4818
    %5088 = vmatprep.subr.bf16.mxu0 %v4815
    %5089 = vmatpush1.bf16.msra.mxu0 %v4814
    %5090 = vmatprep.subr.bf16.mxu0 %v4811
    %5091 = vmatpush1.bf16.msra.mxu0 %v4810
    %5092 = vmatprep.subr.bf16.mxu0 %v4807
    %5093 = vmatpush1.bf16.msra.mxu0 %v4806
    %5094 = vmatprep.subr.bf16.mxu0 %v4867
    %5095 = vmatpush2.bf16.msra.mxu0 %v4866
    %5096 = vmatprep.subr.bf16.mxu0 %v4863
    %5097 = vmatpush2.bf16.msra.mxu0 %v4862
    %5098 = vmatprep.subr.bf16.mxu0 %v4859
    %5099 = vmatpush2.bf16.msra.mxu0 %v4858
    %5100 = vmatprep.subr.bf16.mxu0 %v4855
    %5101 = vmatpush2.bf16.msra.mxu0 %v4854
    %5102 = vmatprep.subr.bf16.mxu0 %v4851
    %5103 = vmatpush2.bf16.msra.mxu0 %v4850
    %5104 = vmatprep.subr.bf16.mxu0 %v4847
    %5105 = vmatpush2.bf16.msra.mxu0 %v4846
    %5106 = vmatprep.subr.bf16.mxu0 %v4843
    %5107 = vmatpush2.bf16.msra.mxu0 %v4842
    %5108 = vmatprep.subr.bf16.mxu0 %v4839
    %5109 = vmatpush2.bf16.msra.mxu0 %v4838
    %5110 = vmatprep.mubr.bf16.mxu0 %v406
    %5111 = vmatmul.mubr.bf16.gmra.mxu0 %v405
    %v5112 = vpop.f32.mrf.mxu0
    %v5113 = vadd.f32 %v4507, %v5112
    %v5114 = vpop.f32.mrf.mxu0
    %v5115 = vadd.f32 %v4511, %v5114
    %v5116 = vpop.f32.mrf.mxu0
    %v5117 = vpop.f32.mrf.mxu0
    %5118 = vdwg.mxu0
    %5119 = vmatprep.subr.bf16.mxu0 %v4899
    %5120 = vmatpush1.bf16.msra.mxu0 %v4898
    %5121 = vmatprep.subr.bf16.mxu0 %v4895
    %5122 = vmatpush1.bf16.msra.mxu0 %v4894
    %5123 = vmatprep.subr.bf16.mxu0 %v4891
    %5124 = vmatpush1.bf16.msra.mxu0 %v4890
    %5125 = vmatprep.subr.bf16.mxu0 %v4887
    %5126 = vmatpush1.bf16.msra.mxu0 %v4886
    %5127 = vmatprep.subr.bf16.mxu0 %v4883
    %5128 = vmatpush1.bf16.msra.mxu0 %v4882
    %5129 = vmatprep.subr.bf16.mxu0 %v4879
    %5130 = vmatpush1.bf16.msra.mxu0 %v4878
    %5131 = vmatprep.subr.bf16.mxu0 %v4875
    %5132 = vmatpush1.bf16.msra.mxu0 %v4874
    %5133 = vmatprep.subr.bf16.mxu0 %v4871
    %5134 = vmatpush1.bf16.msra.mxu0 %v4870
    %5135 = vmatprep.subr.bf16.mxu0 0
    %5136 = vmatpush2.bf16.msra.mxu0 0
    %5137 = vmatprep.subr.bf16.mxu0 0
    %5138 = vmatpush2.bf16.msra.mxu0 0
    %5139 = vmatprep.subr.bf16.mxu0 0
    %5140 = vmatpush2.bf16.msra.mxu0 0
    %5141 = vmatprep.subr.bf16.mxu0 0
    %5142 = vmatpush2.bf16.msra.mxu0 0
    %5143 = vmatprep.subr.bf16.mxu0 0
    %5144 = vmatpush2.bf16.msra.mxu0 0
    %5145 = vmatprep.subr.bf16.mxu0 0
    %5146 = vmatpush2.bf16.msra.mxu0 0
    %5147 = vmatprep.subr.bf16.mxu0 0
    %5148 = vmatpush2.bf16.msra.mxu0 0
    %5149 = vmatprep.subr.bf16.mxu0 0
    %5150 = vmatpush2.bf16.msra.mxu0 0
    %5151 = vmatprep.mubr.bf16.mxu0 0
    %5152 = vmatmul.mubr.bf16.gmra.mxu0 %v407
    %v5153 = vpop.f32.mrf.mxu0
    %v5154 = vadd.f32 %v5113, %v5153
    %v5155 = vpop.f32.mrf.mxu0
    %v5156 = vadd.f32 %v5115, %v5155
    %v5157 = vpop.f32.mrf.mxu0
    %v5158 = vpop.f32.mrf.mxu0
    %5159 = vdwg.mxu0
    %v5160 = vmax.f32 %v5072, 0.0
    %v5161 = vmax.f32 %v5074, 0.0
    %v5162 = vmax.f32 %v5154, 0.0
    %v5163 = vmax.f32 %v5156, 0.0
    %v5164 = vld [vmem:[#allocation13 + $0x14] sm:$0xf]
    %v5166 = vlaneseq
    %v5167 = vshrl.u32 %v5166, 7
    %v5168 = vsub.s32 0, %v5167
    %v5169 = vrot.slane %v5164, %v5168
    %v5170 = vlaneseq
    %v5171 = vshrl.u32 %v5170, 7
    %v5172 = vsub.s32 1, %v5171
    %v5173 = vrot.slane %v5164, %v5172
    %v5174 = vlaneseq
    %v5175 = vshrl.u32 %v5174, 7
    %v5176 = vsub.s32 2, %v5175
    %v5177 = vrot.slane %v5164, %v5176
    %v5178 = vlaneseq
    %v5179 = vshrl.u32 %v5178, 7
    %v5180 = vsub.s32 3, %v5179
    %v5181 = vrot.slane %v5164, %v5180
    %v5186 = vmul.f32 %v5160, %v5169
    %v5187 = vmul.f32 %v5161, %v5173
    %v5188 = vmul.f32 %v5162, %v5177
    %v5189 = vmul.f32 %v5163, %v5181
    %v5190 = vadd.f32 %v5186, %v5187
    %v5191 = vadd.f32 %v5190, %v5188
    %v5192 = vadd.f32 %v5191, %v5189
    %5193 = vadd.xlane.f32.xlu0 %v5192
    %v5194 = vpop.xlane.xlu0 %5193
    %v5195 = vadd.f32 %v4397, %v5194
    %v5196 = vld [vmem:[#allocation2] sm:$0x1]
    %v5198 = vlaneseq
    %v5199 = vshrl.u32 %v5198, 7
    %v5200 = vsub.s32 0, %v5199
    %v5201 = vrot.slane %v5196, %v5200
    %v5203 = vadd.f32 %v5195, %v5201
    %vm5204 = vcmask 7168
    %5205 = vst.msk [vmem:[%s9] sm:$0xff] %vm5204, %v5203
    // Predicated region
    $region66: #{tpu_custom_call.1} parent=1 // pred_check
      _
    $region67: #{tpu_custom_call.1} parent=1 // pred_check_branch
      %5207 = sbr.rel (0) target = $region69
    $region68: #{tpu_custom_call.1} parent=1 // pred_region
      _
    $region69: #{tpu_custom_call.1} parent=1 // pred_fallthru
      _
    // Predicated region
    $region70: #{tpu_custom_call.1} parent=1 // pred_check
      _
    $region71: #{tpu_custom_call.1} parent=1 // pred_check_branch
      %5209 = sbr.rel (0) target = $region73
    $region72: #{tpu_custom_call.1} parent=1 // pred_region
      _
    $region73: #{tpu_custom_call.1} parent=1 // pred_fallthru
      _
    %5210 = vsyncpa [#allocation4], 1
    %5211 = vsyncpa [#allocation6], 1
    %5212 = vsyncpa [#allocation9], 1
    %5213 = vsyncpa [#allocation12], 1

</llo_original>
